<compile_context>
chip_gen: v7x
topology: tpu7x:2x2x1
jax: 0.10.0
libtpu: 0.0.40
codegen_flags: <defaults>
</compile_context>

<pallas_src>
import functools

import numpy as np

import jax
import jax.numpy as jnp
from jax.experimental import pallas as pl
from jax.experimental.pallas import tpu as pltpu


# ---------------------------------------------------------------------------
# Fused forward kernel (single pallas_call, no grid, everything VMEM-resident)
# ---------------------------------------------------------------------------
def _cnn_fused_kernel(x_ref, w1f_ref, bigw_ref, sm_ref, out_ref,
                      op_ref, h2a_ref, *, n_batch):
    f32 = jnp.float32
    # Hoist the tiny broadcast operands (one vreg each) out of the loops.
    b1t = sm_ref[0:1, :]          # (1,128) conv1 bias tiled over pw (pad cols 96:128 = 0)
    b2t = sm_ref[1:2, :]          # (1,128) conv2 bias tiled over ow2
    bf1 = sm_ref[2:3, :]          # (1,128) fc1 bias
    bf2 = sm_ref[3:4, :]          # (1,128) fc2 bias (padded)
    wf3 = sm_ref[4:5, :]          # (1,128) fc3 weight (padded)
    bf3 = sm_ref[5:6, 0:1]        # (1,1)   fc3 bias

    # ---- per-item convolution stage (static unroll, tiny batch) ------------
    for n in range(n_batch):
        base = n * 48

        # conv1 (4x4, 3->16) with the NCHW relayout folded into the weights:
        # 12 dots of (13,16)x(16,256).  RHS lanes 0:96 = even-ow outputs,
        # lanes 128:224 = odd-ow outputs (both zero-padded to a lane tile), so
        # the 2x2 pool over ow is a tile-aligned lane-half max (no rotates).
        h = None
        for i in range(4):            # kernel row tap
            for ci in range(3):       # input channel
                lhs = x_ref[base + ci * 16 + i: base + ci * 16 + i + 13, :]
                d = jnp.dot(lhs, w1f_ref[i * 3 + ci], preferred_element_type=f32)
                h = d if h is None else h + d
        op_ref[...] = jnp.maximum(h[:, 0:128], h[:, 128:256])   # pool over ow, (13,128)

        # Pool over oh with two sublane-strided reads, then bias + ReLU
        # (commutes with the max since the bias is a per-channel constant).
        pooled = jnp.maximum(
            jnp.maximum(op_ref[pl.ds(0, 6, stride=2), :],
                        op_ref[pl.ds(1, 6, stride=2), :]) + b1t, 0.0)      # (6,128)

        # conv2 (3x3, 16->32): 3 dots of (4,128)x(128,128); cols = ow2*32+co.
        h2 = jnp.dot(pooled[0:4, :], bigw_ref[0], preferred_element_type=f32)
        h2 = h2 + jnp.dot(pooled[1:5, :], bigw_ref[1], preferred_element_type=f32)
        h2 = h2 + jnp.dot(pooled[2:6, :], bigw_ref[2], preferred_element_type=f32)
        h2a_ref[4 * n:4 * n + 4, :] = jnp.maximum(h2 + b2t, 0.0)           # (4,128)

    # ---- batched fully-connected stage (one pass over the whole batch) -----
    # fc1 (512->128): NCHW .view(-1,512) permutation folded into the weights;
    # per tap oh2, gather all items' oh2-rows with a stride-4 sublane read.
    acc = jnp.dot(h2a_ref[pl.ds(0, n_batch, stride=4), :], bigw_ref[3],
                  preferred_element_type=f32)
    for oh2 in range(1, 4):
        acc = acc + jnp.dot(h2a_ref[pl.ds(oh2, n_batch, stride=4), :],
                            bigw_ref[3 + oh2], preferred_element_type=f32)
    z = jnp.maximum(acc + bf1, 0.0)                                        # (N,128)

    # fc2 (128->64, zero-padded to 128 output lanes: pads stay exactly 0)
    z = jnp.maximum(jnp.dot(z, bigw_ref[7], preferred_element_type=f32) + bf2, 0.0)

    # fc3 (64->1) as multiply + lane reduction; ONE output store.
    out_ref[...] = jnp.sum(z * wf3, axis=1, keepdims=True) + bf3           # (N,1)


# ---------------------------------------------------------------------------
# Host-side parameter preparation (one-time): block-Toeplitz conv weights with
# the NCHW relayout + even/odd-ow fusion folded in, fc1 rows pre-permuted for
# the torch flatten, everything packed into 3 arrays (fewer prologue DMAs).
# ---------------------------------------------------------------------------
def prepare_params(params):
    w1 = np.asarray(params["w_conv1"], np.float32)   # (16, 3, 4, 4)  (co,ci,i,j)
    b1 = np.asarray(params["b_conv1"], np.float32)   # (16,)
    w2 = np.asarray(params["w_conv2"], np.float32)   # (32, 16, 3, 3)
    b2 = np.asarray(params["b_conv2"], np.float32)   # (32,)
    wf1 = np.asarray(params["w_fc1"], np.float32)    # (128, 512) torch (out,in)
    bf1 = np.asarray(params["b_fc1"], np.float32)    # (128,)
    wf2 = np.asarray(params["w_fc2"], np.float32)    # (64, 128)
    bf2 = np.asarray(params["b_fc2"], np.float32)    # (64,)
    wf3 = np.asarray(params["w_fc3"], np.float32)    # (1, 64)
    bf3 = np.asarray(params["b_fc3"], np.float32)    # (1,)

    # conv1: per (tap i, channel ci), map input width w -> output lanes.
    # Even-ow (ow=2pw) outputs at lanes pw*16+co, odd-ow at 128+pw*16+co.
    w1f = np.zeros((4, 3, 16, 256), np.float32)
    for i in range(4):
        for ci in range(3):
            for pw in range(6):
                for j in range(4):
                    w1f[i, ci, 2 * pw + j, pw * 16:(pw + 1) * 16] = w1[:, ci, i, j]
                    w1f[i, ci, 2 * pw + 1 + j,
                        128 + pw * 16:128 + (pw + 1) * 16] = w1[:, ci, i, j]
    w1f = w1f.reshape(12, 16, 256)

    # conv2: per tap i, map pooled cols (pw*16+ci, zero-padded to 128 rows)
    # -> output lanes (ow2*32+co).
    w2p = np.zeros((3, 128, 128), np.float32)
    for i in range(3):
        for ow2 in range(4):
            for j in range(3):
                for ci in range(16):
                    w2p[i, (ow2 + j) * 16 + ci, ow2 * 32:(ow2 + 1) * 32] = w2[:, ci, i, j]

    # fc1: torch flat index = co*16 + oh2*4 + ow2 ; kernel layout = (oh2, ow2*32+co)
    wf1p = np.zeros((4, 128, 128), np.float32)
    for oh2 in range(4):
        for ow2 in range(4):
            for co in range(32):
                wf1p[oh2, ow2 * 32 + co, :] = wf1[:, co * 16 + oh2 * 4 + ow2]

    # fc2 as (in, out), zero-padded to 128 output lanes.
    wf2p = np.zeros((128, 128), np.float32)
    wf2p[:, :64] = wf2.T

    # Single stacked weight slab: [conv2 tap0-2, fc1 tap0-3, fc2] -> (8,128,128)
    bigw = np.concatenate([w2p, wf1p, wf2p[None]], axis=0)

    # All small per-channel operands packed into one (8,128) array.
    smalls = np.zeros((8, 128), np.float32)
    smalls[0, :96] = np.tile(b1, 6)    # conv1 bias tiled over pw
    smalls[1, :] = np.tile(b2, 4)      # conv2 bias tiled over ow2
    smalls[2, :] = bf1
    smalls[3, :64] = bf2
    smalls[4, :64] = wf3[0]
    smalls[5, 0] = bf3[0]

    return {"w1f": jnp.asarray(w1f),
            "bigw": jnp.asarray(bigw),
            "smalls": jnp.asarray(smalls)}


# ---------------------------------------------------------------------------
# Forward pass: one pallas_call, 4 input refs, everything VMEM-resident.
# ---------------------------------------------------------------------------
@jax.jit
def cnn_forward(prepped, x_nchw):
    n = x_nchw.shape[0]
    assert x_nchw.shape[1:] == (3, 16, 16), x_nchw.shape
    # Free bitcast-reshape of the contiguous NCHW input: rows = (n, ci, h),
    # cols = w.  No separate XLA transpose/copy launch before the kernel.
    x_r = x_nchw.reshape(n * 48, 16)

    kern = functools.partial(_cnn_fused_kernel, n_batch=n)
    out = pl.pallas_call(
        kern,
        out_shape=jax.ShapeDtypeStruct((n, 1), jnp.float32),
        in_specs=[pl.BlockSpec(memory_space=pltpu.MemorySpace.VMEM)] * 4,
        out_specs=pl.BlockSpec(memory_space=pltpu.MemorySpace.VMEM),
        scratch_shapes=[
            pltpu.VMEM((13, 128), jnp.float32),      # conv1 output, ow-pooled
            pltpu.VMEM((n * 4, 128), jnp.float32),   # conv2 output, all items
        ],
    )(x_r, prepped["w1f"], prepped["bigw"], prepped["smalls"])

    # torch .squeeze(0): only drops dim 0 if it has size 1
    if out.shape[0] == 1:
        out = jnp.squeeze(out, axis=0)
    return out


# ---------------------------------------------------------------------------
# Parameters (torch layouts) + pure-JAX reference for the correctness check
# ---------------------------------------------------------------------------
def init_params(key):
    ks = jax.random.split(key, 10)
    s = 0.05
    return {
        "w_conv1": s * jax.random.normal(ks[0], (16, 3, 4, 4), jnp.float32),
        "b_conv1": s * jax.random.normal(ks[1], (16,), jnp.float32),
        "w_conv2": s * jax.random.normal(ks[2], (32, 16, 3, 3), jnp.float32),
        "b_conv2": s * jax.random.normal(ks[3], (32,), jnp.float32),
        "w_fc1": s * jax.random.normal(ks[4], (128, 512), jnp.float32),
        "b_fc1": s * jax.random.normal(ks[5], (128,), jnp.float32),
        "w_fc2": s * jax.random.normal(ks[6], (64, 128), jnp.float32),
        "b_fc2": s * jax.random.normal(ks[7], (64,), jnp.float32),
        "w_fc3": s * jax.random.normal(ks[8], (1, 64), jnp.float32),
        "b_fc3": s * jax.random.normal(ks[9], (1,), jnp.float32),
    }


def cnn_forward_ref(params, x):
    hi = jax.lax.Precision.HIGHEST
    y = jax.lax.conv_general_dilated(
        x, params["w_conv1"], (1, 1), "VALID",
        dimension_numbers=("NCHW", "OIHW", "NCHW"), precision=hi)
    y = jnp.maximum(y + params["b_conv1"][None, :, None, None], 0.0)
    _, _, h, w = y.shape
    y = y[:, :, :(h // 2) * 2, :(w // 2) * 2]
    y = jnp.maximum(jnp.maximum(y[:, :, 0::2, 0::2], y[:, :, 0::2, 1::2]),
                    jnp.maximum(y[:, :, 1::2, 0::2], y[:, :, 1::2, 1::2]))
    y = jax.lax.conv_general_dilated(
        y, params["w_conv2"], (1, 1), "VALID",
        dimension_numbers=("NCHW", "OIHW", "NCHW"), precision=hi)
    y = jnp.maximum(y + params["b_conv2"][None, :, None, None], 0.0)
    y = y.reshape(-1, 512)
    y = jnp.maximum(jnp.dot(y, params["w_fc1"].T, precision=hi) + params["b_fc1"], 0.0)
    y = jnp.maximum(jnp.dot(y, params["w_fc2"].T, precision=hi) + params["b_fc2"], 0.0)
    y = jnp.dot(y, params["w_fc3"].T, precision=hi) + params["b_fc3"]
    if y.shape[0] == 1:
        y = jnp.squeeze(y, axis=0)
    return y


if __name__ == "__main__":
    key = jax.random.PRNGKey(0)
    pkey, xkey = jax.random.split(key)
    params = init_params(pkey)
    prepped = prepare_params(params)

    # Input: (batch=2, channels=3, 16, 16) -- the only spatial size consistent
    # with the module's .view(-1, 512) flatten.
    x = jax.random.normal(xkey, (2, 3, 16, 16), jnp.float32)

    out = jax.block_until_ready(cnn_forward(prepped, x))
    ref = jax.block_until_ready(cnn_forward_ref(params, x))

    assert out.shape == (2, 1), out.shape
    assert jnp.allclose(out, ref, atol=1e-4, rtol=1e-4), (out, ref)

    print("KERNEL_OK")
</pallas_src>

<mosaic_0001>
module attributes {stable_mosaic.version = 11 : i64} {
  func.func @_cnn_fused_kernel(%arg0: memref<96x16xf32, #tpu.memory_space<vmem>>, %arg1: memref<12x16x256xf32, #tpu.memory_space<vmem>>, %arg2: memref<8x128x128xf32, #tpu.memory_space<vmem>>, %arg3: memref<8x128xf32, #tpu.memory_space<vmem>>, %arg4: memref<2x1xf32, #tpu.memory_space<vmem>>, %arg5: memref<13x128xf32, #tpu.memory_space<vmem>>, %arg6: memref<8x128xf32, #tpu.memory_space<vmem>>) attributes {dimension_semantics = [], scalar_prefetch = 0 : i64, scratch_operands = 2 : i64, tpu.core_type = #tpu.core_type<tc>} {
    %c0 = arith.constant 0 : index
    %c0_0 = arith.constant 0 : index
    %0 = vector.load %arg3[%c0, %c0_0] : memref<8x128xf32, #tpu.memory_space<vmem>>, vector<1x128xf32>
    %c1 = arith.constant 1 : index
    %c0_1 = arith.constant 0 : index
    %1 = vector.load %arg3[%c1, %c0_1] : memref<8x128xf32, #tpu.memory_space<vmem>>, vector<1x128xf32>
    %c2 = arith.constant 2 : index
    %c0_2 = arith.constant 0 : index
    %2 = vector.load %arg3[%c2, %c0_2] : memref<8x128xf32, #tpu.memory_space<vmem>>, vector<1x128xf32>
    %c3 = arith.constant 3 : index
    %c0_3 = arith.constant 0 : index
    %3 = vector.load %arg3[%c3, %c0_3] : memref<8x128xf32, #tpu.memory_space<vmem>>, vector<1x128xf32>
    %c4 = arith.constant 4 : index
    %c0_4 = arith.constant 0 : index
    %4 = vector.load %arg3[%c4, %c0_4] : memref<8x128xf32, #tpu.memory_space<vmem>>, vector<1x128xf32>
    %c5 = arith.constant 5 : index
    %c0_5 = arith.constant 0 : index
    %5 = vector.load %arg3[%c5, %c0_5] : memref<8x128xf32, #tpu.memory_space<vmem>>, vector<1x1xf32>
    %c0_6 = arith.constant 0 : index
    %c0_7 = arith.constant 0 : index
    %6 = vector.load %arg0[%c0_6, %c0_7] : memref<96x16xf32, #tpu.memory_space<vmem>>, vector<13x16xf32>
    %c0_8 = arith.constant 0 : index
    %c0_9 = arith.constant 0 : index
    %c0_10 = arith.constant 0 : index
    %7 = vector.load %arg1[%c0_8, %c0_9, %c0_10] : memref<12x16x256xf32, #tpu.memory_space<vmem>>, vector<1x16x256xf32>
    %8 = vector.shape_cast %7 : vector<1x16x256xf32> to vector<16x256xf32>
    %cst = arith.constant dense<0.000000e+00> : vector<13x256xf32>
    %9 = tpu.matmul %6, %8, %cst {dimension_numbers = #tpu.dot_dimension_numbers<[1], [0], [0], [1], [0, 0, 1, 1], [], []>} : vector<13x16xf32>, vector<16x256xf32>, vector<13x256xf32> -> vector<13x256xf32>
    %c16 = arith.constant 16 : index
    %c0_11 = arith.constant 0 : index
    %10 = vector.load %arg0[%c16, %c0_11] : memref<96x16xf32, #tpu.memory_space<vmem>>, vector<13x16xf32>
    %c1_12 = arith.constant 1 : index
    %c0_13 = arith.constant 0 : index
    %c0_14 = arith.constant 0 : index
    %11 = vector.load %arg1[%c1_12, %c0_13, %c0_14] : memref<12x16x256xf32, #tpu.memory_space<vmem>>, vector<1x16x256xf32>
    %12 = vector.shape_cast %11 : vector<1x16x256xf32> to vector<16x256xf32>
    %cst_15 = arith.constant dense<0.000000e+00> : vector<13x256xf32>
    %13 = tpu.matmul %10, %12, %cst_15 {dimension_numbers = #tpu.dot_dimension_numbers<[1], [0], [0], [1], [0, 0, 1, 1], [], []>} : vector<13x16xf32>, vector<16x256xf32>, vector<13x256xf32> -> vector<13x256xf32>
    %14 = arith.addf %9, %13 : vector<13x256xf32>
    %c32 = arith.constant 32 : index
    %c0_16 = arith.constant 0 : index
    %15 = vector.load %arg0[%c32, %c0_16] : memref<96x16xf32, #tpu.memory_space<vmem>>, vector<13x16xf32>
    %c2_17 = arith.constant 2 : index
    %c0_18 = arith.constant 0 : index
    %c0_19 = arith.constant 0 : index
    %16 = vector.load %arg1[%c2_17, %c0_18, %c0_19] : memref<12x16x256xf32, #tpu.memory_space<vmem>>, vector<1x16x256xf32>
    %17 = vector.shape_cast %16 : vector<1x16x256xf32> to vector<16x256xf32>
    %cst_20 = arith.constant dense<0.000000e+00> : vector<13x256xf32>
    %18 = tpu.matmul %15, %17, %cst_20 {dimension_numbers = #tpu.dot_dimension_numbers<[1], [0], [0], [1], [0, 0, 1, 1], [], []>} : vector<13x16xf32>, vector<16x256xf32>, vector<13x256xf32> -> vector<13x256xf32>
    %19 = arith.addf %14, %18 : vector<13x256xf32>
    %c1_21 = arith.constant 1 : index
    %c0_22 = arith.constant 0 : index
    %20 = vector.load %arg0[%c1_21, %c0_22] : memref<96x16xf32, #tpu.memory_space<vmem>>, vector<13x16xf32>
    %c3_23 = arith.constant 3 : index
    %c0_24 = arith.constant 0 : index
    %c0_25 = arith.constant 0 : index
    %21 = vector.load %arg1[%c3_23, %c0_24, %c0_25] : memref<12x16x256xf32, #tpu.memory_space<vmem>>, vector<1x16x256xf32>
    %22 = vector.shape_cast %21 : vector<1x16x256xf32> to vector<16x256xf32>
    %cst_26 = arith.constant dense<0.000000e+00> : vector<13x256xf32>
    %23 = tpu.matmul %20, %22, %cst_26 {dimension_numbers = #tpu.dot_dimension_numbers<[1], [0], [0], [1], [0, 0, 1, 1], [], []>} : vector<13x16xf32>, vector<16x256xf32>, vector<13x256xf32> -> vector<13x256xf32>
    %24 = arith.addf %19, %23 : vector<13x256xf32>
    %c17 = arith.constant 17 : index
    %c0_27 = arith.constant 0 : index
    %25 = vector.load %arg0[%c17, %c0_27] : memref<96x16xf32, #tpu.memory_space<vmem>>, vector<13x16xf32>
    %c4_28 = arith.constant 4 : index
    %c0_29 = arith.constant 0 : index
    %c0_30 = arith.constant 0 : index
    %26 = vector.load %arg1[%c4_28, %c0_29, %c0_30] : memref<12x16x256xf32, #tpu.memory_space<vmem>>, vector<1x16x256xf32>
    %27 = vector.shape_cast %26 : vector<1x16x256xf32> to vector<16x256xf32>
    %cst_31 = arith.constant dense<0.000000e+00> : vector<13x256xf32>
    %28 = tpu.matmul %25, %27, %cst_31 {dimension_numbers = #tpu.dot_dimension_numbers<[1], [0], [0], [1], [0, 0, 1, 1], [], []>} : vector<13x16xf32>, vector<16x256xf32>, vector<13x256xf32> -> vector<13x256xf32>
    %29 = arith.addf %24, %28 : vector<13x256xf32>
    %c33 = arith.constant 33 : index
    %c0_32 = arith.constant 0 : index
    %30 = vector.load %arg0[%c33, %c0_32] : memref<96x16xf32, #tpu.memory_space<vmem>>, vector<13x16xf32>
    %c5_33 = arith.constant 5 : index
    %c0_34 = arith.constant 0 : index
    %c0_35 = arith.constant 0 : index
    %31 = vector.load %arg1[%c5_33, %c0_34, %c0_35] : memref<12x16x256xf32, #tpu.memory_space<vmem>>, vector<1x16x256xf32>
    %32 = vector.shape_cast %31 : vector<1x16x256xf32> to vector<16x256xf32>
    %cst_36 = arith.constant dense<0.000000e+00> : vector<13x256xf32>
    %33 = tpu.matmul %30, %32, %cst_36 {dimension_numbers = #tpu.dot_dimension_numbers<[1], [0], [0], [1], [0, 0, 1, 1], [], []>} : vector<13x16xf32>, vector<16x256xf32>, vector<13x256xf32> -> vector<13x256xf32>
    %34 = arith.addf %29, %33 : vector<13x256xf32>
    %c2_37 = arith.constant 2 : index
    %c0_38 = arith.constant 0 : index
    %35 = vector.load %arg0[%c2_37, %c0_38] : memref<96x16xf32, #tpu.memory_space<vmem>>, vector<13x16xf32>
    %c6 = arith.constant 6 : index
    %c0_39 = arith.constant 0 : index
    %c0_40 = arith.constant 0 : index
    %36 = vector.load %arg1[%c6, %c0_39, %c0_40] : memref<12x16x256xf32, #tpu.memory_space<vmem>>, vector<1x16x256xf32>
    %37 = vector.shape_cast %36 : vector<1x16x256xf32> to vector<16x256xf32>
    %cst_41 = arith.constant dense<0.000000e+00> : vector<13x256xf32>
    %38 = tpu.matmul %35, %37, %cst_41 {dimension_numbers = #tpu.dot_dimension_numbers<[1], [0], [0], [1], [0, 0, 1, 1], [], []>} : vector<13x16xf32>, vector<16x256xf32>, vector<13x256xf32> -> vector<13x256xf32>
    %39 = arith.addf %34, %38 : vector<13x256xf32>
    %c18 = arith.constant 18 : index
    %c0_42 = arith.constant 0 : index
    %40 = vector.load %arg0[%c18, %c0_42] : memref<96x16xf32, #tpu.memory_space<vmem>>, vector<13x16xf32>
    %c7 = arith.constant 7 : index
    %c0_43 = arith.constant 0 : index
    %c0_44 = arith.constant 0 : index
    %41 = vector.load %arg1[%c7, %c0_43, %c0_44] : memref<12x16x256xf32, #tpu.memory_space<vmem>>, vector<1x16x256xf32>
    %42 = vector.shape_cast %41 : vector<1x16x256xf32> to vector<16x256xf32>
    %cst_45 = arith.constant dense<0.000000e+00> : vector<13x256xf32>
    %43 = tpu.matmul %40, %42, %cst_45 {dimension_numbers = #tpu.dot_dimension_numbers<[1], [0], [0], [1], [0, 0, 1, 1], [], []>} : vector<13x16xf32>, vector<16x256xf32>, vector<13x256xf32> -> vector<13x256xf32>
    %44 = arith.addf %39, %43 : vector<13x256xf32>
    %c34 = arith.constant 34 : index
    %c0_46 = arith.constant 0 : index
    %45 = vector.load %arg0[%c34, %c0_46] : memref<96x16xf32, #tpu.memory_space<vmem>>, vector<13x16xf32>
    %c8 = arith.constant 8 : index
    %c0_47 = arith.constant 0 : index
    %c0_48 = arith.constant 0 : index
    %46 = vector.load %arg1[%c8, %c0_47, %c0_48] : memref<12x16x256xf32, #tpu.memory_space<vmem>>, vector<1x16x256xf32>
    %47 = vector.shape_cast %46 : vector<1x16x256xf32> to vector<16x256xf32>
    %cst_49 = arith.constant dense<0.000000e+00> : vector<13x256xf32>
    %48 = tpu.matmul %45, %47, %cst_49 {dimension_numbers = #tpu.dot_dimension_numbers<[1], [0], [0], [1], [0, 0, 1, 1], [], []>} : vector<13x16xf32>, vector<16x256xf32>, vector<13x256xf32> -> vector<13x256xf32>
    %49 = arith.addf %44, %48 : vector<13x256xf32>
    %c3_50 = arith.constant 3 : index
    %c0_51 = arith.constant 0 : index
    %50 = vector.load %arg0[%c3_50, %c0_51] : memref<96x16xf32, #tpu.memory_space<vmem>>, vector<13x16xf32>
    %c9 = arith.constant 9 : index
    %c0_52 = arith.constant 0 : index
    %c0_53 = arith.constant 0 : index
    %51 = vector.load %arg1[%c9, %c0_52, %c0_53] : memref<12x16x256xf32, #tpu.memory_space<vmem>>, vector<1x16x256xf32>
    %52 = vector.shape_cast %51 : vector<1x16x256xf32> to vector<16x256xf32>
    %cst_54 = arith.constant dense<0.000000e+00> : vector<13x256xf32>
    %53 = tpu.matmul %50, %52, %cst_54 {dimension_numbers = #tpu.dot_dimension_numbers<[1], [0], [0], [1], [0, 0, 1, 1], [], []>} : vector<13x16xf32>, vector<16x256xf32>, vector<13x256xf32> -> vector<13x256xf32>
    %54 = arith.addf %49, %53 : vector<13x256xf32>
    %c19 = arith.constant 19 : index
    %c0_55 = arith.constant 0 : index
    %55 = vector.load %arg0[%c19, %c0_55] : memref<96x16xf32, #tpu.memory_space<vmem>>, vector<13x16xf32>
    %c10 = arith.constant 10 : index
    %c0_56 = arith.constant 0 : index
    %c0_57 = arith.constant 0 : index
    %56 = vector.load %arg1[%c10, %c0_56, %c0_57] : memref<12x16x256xf32, #tpu.memory_space<vmem>>, vector<1x16x256xf32>
    %57 = vector.shape_cast %56 : vector<1x16x256xf32> to vector<16x256xf32>
    %cst_58 = arith.constant dense<0.000000e+00> : vector<13x256xf32>
    %58 = tpu.matmul %55, %57, %cst_58 {dimension_numbers = #tpu.dot_dimension_numbers<[1], [0], [0], [1], [0, 0, 1, 1], [], []>} : vector<13x16xf32>, vector<16x256xf32>, vector<13x256xf32> -> vector<13x256xf32>
    %59 = arith.addf %54, %58 : vector<13x256xf32>
    %c35 = arith.constant 35 : index
    %c0_59 = arith.constant 0 : index
    %60 = vector.load %arg0[%c35, %c0_59] : memref<96x16xf32, #tpu.memory_space<vmem>>, vector<13x16xf32>
    %c11 = arith.constant 11 : index
    %c0_60 = arith.constant 0 : index
    %c0_61 = arith.constant 0 : index
    %61 = vector.load %arg1[%c11, %c0_60, %c0_61] : memref<12x16x256xf32, #tpu.memory_space<vmem>>, vector<1x16x256xf32>
    %62 = vector.shape_cast %61 : vector<1x16x256xf32> to vector<16x256xf32>
    %cst_62 = arith.constant dense<0.000000e+00> : vector<13x256xf32>
    %63 = tpu.matmul %60, %62, %cst_62 {dimension_numbers = #tpu.dot_dimension_numbers<[1], [0], [0], [1], [0, 0, 1, 1], [], []>} : vector<13x16xf32>, vector<16x256xf32>, vector<13x256xf32> -> vector<13x256xf32>
    %64 = arith.addf %59, %63 : vector<13x256xf32>
    %65 = vector.extract_strided_slice %64 {offsets = [0, 0], sizes = [13, 128], strides = [1, 1]} : vector<13x256xf32> to vector<13x128xf32>
    %66 = vector.extract_strided_slice %64 {offsets = [0, 128], sizes = [13, 128], strides = [1, 1]} : vector<13x256xf32> to vector<13x128xf32>
    %67 = arith.maximumf %65, %66 : vector<13x128xf32>
    %c0_63 = arith.constant 0 : index
    %c0_64 = arith.constant 0 : index
    %68 = vector.load %arg5[%c0_63, %c0_64] : memref<13x128xf32, #tpu.memory_space<vmem>>, vector<13x128xf32>
    tpu.vector_store %arg5[%c0_63, %c0_64], %67 {strides = array<i32>} : memref<13x128xf32, #tpu.memory_space<vmem>>, vector<13x128xf32>,
    %c0_65 = arith.constant 0 : index
    %c0_66 = arith.constant 0 : index
    %69 = tpu.strided_load %arg5[%c0_65, %c0_66] {strides = array<i32: 2, 1>} : memref<13x128xf32, #tpu.memory_space<vmem>>, vector<6x128xf32>
    %c1_67 = arith.constant 1 : index
    %c0_68 = arith.constant 0 : index
    %70 = tpu.strided_load %arg5[%c1_67, %c0_68] {strides = array<i32: 2, 1>} : memref<13x128xf32, #tpu.memory_space<vmem>>, vector<6x128xf32>
    %71 = arith.maximumf %69, %70 : vector<6x128xf32>
    %72 = vector.broadcast %0 : vector<1x128xf32> to vector<6x128xf32>
    %73 = arith.addf %71, %72 : vector<6x128xf32>
    %cst_69 = arith.constant 0.000000e+00 : f32
    %74 = vector.broadcast %cst_69 : f32 to vector<6x128xf32>
    %75 = arith.maximumf %73, %74 : vector<6x128xf32>
    %76 = vector.extract_strided_slice %75 {offsets = [0, 0], sizes = [4, 128], strides = [1, 1]} : vector<6x128xf32> to vector<4x128xf32>
    %c0_70 = arith.constant 0 : index
    %c0_71 = arith.constant 0 : index
    %c0_72 = arith.constant 0 : index
    %77 = vector.load %arg2[%c0_70, %c0_71, %c0_72] : memref<8x128x128xf32, #tpu.memory_space<vmem>>, vector<1x128x128xf32>
    %78 = vector.shape_cast %77 : vector<1x128x128xf32> to vector<128x128xf32>
    %cst_73 = arith.constant dense<0.000000e+00> : vector<4x128xf32>
    %79 = tpu.matmul %76, %78, %cst_73 {dimension_numbers = #tpu.dot_dimension_numbers<[1], [0], [0], [1], [0, 0, 1, 1], [], []>} : vector<4x128xf32>, vector<128x128xf32>, vector<4x128xf32> -> vector<4x128xf32>
    %80 = vector.extract_strided_slice %75 {offsets = [1, 0], sizes = [4, 128], strides = [1, 1]} : vector<6x128xf32> to vector<4x128xf32>
    %c1_74 = arith.constant 1 : index
    %c0_75 = arith.constant 0 : index
    %c0_76 = arith.constant 0 : index
    %81 = vector.load %arg2[%c1_74, %c0_75, %c0_76] : memref<8x128x128xf32, #tpu.memory_space<vmem>>, vector<1x128x128xf32>
    %82 = vector.shape_cast %81 : vector<1x128x128xf32> to vector<128x128xf32>
    %cst_77 = arith.constant dense<0.000000e+00> : vector<4x128xf32>
    %83 = tpu.matmul %80, %82, %cst_77 {dimension_numbers = #tpu.dot_dimension_numbers<[1], [0], [0], [1], [0, 0, 1, 1], [], []>} : vector<4x128xf32>, vector<128x128xf32>, vector<4x128xf32> -> vector<4x128xf32>
    %84 = arith.addf %79, %83 : vector<4x128xf32>
    %85 = vector.extract_strided_slice %75 {offsets = [2, 0], sizes = [4, 128], strides = [1, 1]} : vector<6x128xf32> to vector<4x128xf32>
    %c2_78 = arith.constant 2 : index
    %c0_79 = arith.constant 0 : index
    %c0_80 = arith.constant 0 : index
    %86 = vector.load %arg2[%c2_78, %c0_79, %c0_80] : memref<8x128x128xf32, #tpu.memory_space<vmem>>, vector<1x128x128xf32>
    %87 = vector.shape_cast %86 : vector<1x128x128xf32> to vector<128x128xf32>
    %cst_81 = arith.constant dense<0.000000e+00> : vector<4x128xf32>
    %88 = tpu.matmul %85, %87, %cst_81 {dimension_numbers = #tpu.dot_dimension_numbers<[1], [0], [0], [1], [0, 0, 1, 1], [], []>} : vector<4x128xf32>, vector<128x128xf32>, vector<4x128xf32> -> vector<4x128xf32>
    %89 = arith.addf %84, %88 : vector<4x128xf32>
    %90 = vector.broadcast %1 : vector<1x128xf32> to vector<4x128xf32>
    %91 = arith.addf %89, %90 : vector<4x128xf32>
    %cst_82 = arith.constant 0.000000e+00 : f32
    %92 = vector.broadcast %cst_82 : f32 to vector<4x128xf32>
    %93 = arith.maximumf %91, %92 : vector<4x128xf32>
    %c0_83 = arith.constant 0 : index
    %c0_84 = arith.constant 0 : index
    %94 = vector.load %arg6[%c0_83, %c0_84] : memref<8x128xf32, #tpu.memory_space<vmem>>, vector<4x128xf32>
    tpu.vector_store %arg6[%c0_83, %c0_84], %93 {strides = array<i32>} : memref<8x128xf32, #tpu.memory_space<vmem>>, vector<4x128xf32>,
    %c48 = arith.constant 48 : index
    %c0_85 = arith.constant 0 : index
    %95 = vector.load %arg0[%c48, %c0_85] : memref<96x16xf32, #tpu.memory_space<vmem>>, vector<13x16xf32>
    %c0_86 = arith.constant 0 : index
    %c0_87 = arith.constant 0 : index
    %c0_88 = arith.constant 0 : index
    %96 = vector.load %arg1[%c0_86, %c0_87, %c0_88] : memref<12x16x256xf32, #tpu.memory_space<vmem>>, vector<1x16x256xf32>
    %97 = vector.shape_cast %96 : vector<1x16x256xf32> to vector<16x256xf32>
    %cst_89 = arith.constant dense<0.000000e+00> : vector<13x256xf32>
    %98 = tpu.matmul %95, %97, %cst_89 {dimension_numbers = #tpu.dot_dimension_numbers<[1], [0], [0], [1], [0, 0, 1, 1], [], []>} : vector<13x16xf32>, vector<16x256xf32>, vector<13x256xf32> -> vector<13x256xf32>
    %c64 = arith.constant 64 : index
    %c0_90 = arith.constant 0 : index
    %99 = vector.load %arg0[%c64, %c0_90] : memref<96x16xf32, #tpu.memory_space<vmem>>, vector<13x16xf32>
    %c1_91 = arith.constant 1 : index
    %c0_92 = arith.constant 0 : index
    %c0_93 = arith.constant 0 : index
    %100 = vector.load %arg1[%c1_91, %c0_92, %c0_93] : memref<12x16x256xf32, #tpu.memory_space<vmem>>, vector<1x16x256xf32>
    %101 = vector.shape_cast %100 : vector<1x16x256xf32> to vector<16x256xf32>
    %cst_94 = arith.constant dense<0.000000e+00> : vector<13x256xf32>
    %102 = tpu.matmul %99, %101, %cst_94 {dimension_numbers = #tpu.dot_dimension_numbers<[1], [0], [0], [1], [0, 0, 1, 1], [], []>} : vector<13x16xf32>, vector<16x256xf32>, vector<13x256xf32> -> vector<13x256xf32>
    %103 = arith.addf %98, %102 : vector<13x256xf32>
    %c80 = arith.constant 80 : index
    %c0_95 = arith.constant 0 : index
    %104 = vector.load %arg0[%c80, %c0_95] : memref<96x16xf32, #tpu.memory_space<vmem>>, vector<13x16xf32>
    %c2_96 = arith.constant 2 : index
    %c0_97 = arith.constant 0 : index
    %c0_98 = arith.constant 0 : index
    %105 = vector.load %arg1[%c2_96, %c0_97, %c0_98] : memref<12x16x256xf32, #tpu.memory_space<vmem>>, vector<1x16x256xf32>
    %106 = vector.shape_cast %105 : vector<1x16x256xf32> to vector<16x256xf32>
    %cst_99 = arith.constant dense<0.000000e+00> : vector<13x256xf32>
    %107 = tpu.matmul %104, %106, %cst_99 {dimension_numbers = #tpu.dot_dimension_numbers<[1], [0], [0], [1], [0, 0, 1, 1], [], []>} : vector<13x16xf32>, vector<16x256xf32>, vector<13x256xf32> -> vector<13x256xf32>
    %108 = arith.addf %103, %107 : vector<13x256xf32>
    %c49 = arith.constant 49 : index
    %c0_100 = arith.constant 0 : index
    %109 = vector.load %arg0[%c49, %c0_100] : memref<96x16xf32, #tpu.memory_space<vmem>>, vector<13x16xf32>
    %c3_101 = arith.constant 3 : index
    %c0_102 = arith.constant 0 : index
    %c0_103 = arith.constant 0 : index
    %110 = vector.load %arg1[%c3_101, %c0_102, %c0_103] : memref<12x16x256xf32, #tpu.memory_space<vmem>>, vector<1x16x256xf32>
    %111 = vector.shape_cast %110 : vector<1x16x256xf32> to vector<16x256xf32>
    %cst_104 = arith.constant dense<0.000000e+00> : vector<13x256xf32>
    %112 = tpu.matmul %109, %111, %cst_104 {dimension_numbers = #tpu.dot_dimension_numbers<[1], [0], [0], [1], [0, 0, 1, 1], [], []>} : vector<13x16xf32>, vector<16x256xf32>, vector<13x256xf32> -> vector<13x256xf32>
    %113 = arith.addf %108, %112 : vector<13x256xf32>
    %c65 = arith.constant 65 : index
    %c0_105 = arith.constant 0 : index
    %114 = vector.load %arg0[%c65, %c0_105] : memref<96x16xf32, #tpu.memory_space<vmem>>, vector<13x16xf32>
    %c4_106 = arith.constant 4 : index
    %c0_107 = arith.constant 0 : index
    %c0_108 = arith.constant 0 : index
    %115 = vector.load %arg1[%c4_106, %c0_107, %c0_108] : memref<12x16x256xf32, #tpu.memory_space<vmem>>, vector<1x16x256xf32>
    %116 = vector.shape_cast %115 : vector<1x16x256xf32> to vector<16x256xf32>
    %cst_109 = arith.constant dense<0.000000e+00> : vector<13x256xf32>
    %117 = tpu.matmul %114, %116, %cst_109 {dimension_numbers = #tpu.dot_dimension_numbers<[1], [0], [0], [1], [0, 0, 1, 1], [], []>} : vector<13x16xf32>, vector<16x256xf32>, vector<13x256xf32> -> vector<13x256xf32>
    %118 = arith.addf %113, %117 : vector<13x256xf32>
    %c81 = arith.constant 81 : index
    %c0_110 = arith.constant 0 : index
    %119 = vector.load %arg0[%c81, %c0_110] : memref<96x16xf32, #tpu.memory_space<vmem>>, vector<13x16xf32>
    %c5_111 = arith.constant 5 : index
    %c0_112 = arith.constant 0 : index
    %c0_113 = arith.constant 0 : index
    %120 = vector.load %arg1[%c5_111, %c0_112, %c0_113] : memref<12x16x256xf32, #tpu.memory_space<vmem>>, vector<1x16x256xf32>
    %121 = vector.shape_cast %120 : vector<1x16x256xf32> to vector<16x256xf32>
    %cst_114 = arith.constant dense<0.000000e+00> : vector<13x256xf32>
    %122 = tpu.matmul %119, %121, %cst_114 {dimension_numbers = #tpu.dot_dimension_numbers<[1], [0], [0], [1], [0, 0, 1, 1], [], []>} : vector<13x16xf32>, vector<16x256xf32>, vector<13x256xf32> -> vector<13x256xf32>
    %123 = arith.addf %118, %122 : vector<13x256xf32>
    %c50 = arith.constant 50 : index
    %c0_115 = arith.constant 0 : index
    %124 = vector.load %arg0[%c50, %c0_115] : memref<96x16xf32, #tpu.memory_space<vmem>>, vector<13x16xf32>
    %c6_116 = arith.constant 6 : index
    %c0_117 = arith.constant 0 : index
    %c0_118 = arith.constant 0 : index
    %125 = vector.load %arg1[%c6_116, %c0_117, %c0_118] : memref<12x16x256xf32, #tpu.memory_space<vmem>>, vector<1x16x256xf32>
    %126 = vector.shape_cast %125 : vector<1x16x256xf32> to vector<16x256xf32>
    %cst_119 = arith.constant dense<0.000000e+00> : vector<13x256xf32>
    %127 = tpu.matmul %124, %126, %cst_119 {dimension_numbers = #tpu.dot_dimension_numbers<[1], [0], [0], [1], [0, 0, 1, 1], [], []>} : vector<13x16xf32>, vector<16x256xf32>, vector<13x256xf32> -> vector<13x256xf32>
    %128 = arith.addf %123, %127 : vector<13x256xf32>
    %c66 = arith.constant 66 : index
    %c0_120 = arith.constant 0 : index
    %129 = vector.load %arg0[%c66, %c0_120] : memref<96x16xf32, #tpu.memory_space<vmem>>, vector<13x16xf32>
    %c7_121 = arith.constant 7 : index
    %c0_122 = arith.constant 0 : index
    %c0_123 = arith.constant 0 : index
    %130 = vector.load %arg1[%c7_121, %c0_122, %c0_123] : memref<12x16x256xf32, #tpu.memory_space<vmem>>, vector<1x16x256xf32>
    %131 = vector.shape_cast %130 : vector<1x16x256xf32> to vector<16x256xf32>
    %cst_124 = arith.constant dense<0.000000e+00> : vector<13x256xf32>
    %132 = tpu.matmul %129, %131, %cst_124 {dimension_numbers = #tpu.dot_dimension_numbers<[1], [0], [0], [1], [0, 0, 1, 1], [], []>} : vector<13x16xf32>, vector<16x256xf32>, vector<13x256xf32> -> vector<13x256xf32>
    %133 = arith.addf %128, %132 : vector<13x256xf32>
    %c82 = arith.constant 82 : index
    %c0_125 = arith.constant 0 : index
    %134 = vector.load %arg0[%c82, %c0_125] : memref<96x16xf32, #tpu.memory_space<vmem>>, vector<13x16xf32>
    %c8_126 = arith.constant 8 : index
    %c0_127 = arith.constant 0 : index
    %c0_128 = arith.constant 0 : index
    %135 = vector.load %arg1[%c8_126, %c0_127, %c0_128] : memref<12x16x256xf32, #tpu.memory_space<vmem>>, vector<1x16x256xf32>
    %136 = vector.shape_cast %135 : vector<1x16x256xf32> to vector<16x256xf32>
    %cst_129 = arith.constant dense<0.000000e+00> : vector<13x256xf32>
    %137 = tpu.matmul %134, %136, %cst_129 {dimension_numbers = #tpu.dot_dimension_numbers<[1], [0], [0], [1], [0, 0, 1, 1], [], []>} : vector<13x16xf32>, vector<16x256xf32>, vector<13x256xf32> -> vector<13x256xf32>
    %138 = arith.addf %133, %137 : vector<13x256xf32>
    %c51 = arith.constant 51 : index
    %c0_130 = arith.constant 0 : index
    %139 = vector.load %arg0[%c51, %c0_130] : memref<96x16xf32, #tpu.memory_space<vmem>>, vector<13x16xf32>
    %c9_131 = arith.constant 9 : index
    %c0_132 = arith.constant 0 : index
    %c0_133 = arith.constant 0 : index
    %140 = vector.load %arg1[%c9_131, %c0_132, %c0_133] : memref<12x16x256xf32, #tpu.memory_space<vmem>>, vector<1x16x256xf32>
    %141 = vector.shape_cast %140 : vector<1x16x256xf32> to vector<16x256xf32>
    %cst_134 = arith.constant dense<0.000000e+00> : vector<13x256xf32>
    %142 = tpu.matmul %139, %141, %cst_134 {dimension_numbers = #tpu.dot_dimension_numbers<[1], [0], [0], [1], [0, 0, 1, 1], [], []>} : vector<13x16xf32>, vector<16x256xf32>, vector<13x256xf32> -> vector<13x256xf32>
    %143 = arith.addf %138, %142 : vector<13x256xf32>
    %c67 = arith.constant 67 : index
    %c0_135 = arith.constant 0 : index
    %144 = vector.load %arg0[%c67, %c0_135] : memref<96x16xf32, #tpu.memory_space<vmem>>, vector<13x16xf32>
    %c10_136 = arith.constant 10 : index
    %c0_137 = arith.constant 0 : index
    %c0_138 = arith.constant 0 : index
    %145 = vector.load %arg1[%c10_136, %c0_137, %c0_138] : memref<12x16x256xf32, #tpu.memory_space<vmem>>, vector<1x16x256xf32>
    %146 = vector.shape_cast %145 : vector<1x16x256xf32> to vector<16x256xf32>
    %cst_139 = arith.constant dense<0.000000e+00> : vector<13x256xf32>
    %147 = tpu.matmul %144, %146, %cst_139 {dimension_numbers = #tpu.dot_dimension_numbers<[1], [0], [0], [1], [0, 0, 1, 1], [], []>} : vector<13x16xf32>, vector<16x256xf32>, vector<13x256xf32> -> vector<13x256xf32>
    %148 = arith.addf %143, %147 : vector<13x256xf32>
    %c83 = arith.constant 83 : index
    %c0_140 = arith.constant 0 : index
    %149 = vector.load %arg0[%c83, %c0_140] : memref<96x16xf32, #tpu.memory_space<vmem>>, vector<13x16xf32>
    %c11_141 = arith.constant 11 : index
    %c0_142 = arith.constant 0 : index
    %c0_143 = arith.constant 0 : index
    %150 = vector.load %arg1[%c11_141, %c0_142, %c0_143] : memref<12x16x256xf32, #tpu.memory_space<vmem>>, vector<1x16x256xf32>
    %151 = vector.shape_cast %150 : vector<1x16x256xf32> to vector<16x256xf32>
    %cst_144 = arith.constant dense<0.000000e+00> : vector<13x256xf32>
    %152 = tpu.matmul %149, %151, %cst_144 {dimension_numbers = #tpu.dot_dimension_numbers<[1], [0], [0], [1], [0, 0, 1, 1], [], []>} : vector<13x16xf32>, vector<16x256xf32>, vector<13x256xf32> -> vector<13x256xf32>
    %153 = arith.addf %148, %152 : vector<13x256xf32>
    %154 = vector.extract_strided_slice %153 {offsets = [0, 0], sizes = [13, 128], strides = [1, 1]} : vector<13x256xf32> to vector<13x128xf32>
    %155 = vector.extract_strided_slice %153 {offsets = [0, 128], sizes = [13, 128], strides = [1, 1]} : vector<13x256xf32> to vector<13x128xf32>
    %156 = arith.maximumf %154, %155 : vector<13x128xf32>
    %c0_145 = arith.constant 0 : index
    %c0_146 = arith.constant 0 : index
    %157 = vector.load %arg5[%c0_145, %c0_146] : memref<13x128xf32, #tpu.memory_space<vmem>>, vector<13x128xf32>
    tpu.vector_store %arg5[%c0_145, %c0_146], %156 {strides = array<i32>} : memref<13x128xf32, #tpu.memory_space<vmem>>, vector<13x128xf32>,
    %c0_147 = arith.constant 0 : index
    %c0_148 = arith.constant 0 : index
    %158 = tpu.strided_load %arg5[%c0_147, %c0_148] {strides = array<i32: 2, 1>} : memref<13x128xf32, #tpu.memory_space<vmem>>, vector<6x128xf32>
    %c1_149 = arith.constant 1 : index
    %c0_150 = arith.constant 0 : index
    %159 = tpu.strided_load %arg5[%c1_149, %c0_150] {strides = array<i32: 2, 1>} : memref<13x128xf32, #tpu.memory_space<vmem>>, vector<6x128xf32>
    %160 = arith.maximumf %158, %159 : vector<6x128xf32>
    %161 = vector.broadcast %0 : vector<1x128xf32> to vector<6x128xf32>
    %162 = arith.addf %160, %161 : vector<6x128xf32>
    %cst_151 = arith.constant 0.000000e+00 : f32
    %163 = vector.broadcast %cst_151 : f32 to vector<6x128xf32>
    %164 = arith.maximumf %162, %163 : vector<6x128xf32>
    %165 = vector.extract_strided_slice %164 {offsets = [0, 0], sizes = [4, 128], strides = [1, 1]} : vector<6x128xf32> to vector<4x128xf32>
    %c0_152 = arith.constant 0 : index
    %c0_153 = arith.constant 0 : index
    %c0_154 = arith.constant 0 : index
    %166 = vector.load %arg2[%c0_152, %c0_153, %c0_154] : memref<8x128x128xf32, #tpu.memory_space<vmem>>, vector<1x128x128xf32>
    %167 = vector.shape_cast %166 : vector<1x128x128xf32> to vector<128x128xf32>
    %cst_155 = arith.constant dense<0.000000e+00> : vector<4x128xf32>
    %168 = tpu.matmul %165, %167, %cst_155 {dimension_numbers = #tpu.dot_dimension_numbers<[1], [0], [0], [1], [0, 0, 1, 1], [], []>} : vector<4x128xf32>, vector<128x128xf32>, vector<4x128xf32> -> vector<4x128xf32>
    %169 = vector.extract_strided_slice %164 {offsets = [1, 0], sizes = [4, 128], strides = [1, 1]} : vector<6x128xf32> to vector<4x128xf32>
    %c1_156 = arith.constant 1 : index
    %c0_157 = arith.constant 0 : index
    %c0_158 = arith.constant 0 : index
    %170 = vector.load %arg2[%c1_156, %c0_157, %c0_158] : memref<8x128x128xf32, #tpu.memory_space<vmem>>, vector<1x128x128xf32>
    %171 = vector.shape_cast %170 : vector<1x128x128xf32> to vector<128x128xf32>
    %cst_159 = arith.constant dense<0.000000e+00> : vector<4x128xf32>
    %172 = tpu.matmul %169, %171, %cst_159 {dimension_numbers = #tpu.dot_dimension_numbers<[1], [0], [0], [1], [0, 0, 1, 1], [], []>} : vector<4x128xf32>, vector<128x128xf32>, vector<4x128xf32> -> vector<4x128xf32>
    %173 = arith.addf %168, %172 : vector<4x128xf32>
    %174 = vector.extract_strided_slice %164 {offsets = [2, 0], sizes = [4, 128], strides = [1, 1]} : vector<6x128xf32> to vector<4x128xf32>
    %c2_160 = arith.constant 2 : index
    %c0_161 = arith.constant 0 : index
    %c0_162 = arith.constant 0 : index
    %175 = vector.load %arg2[%c2_160, %c0_161, %c0_162] : memref<8x128x128xf32, #tpu.memory_space<vmem>>, vector<1x128x128xf32>
    %176 = vector.shape_cast %175 : vector<1x128x128xf32> to vector<128x128xf32>
    %cst_163 = arith.constant dense<0.000000e+00> : vector<4x128xf32>
    %177 = tpu.matmul %174, %176, %cst_163 {dimension_numbers = #tpu.dot_dimension_numbers<[1], [0], [0], [1], [0, 0, 1, 1], [], []>} : vector<4x128xf32>, vector<128x128xf32>, vector<4x128xf32> -> vector<4x128xf32>
    %178 = arith.addf %173, %177 : vector<4x128xf32>
    %179 = vector.broadcast %1 : vector<1x128xf32> to vector<4x128xf32>
    %180 = arith.addf %178, %179 : vector<4x128xf32>
    %cst_164 = arith.constant 0.000000e+00 : f32
    %181 = vector.broadcast %cst_164 : f32 to vector<4x128xf32>
    %182 = arith.maximumf %180, %181 : vector<4x128xf32>
    %c4_165 = arith.constant 4 : index
    %c0_166 = arith.constant 0 : index
    %183 = vector.load %arg6[%c4_165, %c0_166] : memref<8x128xf32, #tpu.memory_space<vmem>>, vector<4x128xf32>
    tpu.vector_store %arg6[%c4_165, %c0_166], %182 {strides = array<i32>} : memref<8x128xf32, #tpu.memory_space<vmem>>, vector<4x128xf32>,
    %c0_167 = arith.constant 0 : index
    %c0_168 = arith.constant 0 : index
    %184 = tpu.strided_load %arg6[%c0_167, %c0_168] {strides = array<i32: 4, 1>} : memref<8x128xf32, #tpu.memory_space<vmem>>, vector<2x128xf32>
    %c3_169 = arith.constant 3 : index
    %c0_170 = arith.constant 0 : index
    %c0_171 = arith.constant 0 : index
    %185 = vector.load %arg2[%c3_169, %c0_170, %c0_171] : memref<8x128x128xf32, #tpu.memory_space<vmem>>, vector<1x128x128xf32>
    %186 = vector.shape_cast %185 : vector<1x128x128xf32> to vector<128x128xf32>
    %cst_172 = arith.constant dense<0.000000e+00> : vector<2x128xf32>
    %187 = tpu.matmul %184, %186, %cst_172 {dimension_numbers = #tpu.dot_dimension_numbers<[1], [0], [0], [1], [0, 0, 1, 1], [], []>} : vector<2x128xf32>, vector<128x128xf32>, vector<2x128xf32> -> vector<2x128xf32>
    %c1_173 = arith.constant 1 : index
    %c0_174 = arith.constant 0 : index
    %188 = tpu.strided_load %arg6[%c1_173, %c0_174] {strides = array<i32: 4, 1>} : memref<8x128xf32, #tpu.memory_space<vmem>>, vector<2x128xf32>
    %c4_175 = arith.constant 4 : index
    %c0_176 = arith.constant 0 : index
    %c0_177 = arith.constant 0 : index
    %189 = vector.load %arg2[%c4_175, %c0_176, %c0_177] : memref<8x128x128xf32, #tpu.memory_space<vmem>>, vector<1x128x128xf32>
    %190 = vector.shape_cast %189 : vector<1x128x128xf32> to vector<128x128xf32>
    %cst_178 = arith.constant dense<0.000000e+00> : vector<2x128xf32>
    %191 = tpu.matmul %188, %190, %cst_178 {dimension_numbers = #tpu.dot_dimension_numbers<[1], [0], [0], [1], [0, 0, 1, 1], [], []>} : vector<2x128xf32>, vector<128x128xf32>, vector<2x128xf32> -> vector<2x128xf32>
    %192 = arith.addf %187, %191 : vector<2x128xf32>
    %c2_179 = arith.constant 2 : index
    %c0_180 = arith.constant 0 : index
    %193 = tpu.strided_load %arg6[%c2_179, %c0_180] {strides = array<i32: 4, 1>} : memref<8x128xf32, #tpu.memory_space<vmem>>, vector<2x128xf32>
    %c5_181 = arith.constant 5 : index
    %c0_182 = arith.constant 0 : index
    %c0_183 = arith.constant 0 : index
    %194 = vector.load %arg2[%c5_181, %c0_182, %c0_183] : memref<8x128x128xf32, #tpu.memory_space<vmem>>, vector<1x128x128xf32>
    %195 = vector.shape_cast %194 : vector<1x128x128xf32> to vector<128x128xf32>
    %cst_184 = arith.constant dense<0.000000e+00> : vector<2x128xf32>
    %196 = tpu.matmul %193, %195, %cst_184 {dimension_numbers = #tpu.dot_dimension_numbers<[1], [0], [0], [1], [0, 0, 1, 1], [], []>} : vector<2x128xf32>, vector<128x128xf32>, vector<2x128xf32> -> vector<2x128xf32>
    %197 = arith.addf %192, %196 : vector<2x128xf32>
    %c3_185 = arith.constant 3 : index
    %c0_186 = arith.constant 0 : index
    %198 = tpu.strided_load %arg6[%c3_185, %c0_186] {strides = array<i32: 4, 1>} : memref<8x128xf32, #tpu.memory_space<vmem>>, vector<2x128xf32>
    %c6_187 = arith.constant 6 : index
    %c0_188 = arith.constant 0 : index
    %c0_189 = arith.constant 0 : index
    %199 = vector.load %arg2[%c6_187, %c0_188, %c0_189] : memref<8x128x128xf32, #tpu.memory_space<vmem>>, vector<1x128x128xf32>
    %200 = vector.shape_cast %199 : vector<1x128x128xf32> to vector<128x128xf32>
    %cst_190 = arith.constant dense<0.000000e+00> : vector<2x128xf32>
    %201 = tpu.matmul %198, %200, %cst_190 {dimension_numbers = #tpu.dot_dimension_numbers<[1], [0], [0], [1], [0, 0, 1, 1], [], []>} : vector<2x128xf32>, vector<128x128xf32>, vector<2x128xf32> -> vector<2x128xf32>
    %202 = arith.addf %197, %201 : vector<2x128xf32>
    %203 = vector.broadcast %2 : vector<1x128xf32> to vector<2x128xf32>
    %204 = arith.addf %202, %203 : vector<2x128xf32>
    %cst_191 = arith.constant 0.000000e+00 : f32
    %205 = vector.broadcast %cst_191 : f32 to vector<2x128xf32>
    %206 = arith.maximumf %204, %205 : vector<2x128xf32>
    %c7_192 = arith.constant 7 : index
    %c0_193 = arith.constant 0 : index
    %c0_194 = arith.constant 0 : index
    %207 = vector.load %arg2[%c7_192, %c0_193, %c0_194] : memref<8x128x128xf32, #tpu.memory_space<vmem>>, vector<1x128x128xf32>
    %208 = vector.shape_cast %207 : vector<1x128x128xf32> to vector<128x128xf32>
    %cst_195 = arith.constant dense<0.000000e+00> : vector<2x128xf32>
    %209 = tpu.matmul %206, %208, %cst_195 {dimension_numbers = #tpu.dot_dimension_numbers<[1], [0], [0], [1], [0, 0, 1, 1], [], []>} : vector<2x128xf32>, vector<128x128xf32>, vector<2x128xf32> -> vector<2x128xf32>
    %210 = vector.broadcast %3 : vector<1x128xf32> to vector<2x128xf32>
    %211 = arith.addf %209, %210 : vector<2x128xf32>
    %cst_196 = arith.constant 0.000000e+00 : f32
    %212 = vector.broadcast %cst_196 : f32 to vector<2x128xf32>
    %213 = arith.maximumf %211, %212 : vector<2x128xf32>
    %214 = vector.broadcast %4 : vector<1x128xf32> to vector<2x128xf32>
    %215 = arith.mulf %213, %214 : vector<2x128xf32>
    %cst_197 = arith.constant dense<0.000000e+00> : vector<2xf32>
    %216 = vector.multi_reduction <add>, %215, %cst_197 [1] : vector<2x128xf32> to vector<2xf32>
    %217 = vector.shape_cast %216 : vector<2xf32> to vector<2x1xf32>
    %218 = vector.broadcast %5 : vector<1x1xf32> to vector<2x1xf32>
    %219 = arith.addf %217, %218 : vector<2x1xf32>
    %c0_198 = arith.constant 0 : index
    %c0_199 = arith.constant 0 : index
    %220 = vector.load %arg4[%c0_198, %c0_199] : memref<2x1xf32, #tpu.memory_space<vmem>>, vector<2x1xf32>
    tpu.vector_store %arg4[%c0_198, %c0_199], %219 {strides = array<i32>} : memref<2x1xf32, #tpu.memory_space<vmem>>, vector<2x1xf32>,
    return
  }
}

</mosaic_0001>

<llo_original>
// kernel: cnn_forward.1
$region0: #{cnn_forward.1}
  #allocation0 [shape = 'u32[]', space=smem, size = 0x4, offset = 0x4, fixed_abs, tag = 'smem constant byte address 0x4 - core index']
  #allocation1 [shape = 'u32[144,128]{1,0:T(1,128)}', space=vmem, size = 0x12000, scoped, tag = 'internal scratch']
  #allocation2 [shape = 'f32[13,128]{1,0:T(8,128)}', space=vmem, size = 0x2000, scoped, tag = 'scratch operand']
  #allocation3 [shape = 'f32[8,128]{1,0:T(8,128)}', space=vmem, size = 0x1000, scoped, tag = 'scratch operand']
  %s0 = inlined_call_operand.hbm [shape: f32[96,16], index: 0, kind: input, shape index: {}]
  %s1 = inlined_call_operand.hbm [shape: f32[12,16,256], index: 1, kind: input, shape index: {}]
  %s2 = inlined_call_operand.hbm [shape: f32[8,128,128], index: 2, kind: input, shape index: {}]
  %s3 = inlined_call_operand.hbm [shape: f32[8,128], index: 3, kind: input, shape index: {}]
  %s4 = inlined_call_operand.vmem [shape: f32[2,1], index: 4, kind: output, shape index: {}]
  %s5 = sld [smem:[#allocation0]]
  $region42: #{cnn_forward.1} parent=0
    _
  %s7 = ssub.s32 1, %s5
  %s8 = scalar_select 0, %s7, %s5
  $region1: #{cnn_forward.1} parent=0
    #allocation4 [shape = 'u8[49152]{0}', space=vmem, size = 0xc000, scoped, tag = 'input window, operand 0, single buffered']
    #allocation5 [shape = 's32[1]{0}', space=sflag, size = 0x4, scoped, tag = 'scoped memory for cnn_forward.1']
    #allocation6 [shape = 'u8[196608]{0}', space=vmem, size = 0x30000, scoped, tag = 'input window, operand 1, single buffered']
    #allocation7 [shape = 's32[1]{0}', space=sflag, size = 0x4, scoped, tag = 'scoped memory for cnn_forward.1']
    #allocation8 [shape = 'u8[524288]{0}', space=vmem, size = 0x80000, scoped, tag = 'input window, operand 2, single buffered']
    #allocation9 [shape = 'u8[4096]{0}', space=vmem, size = 0x1000, scoped, tag = 'input window, operand 3, single buffered']
    #allocation10 [shape = 's32[1]{0}', space=sflag, size = 0x4, scoped, tag = 'scoped memory for cnn_forward.1']
    %9 = vsyncpa [#allocation5], 0
    %10 = vsyncpa [#allocation7], 0
    %11 = vsyncpa [#allocation10], 0
    // Predicated region
    $region2: #{cnn_forward.1} parent=1 // pred_check
      _
    $region3: #{cnn_forward.1} parent=1 // pred_check_branch
      %13 = sbr.rel (0) target = $region5
    $region4: #{cnn_forward.1} parent=1 // pred_region
      %s15 = ssub.s32 1536, 1536
      %16 = vsyncadd [#allocation5], %s15
      %s17 = sshll.u32 [#allocation4], 4
      %s18 = int_to_ptr.vmem [resolvable:$true] %s17
      %23 = dma.hbm_to_vmem [thread:$0]  %s0, 1536, %s18, [#allocation5], 128, 128, 8
    $region5: #{cnn_forward.1} parent=1 // pred_fallthru
      _
    // Predicated region
    $region6: #{cnn_forward.1} parent=1 // pred_check
      _
    $region7: #{cnn_forward.1} parent=1 // pred_check_branch
      %25 = sbr.rel (0) target = $region9
    $region8: #{cnn_forward.1} parent=1 // pred_region
      %s27 = ssub.s32 6144, 6144
      %28 = vsyncadd [#allocation7], %s27
      %s29 = sshll.u32 [#allocation6], 4
      %s30 = int_to_ptr.vmem [resolvable:$true] %s29
      %35 = dma.hbm_to_vmem [thread:$0]  %s1, 6144, %s30, [#allocation7], 256, 256, 16
    $region9: #{cnn_forward.1} parent=1 // pred_fallthru
      _
    // Predicated region
    $region10: #{cnn_forward.1} parent=1 // pred_check
      _
    $region11: #{cnn_forward.1} parent=1 // pred_check_branch
      %37 = sbr.rel (0) target = $region13
    $region12: #{cnn_forward.1} parent=1 // pred_region
      %s39 = ssub.s32 16384, 16384
      %40 = vsyncadd [#allocation7], %s39
      %s41 = sshll.u32 [#allocation8], 4
      %s42 = int_to_ptr.vmem [resolvable:$true] %s41
      %47 = dma.hbm_to_vmem [thread:$0]  %s2, 16384, %s42, [#allocation7], 128, 128, 8
    $region13: #{cnn_forward.1} parent=1 // pred_fallthru
      _
    // Predicated region
    $region14: #{cnn_forward.1} parent=1 // pred_check
      _
    $region15: #{cnn_forward.1} parent=1 // pred_check_branch
      %49 = sbr.rel (0) target = $region17
    $region16: #{cnn_forward.1} parent=1 // pred_region
      %s51 = ssub.s32 128, 128
      %52 = vsyncadd [#allocation10], %s51
      %s54 = sshll.u32 [#allocation9], 4
      %s55 = int_to_ptr.vmem [resolvable:$true] %s54
      %57 = dma.hbm_to_vmem [thread:$0]  %s3, 128, %s55, [#allocation10]
    $region17: #{cnn_forward.1} parent=1 // pred_fallthru
      _
    // Predicated region
    $region18: #{cnn_forward.1} parent=1 // pred_check
      _
    $region19: #{cnn_forward.1} parent=1 // pred_check_branch
      %59 = sbr.rel (0) target = $region21
    $region20: #{cnn_forward.1} parent=1 // pred_region
      %60 = dma.done [#allocation5], 1536
    $region21: #{cnn_forward.1} parent=1 // pred_fallthru
      _
    // Predicated region
    $region22: #{cnn_forward.1} parent=1 // pred_check
      _
    $region23: #{cnn_forward.1} parent=1 // pred_check_branch
      %62 = sbr.rel (0) target = $region25
    $region24: #{cnn_forward.1} parent=1 // pred_region
      %63 = dma.done [#allocation7], 6144
    $region25: #{cnn_forward.1} parent=1 // pred_fallthru
      _
    // Predicated region
    $region26: #{cnn_forward.1} parent=1 // pred_check
      _
    $region27: #{cnn_forward.1} parent=1 // pred_check_branch
      %65 = sbr.rel (0) target = $region29
    $region28: #{cnn_forward.1} parent=1 // pred_region
      %66 = dma.done [#allocation7], 16384
    $region29: #{cnn_forward.1} parent=1 // pred_fallthru
      _
    // Predicated region
    $region30: #{cnn_forward.1} parent=1 // pred_check
      _
    $region31: #{cnn_forward.1} parent=1 // pred_check_branch
      %68 = sbr.rel (0) target = $region33
    $region32: #{cnn_forward.1} parent=1 // pred_region
      %69 = dma.done [#allocation10], 128
    $region33: #{cnn_forward.1} parent=1 // pred_fallthru
      _
    %v70 = vld [vmem:[#allocation9] sm:$0x1]
    %v71 = vld [vmem:[#allocation9 + $0x1] sm:$0x1]
    %v72 = vld [vmem:[#allocation9 + $0x2] sm:$0x1]
    %v73 = vld [vmem:[#allocation9 + $0x3] sm:$0x1]
    %v74 = vld [vmem:[#allocation9 + $0x4] sm:$0x1]
    %v75 = vld [vmem:[#allocation9 + $0x5] sm:$0x1]
    %v76 = vld [vmem:[#allocation4] sm:$0xff]
    %v77 = vld [vmem:[#allocation4 + $0x8] sm:$0x1f]
    %v78 = vld [vmem:[#allocation6] sm:$0xff]
    %v79 = vld [vmem:[#allocation6 + $0x8] sm:$0xff]
    %v80 = vld [vmem:[#allocation6 + $0x10] sm:$0xff]
    %v81 = vld [vmem:[#allocation6 + $0x18] sm:$0xff]
    %v82 = vld [vmem:[#allocation4 + $0x10] sm:$0xff]
    %v83 = vld [vmem:[#allocation4 + $0x18] sm:$0x1f]
    %s84 = scalar_lea.vmem [#allocation6], 32
    %v85 = vld [vmem:[%s84] sm:$0xff]
    %v86 = vld [vmem:[%s84 + $0x8] sm:$0xff]
    %v87 = vld [vmem:[%s84 + $0x10] sm:$0xff]
    %v88 = vld [vmem:[%s84 + $0x18] sm:$0xff]
    %vm89 = vcmask 130048
    %v91 = vsel %vm89, %v82, 0
    %v94 = vsel %vm89, %v83, 0
    %96 = vmatprep.subr.mxu0 %v86
    %97 = vmatpush1.msra.mxu0 %v85
    %98 = vmatprep.subr.mxu0 %v88
    %99 = vmatpush1.msra.mxu0 %v87
    %100 = vmatprep.subr.mxu0 0.0
    %101 = vmatpush1.msra.mxu0 0.0
    %102 = vmatprep.subr.mxu0 0.0
    %103 = vmatpush1.msra.mxu0 0.0
    %104 = vmatprep.subr.mxu0 0.0
    %105 = vmatpush1.msra.mxu0 0.0
    %106 = vmatprep.subr.mxu0 0.0
    %107 = vmatpush1.msra.mxu0 0.0
    %108 = vmatprep.subr.mxu0 0.0
    %109 = vmatpush1.msra.mxu0 0.0
    %110 = vmatprep.subr.mxu0 0.0
    %111 = vmatpush1.msra.mxu0 0.0
    %112 = vmatprep.subr.mxu0 0.0
    %113 = vmatpush1.msra.mxu0 0.0
    %114 = vmatprep.subr.mxu0 0.0
    %115 = vmatpush1.msra.mxu0 0.0
    %116 = vmatprep.subr.mxu0 0.0
    %117 = vmatpush1.msra.mxu0 0.0
    %118 = vmatprep.subr.mxu0 0.0
    %119 = vmatpush1.msra.mxu0 0.0
    %120 = vmatprep.subr.mxu0 0.0
    %121 = vmatpush1.msra.mxu0 0.0
    %122 = vmatprep.subr.mxu0 0.0
    %123 = vmatpush1.msra.mxu0 0.0
    %124 = vmatprep.subr.mxu0 0.0
    %125 = vmatpush1.msra.mxu0 0.0
    %126 = vmatprep.subr.mxu0 0.0
    %127 = vmatpush1.msra.mxu0 0.0
    %128 = vmatprep.subr.mxu0 0.0
    %129 = vmatpush1.msra.mxu0 0.0
    %130 = vmatprep.subr.mxu0 0.0
    %131 = vmatpush1.msra.mxu0 0.0
    %132 = vmatprep.subr.mxu0 0.0
    %133 = vmatpush1.msra.mxu0 0.0
    %134 = vmatprep.subr.mxu0 0.0
    %135 = vmatpush1.msra.mxu0 0.0
    %136 = vmatprep.subr.mxu0 0.0
    %137 = vmatpush1.msra.mxu0 0.0
    %138 = vmatprep.subr.mxu0 0.0
    %139 = vmatpush1.msra.mxu0 0.0
    %140 = vmatprep.subr.mxu0 0.0
    %141 = vmatpush1.msra.mxu0 0.0
    %142 = vmatprep.subr.mxu0 0.0
    %143 = vmatpush1.msra.mxu0 0.0
    %144 = vmatprep.subr.mxu0 0.0
    %145 = vmatpush1.msra.mxu0 0.0
    %146 = vmatprep.subr.mxu0 0.0
    %147 = vmatpush1.msra.mxu0 0.0
    %148 = vmatprep.subr.mxu0 0.0
    %149 = vmatpush1.msra.mxu0 0.0
    %150 = vmatprep.subr.mxu0 0.0
    %151 = vmatpush1.msra.mxu0 0.0
    %152 = vmatprep.subr.mxu0 0.0
    %153 = vmatpush1.msra.mxu0 0.0
    %154 = vmatprep.subr.mxu0 0.0
    %155 = vmatpush1.msra.mxu0 0.0
    %156 = vmatprep.subr.mxu0 0.0
    %157 = vmatpush1.msra.mxu0 0.0
    %158 = vmatprep.subr.mxu0 0.0
    %159 = vmatpush1.msra.mxu0 0.0
    %160 = vmatprep.mubr.f32.mxu0 0.0
    %161 = vmatmul.mubr.f32.gmra.mrb[0].mxu0 %v91
    %v162 = vpop.f32.mrb[0].mxu0
    %v163 = vadd.f32 0.0, %v162
    %v164 = vpop.f32.mrb[0].mxu0
    %v165 = vadd.f32 0.0, %v164
    %166 = vmatprep.mubr.f32.mxu0 0.0
    %167 = vmatmul.mubr.f32.gmra.mrb[0].mxu0 %v94
    %v168 = vpop.f32.mrb[0].mxu0
    %v169 = vadd.f32 0.0, %v168
    %v170 = vpop.f32.mrb[0].mxu0
    %v171 = vadd.f32 0.0, %v170
    %172 = vdwg.mxu0
    %v174 = vsel %vm89, %v76, 0
    %v177 = vsel %vm89, %v77, 0
    %179 = vmatprep.subr.mxu0 %v79
    %180 = vmatpush1.msra.mxu0 %v78
    %181 = vmatprep.subr.mxu0 %v81
    %182 = vmatpush1.msra.mxu0 %v80
    %183 = vmatprep.subr.mxu0 0.0
    %184 = vmatpush1.msra.mxu0 0.0
    %185 = vmatprep.subr.mxu0 0.0
    %186 = vmatpush1.msra.mxu0 0.0
    %187 = vmatprep.subr.mxu0 0.0
    %188 = vmatpush1.msra.mxu0 0.0
    %189 = vmatprep.subr.mxu0 0.0
    %190 = vmatpush1.msra.mxu0 0.0
    %191 = vmatprep.subr.mxu0 0.0
    %192 = vmatpush1.msra.mxu0 0.0
    %193 = vmatprep.subr.mxu0 0.0
    %194 = vmatpush1.msra.mxu0 0.0
    %195 = vmatprep.subr.mxu0 0.0
    %196 = vmatpush1.msra.mxu0 0.0
    %197 = vmatprep.subr.mxu0 0.0
    %198 = vmatpush1.msra.mxu0 0.0
    %199 = vmatprep.subr.mxu0 0.0
    %200 = vmatpush1.msra.mxu0 0.0
    %201 = vmatprep.subr.mxu0 0.0
    %202 = vmatpush1.msra.mxu0 0.0
    %203 = vmatprep.subr.mxu0 0.0
    %204 = vmatpush1.msra.mxu0 0.0
    %205 = vmatprep.subr.mxu0 0.0
    %206 = vmatpush1.msra.mxu0 0.0
    %207 = vmatprep.subr.mxu0 0.0
    %208 = vmatpush1.msra.mxu0 0.0
    %209 = vmatprep.subr.mxu0 0.0
    %210 = vmatpush1.msra.mxu0 0.0
    %211 = vmatprep.subr.mxu0 0.0
    %212 = vmatpush1.msra.mxu0 0.0
    %213 = vmatprep.subr.mxu0 0.0
    %214 = vmatpush1.msra.mxu0 0.0
    %215 = vmatprep.subr.mxu0 0.0
    %216 = vmatpush1.msra.mxu0 0.0
    %217 = vmatprep.subr.mxu0 0.0
    %218 = vmatpush1.msra.mxu0 0.0
    %219 = vmatprep.subr.mxu0 0.0
    %220 = vmatpush1.msra.mxu0 0.0
    %221 = vmatprep.subr.mxu0 0.0
    %222 = vmatpush1.msra.mxu0 0.0
    %223 = vmatprep.subr.mxu0 0.0
    %224 = vmatpush1.msra.mxu0 0.0
    %225 = vmatprep.subr.mxu0 0.0
    %226 = vmatpush1.msra.mxu0 0.0
    %227 = vmatprep.subr.mxu0 0.0
    %228 = vmatpush1.msra.mxu0 0.0
    %229 = vmatprep.subr.mxu0 0.0
    %230 = vmatpush1.msra.mxu0 0.0
    %231 = vmatprep.subr.mxu0 0.0
    %232 = vmatpush1.msra.mxu0 0.0
    %233 = vmatprep.subr.mxu0 0.0
    %234 = vmatpush1.msra.mxu0 0.0
    %235 = vmatprep.subr.mxu0 0.0
    %236 = vmatpush1.msra.mxu0 0.0
    %237 = vmatprep.subr.mxu0 0.0
    %238 = vmatpush1.msra.mxu0 0.0
    %239 = vmatprep.subr.mxu0 0.0
    %240 = vmatpush1.msra.mxu0 0.0
    %241 = vmatprep.subr.mxu0 0.0
    %242 = vmatpush1.msra.mxu0 0.0
    %243 = vmatprep.mubr.f32.mxu0 0.0
    %244 = vmatmul.mubr.f32.gmra.mrb[0].mxu0 %v174
    %v245 = vpop.f32.mrb[0].mxu0
    %v246 = vadd.f32 %v163, %v245
    %v247 = vpop.f32.mrb[0].mxu0
    %v248 = vadd.f32 %v165, %v247
    %249 = vmatprep.mubr.f32.mxu0 0.0
    %250 = vmatmul.mubr.f32.gmra.mrb[0].mxu0 %v177
    %v251 = vpop.f32.mrb[0].mxu0
    %v252 = vadd.f32 %v169, %v251
    %v253 = vpop.f32.mrb[0].mxu0
    %v254 = vadd.f32 %v171, %v253
    %255 = vdwg.mxu0
    %v256 = vld [vmem:[#allocation4 + $0x20] sm:$0xff]
    %v257 = vld [vmem:[#allocation4 + $0x28] sm:$0x1f]
    %s258 = scalar_lea.vmem [#allocation6], 64
    %v259 = vld [vmem:[%s258] sm:$0xff]
    %v260 = vld [vmem:[%s258 + $0x8] sm:$0xff]
    %v261 = vld [vmem:[%s258 + $0x10] sm:$0xff]
    %v262 = vld [vmem:[%s258 + $0x18] sm:$0xff]
    %v264 = vsel %vm89, %v256, 0
    %v267 = vsel %vm89, %v257, 0
    %269 = vmatprep.subr.mxu0 %v260
    %270 = vmatpush1.msra.mxu0 %v259
    %271 = vmatprep.subr.mxu0 %v262
    %272 = vmatpush1.msra.mxu0 %v261
    %273 = vmatprep.subr.mxu0 0.0
    %274 = vmatpush1.msra.mxu0 0.0
    %275 = vmatprep.subr.mxu0 0.0
    %276 = vmatpush1.msra.mxu0 0.0
    %277 = vmatprep.subr.mxu0 0.0
    %278 = vmatpush1.msra.mxu0 0.0
    %279 = vmatprep.subr.mxu0 0.0
    %280 = vmatpush1.msra.mxu0 0.0
    %281 = vmatprep.subr.mxu0 0.0
    %282 = vmatpush1.msra.mxu0 0.0
    %283 = vmatprep.subr.mxu0 0.0
    %284 = vmatpush1.msra.mxu0 0.0
    %285 = vmatprep.subr.mxu0 0.0
    %286 = vmatpush1.msra.mxu0 0.0
    %287 = vmatprep.subr.mxu0 0.0
    %288 = vmatpush1.msra.mxu0 0.0
    %289 = vmatprep.subr.mxu0 0.0
    %290 = vmatpush1.msra.mxu0 0.0
    %291 = vmatprep.subr.mxu0 0.0
    %292 = vmatpush1.msra.mxu0 0.0
    %293 = vmatprep.subr.mxu0 0.0
    %294 = vmatpush1.msra.mxu0 0.0
    %295 = vmatprep.subr.mxu0 0.0
    %296 = vmatpush1.msra.mxu0 0.0
    %297 = vmatprep.subr.mxu0 0.0
    %298 = vmatpush1.msra.mxu0 0.0
    %299 = vmatprep.subr.mxu0 0.0
    %300 = vmatpush1.msra.mxu0 0.0
    %301 = vmatprep.subr.mxu0 0.0
    %302 = vmatpush1.msra.mxu0 0.0
    %303 = vmatprep.subr.mxu0 0.0
    %304 = vmatpush1.msra.mxu0 0.0
    %305 = vmatprep.subr.mxu0 0.0
    %306 = vmatpush1.msra.mxu0 0.0
    %307 = vmatprep.subr.mxu0 0.0
    %308 = vmatpush1.msra.mxu0 0.0
    %309 = vmatprep.subr.mxu0 0.0
    %310 = vmatpush1.msra.mxu0 0.0
    %311 = vmatprep.subr.mxu0 0.0
    %312 = vmatpush1.msra.mxu0 0.0
    %313 = vmatprep.subr.mxu0 0.0
    %314 = vmatpush1.msra.mxu0 0.0
    %315 = vmatprep.subr.mxu0 0.0
    %316 = vmatpush1.msra.mxu0 0.0
    %317 = vmatprep.subr.mxu0 0.0
    %318 = vmatpush1.msra.mxu0 0.0
    %319 = vmatprep.subr.mxu0 0.0
    %320 = vmatpush1.msra.mxu0 0.0
    %321 = vmatprep.subr.mxu0 0.0
    %322 = vmatpush1.msra.mxu0 0.0
    %323 = vmatprep.subr.mxu0 0.0
    %324 = vmatpush1.msra.mxu0 0.0
    %325 = vmatprep.subr.mxu0 0.0
    %326 = vmatpush1.msra.mxu0 0.0
    %327 = vmatprep.subr.mxu0 0.0
    %328 = vmatpush1.msra.mxu0 0.0
    %329 = vmatprep.subr.mxu0 0.0
    %330 = vmatpush1.msra.mxu0 0.0
    %331 = vmatprep.subr.mxu0 0.0
    %332 = vmatpush1.msra.mxu0 0.0
    %333 = vmatprep.mubr.f32.mxu0 0.0
    %334 = vmatmul.mubr.f32.gmra.mrb[0].mxu0 %v264
    %v335 = vpop.f32.mrb[0].mxu0
    %v336 = vadd.f32 0.0, %v335
    %v337 = vpop.f32.mrb[0].mxu0
    %v338 = vadd.f32 0.0, %v337
    %339 = vmatprep.mubr.f32.mxu0 0.0
    %340 = vmatmul.mubr.f32.gmra.mrb[0].mxu0 %v267
    %v341 = vpop.f32.mrb[0].mxu0
    %v342 = vadd.f32 0.0, %v341
    %v343 = vpop.f32.mrb[0].mxu0
    %v344 = vadd.f32 0.0, %v343
    %345 = vdwg.mxu0
    %v346 = vadd.f32 %v246, %v336
    %v347 = vadd.f32 %v248, %v338
    %v348 = vadd.f32 %v252, %v342
    %v349 = vadd.f32 %v254, %v344
    %v350 = vld [vmem:[#allocation4 + $0x1] sm:$0xff]
    %v351 = vld [vmem:[#allocation4 + $0x9] sm:$0x1f]
    %s352 = scalar_lea.vmem [#allocation6], 96
    %v353 = vld [vmem:[%s352] sm:$0xff]
    %v354 = vld [vmem:[%s352 + $0x8] sm:$0xff]
    %v355 = vld [vmem:[%s352 + $0x10] sm:$0xff]
    %v356 = vld [vmem:[%s352 + $0x18] sm:$0xff]
    %v358 = vsel %vm89, %v350, 0
    %v361 = vsel %vm89, %v351, 0
    %363 = vmatprep.subr.mxu0 %v354
    %364 = vmatpush1.msra.mxu0 %v353
    %365 = vmatprep.subr.mxu0 %v356
    %366 = vmatpush1.msra.mxu0 %v355
    %367 = vmatprep.subr.mxu0 0.0
    %368 = vmatpush1.msra.mxu0 0.0
    %369 = vmatprep.subr.mxu0 0.0
    %370 = vmatpush1.msra.mxu0 0.0
    %371 = vmatprep.subr.mxu0 0.0
    %372 = vmatpush1.msra.mxu0 0.0
    %373 = vmatprep.subr.mxu0 0.0
    %374 = vmatpush1.msra.mxu0 0.0
    %375 = vmatprep.subr.mxu0 0.0
    %376 = vmatpush1.msra.mxu0 0.0
    %377 = vmatprep.subr.mxu0 0.0
    %378 = vmatpush1.msra.mxu0 0.0
    %379 = vmatprep.subr.mxu0 0.0
    %380 = vmatpush1.msra.mxu0 0.0
    %381 = vmatprep.subr.mxu0 0.0
    %382 = vmatpush1.msra.mxu0 0.0
    %383 = vmatprep.subr.mxu0 0.0
    %384 = vmatpush1.msra.mxu0 0.0
    %385 = vmatprep.subr.mxu0 0.0
    %386 = vmatpush1.msra.mxu0 0.0
    %387 = vmatprep.subr.mxu0 0.0
    %388 = vmatpush1.msra.mxu0 0.0
    %389 = vmatprep.subr.mxu0 0.0
    %390 = vmatpush1.msra.mxu0 0.0
    %391 = vmatprep.subr.mxu0 0.0
    %392 = vmatpush1.msra.mxu0 0.0
    %393 = vmatprep.subr.mxu0 0.0
    %394 = vmatpush1.msra.mxu0 0.0
    %395 = vmatprep.subr.mxu0 0.0
    %396 = vmatpush1.msra.mxu0 0.0
    %397 = vmatprep.subr.mxu0 0.0
    %398 = vmatpush1.msra.mxu0 0.0
    %399 = vmatprep.subr.mxu0 0.0
    %400 = vmatpush1.msra.mxu0 0.0
    %401 = vmatprep.subr.mxu0 0.0
    %402 = vmatpush1.msra.mxu0 0.0
    %403 = vmatprep.subr.mxu0 0.0
    %404 = vmatpush1.msra.mxu0 0.0
    %405 = vmatprep.subr.mxu0 0.0
    %406 = vmatpush1.msra.mxu0 0.0
    %407 = vmatprep.subr.mxu0 0.0
    %408 = vmatpush1.msra.mxu0 0.0
    %409 = vmatprep.subr.mxu0 0.0
    %410 = vmatpush1.msra.mxu0 0.0
    %411 = vmatprep.subr.mxu0 0.0
    %412 = vmatpush1.msra.mxu0 0.0
    %413 = vmatprep.subr.mxu0 0.0
    %414 = vmatpush1.msra.mxu0 0.0
    %415 = vmatprep.subr.mxu0 0.0
    %416 = vmatpush1.msra.mxu0 0.0
    %417 = vmatprep.subr.mxu0 0.0
    %418 = vmatpush1.msra.mxu0 0.0
    %419 = vmatprep.subr.mxu0 0.0
    %420 = vmatpush1.msra.mxu0 0.0
    %421 = vmatprep.subr.mxu0 0.0
    %422 = vmatpush1.msra.mxu0 0.0
    %423 = vmatprep.subr.mxu0 0.0
    %424 = vmatpush1.msra.mxu0 0.0
    %425 = vmatprep.subr.mxu0 0.0
    %426 = vmatpush1.msra.mxu0 0.0
    %427 = vmatprep.mubr.f32.mxu0 0.0
    %428 = vmatmul.mubr.f32.gmra.mrb[0].mxu0 %v358
    %v429 = vpop.f32.mrb[0].mxu0
    %v430 = vadd.f32 0.0, %v429
    %v431 = vpop.f32.mrb[0].mxu0
    %v432 = vadd.f32 0.0, %v431
    %433 = vmatprep.mubr.f32.mxu0 0.0
    %434 = vmatmul.mubr.f32.gmra.mrb[0].mxu0 %v361
    %v435 = vpop.f32.mrb[0].mxu0
    %v436 = vadd.f32 0.0, %v435
    %v437 = vpop.f32.mrb[0].mxu0
    %v438 = vadd.f32 0.0, %v437
    %439 = vdwg.mxu0
    %v440 = vadd.f32 %v346, %v430
    %v441 = vadd.f32 %v347, %v432
    %v442 = vadd.f32 %v348, %v436
    %v443 = vadd.f32 %v349, %v438
    %v444 = vld [vmem:[#allocation4 + $0x11] sm:$0xff]
    %v445 = vld [vmem:[#allocation4 + $0x19] sm:$0x1f]
    %s446 = scalar_lea.vmem [#allocation6], 128
    %v447 = vld [vmem:[%s446] sm:$0xff]
    %v448 = vld [vmem:[%s446 + $0x8] sm:$0xff]
    %v449 = vld [vmem:[%s446 + $0x10] sm:$0xff]
    %v450 = vld [vmem:[%s446 + $0x18] sm:$0xff]
    %v452 = vsel %vm89, %v444, 0
    %v455 = vsel %vm89, %v445, 0
    %457 = vmatprep.subr.mxu0 %v448
    %458 = vmatpush1.msra.mxu0 %v447
    %459 = vmatprep.subr.mxu0 %v450
    %460 = vmatpush1.msra.mxu0 %v449
    %461 = vmatprep.subr.mxu0 0.0
    %462 = vmatpush1.msra.mxu0 0.0
    %463 = vmatprep.subr.mxu0 0.0
    %464 = vmatpush1.msra.mxu0 0.0
    %465 = vmatprep.subr.mxu0 0.0
    %466 = vmatpush1.msra.mxu0 0.0
    %467 = vmatprep.subr.mxu0 0.0
    %468 = vmatpush1.msra.mxu0 0.0
    %469 = vmatprep.subr.mxu0 0.0
    %470 = vmatpush1.msra.mxu0 0.0
    %471 = vmatprep.subr.mxu0 0.0
    %472 = vmatpush1.msra.mxu0 0.0
    %473 = vmatprep.subr.mxu0 0.0
    %474 = vmatpush1.msra.mxu0 0.0
    %475 = vmatprep.subr.mxu0 0.0
    %476 = vmatpush1.msra.mxu0 0.0
    %477 = vmatprep.subr.mxu0 0.0
    %478 = vmatpush1.msra.mxu0 0.0
    %479 = vmatprep.subr.mxu0 0.0
    %480 = vmatpush1.msra.mxu0 0.0
    %481 = vmatprep.subr.mxu0 0.0
    %482 = vmatpush1.msra.mxu0 0.0
    %483 = vmatprep.subr.mxu0 0.0
    %484 = vmatpush1.msra.mxu0 0.0
    %485 = vmatprep.subr.mxu0 0.0
    %486 = vmatpush1.msra.mxu0 0.0
    %487 = vmatprep.subr.mxu0 0.0
    %488 = vmatpush1.msra.mxu0 0.0
    %489 = vmatprep.subr.mxu0 0.0
    %490 = vmatpush1.msra.mxu0 0.0
    %491 = vmatprep.subr.mxu0 0.0
    %492 = vmatpush1.msra.mxu0 0.0
    %493 = vmatprep.subr.mxu0 0.0
    %494 = vmatpush1.msra.mxu0 0.0
    %495 = vmatprep.subr.mxu0 0.0
    %496 = vmatpush1.msra.mxu0 0.0
    %497 = vmatprep.subr.mxu0 0.0
    %498 = vmatpush1.msra.mxu0 0.0
    %499 = vmatprep.subr.mxu0 0.0
    %500 = vmatpush1.msra.mxu0 0.0
    %501 = vmatprep.subr.mxu0 0.0
    %502 = vmatpush1.msra.mxu0 0.0
    %503 = vmatprep.subr.mxu0 0.0
    %504 = vmatpush1.msra.mxu0 0.0
    %505 = vmatprep.subr.mxu0 0.0
    %506 = vmatpush1.msra.mxu0 0.0
    %507 = vmatprep.subr.mxu0 0.0
    %508 = vmatpush1.msra.mxu0 0.0
    %509 = vmatprep.subr.mxu0 0.0
    %510 = vmatpush1.msra.mxu0 0.0
    %511 = vmatprep.subr.mxu0 0.0
    %512 = vmatpush1.msra.mxu0 0.0
    %513 = vmatprep.subr.mxu0 0.0
    %514 = vmatpush1.msra.mxu0 0.0
    %515 = vmatprep.subr.mxu0 0.0
    %516 = vmatpush1.msra.mxu0 0.0
    %517 = vmatprep.subr.mxu0 0.0
    %518 = vmatpush1.msra.mxu0 0.0
    %519 = vmatprep.subr.mxu0 0.0
    %520 = vmatpush1.msra.mxu0 0.0
    %521 = vmatprep.mubr.f32.mxu0 0.0
    %522 = vmatmul.mubr.f32.gmra.mrb[0].mxu0 %v452
    %v523 = vpop.f32.mrb[0].mxu0
    %v524 = vadd.f32 0.0, %v523
    %v525 = vpop.f32.mrb[0].mxu0
    %v526 = vadd.f32 0.0, %v525
    %527 = vmatprep.mubr.f32.mxu0 0.0
    %528 = vmatmul.mubr.f32.gmra.mrb[0].mxu0 %v455
    %v529 = vpop.f32.mrb[0].mxu0
    %v530 = vadd.f32 0.0, %v529
    %v531 = vpop.f32.mrb[0].mxu0
    %v532 = vadd.f32 0.0, %v531
    %533 = vdwg.mxu0
    %v534 = vadd.f32 %v440, %v524
    %v535 = vadd.f32 %v441, %v526
    %v536 = vadd.f32 %v442, %v530
    %v537 = vadd.f32 %v443, %v532
    %v538 = vld [vmem:[#allocation4 + $0x21] sm:$0xff]
    %v539 = vld [vmem:[#allocation4 + $0x29] sm:$0x1f]
    %s540 = scalar_lea.vmem [#allocation6], 160
    %v541 = vld [vmem:[%s540] sm:$0xff]
    %v542 = vld [vmem:[%s540 + $0x8] sm:$0xff]
    %v543 = vld [vmem:[%s540 + $0x10] sm:$0xff]
    %v544 = vld [vmem:[%s540 + $0x18] sm:$0xff]
    %v546 = vsel %vm89, %v538, 0
    %v549 = vsel %vm89, %v539, 0
    %551 = vmatprep.subr.mxu0 %v542
    %552 = vmatpush1.msra.mxu0 %v541
    %553 = vmatprep.subr.mxu0 %v544
    %554 = vmatpush1.msra.mxu0 %v543
    %555 = vmatprep.subr.mxu0 0.0
    %556 = vmatpush1.msra.mxu0 0.0
    %557 = vmatprep.subr.mxu0 0.0
    %558 = vmatpush1.msra.mxu0 0.0
    %559 = vmatprep.subr.mxu0 0.0
    %560 = vmatpush1.msra.mxu0 0.0
    %561 = vmatprep.subr.mxu0 0.0
    %562 = vmatpush1.msra.mxu0 0.0
    %563 = vmatprep.subr.mxu0 0.0
    %564 = vmatpush1.msra.mxu0 0.0
    %565 = vmatprep.subr.mxu0 0.0
    %566 = vmatpush1.msra.mxu0 0.0
    %567 = vmatprep.subr.mxu0 0.0
    %568 = vmatpush1.msra.mxu0 0.0
    %569 = vmatprep.subr.mxu0 0.0
    %570 = vmatpush1.msra.mxu0 0.0
    %571 = vmatprep.subr.mxu0 0.0
    %572 = vmatpush1.msra.mxu0 0.0
    %573 = vmatprep.subr.mxu0 0.0
    %574 = vmatpush1.msra.mxu0 0.0
    %575 = vmatprep.subr.mxu0 0.0
    %576 = vmatpush1.msra.mxu0 0.0
    %577 = vmatprep.subr.mxu0 0.0
    %578 = vmatpush1.msra.mxu0 0.0
    %579 = vmatprep.subr.mxu0 0.0
    %580 = vmatpush1.msra.mxu0 0.0
    %581 = vmatprep.subr.mxu0 0.0
    %582 = vmatpush1.msra.mxu0 0.0
    %583 = vmatprep.subr.mxu0 0.0
    %584 = vmatpush1.msra.mxu0 0.0
    %585 = vmatprep.subr.mxu0 0.0
    %586 = vmatpush1.msra.mxu0 0.0
    %587 = vmatprep.subr.mxu0 0.0
    %588 = vmatpush1.msra.mxu0 0.0
    %589 = vmatprep.subr.mxu0 0.0
    %590 = vmatpush1.msra.mxu0 0.0
    %591 = vmatprep.subr.mxu0 0.0
    %592 = vmatpush1.msra.mxu0 0.0
    %593 = vmatprep.subr.mxu0 0.0
    %594 = vmatpush1.msra.mxu0 0.0
    %595 = vmatprep.subr.mxu0 0.0
    %596 = vmatpush1.msra.mxu0 0.0
    %597 = vmatprep.subr.mxu0 0.0
    %598 = vmatpush1.msra.mxu0 0.0
    %599 = vmatprep.subr.mxu0 0.0
    %600 = vmatpush1.msra.mxu0 0.0
    %601 = vmatprep.subr.mxu0 0.0
    %602 = vmatpush1.msra.mxu0 0.0
    %603 = vmatprep.subr.mxu0 0.0
    %604 = vmatpush1.msra.mxu0 0.0
    %605 = vmatprep.subr.mxu0 0.0
    %606 = vmatpush1.msra.mxu0 0.0
    %607 = vmatprep.subr.mxu0 0.0
    %608 = vmatpush1.msra.mxu0 0.0
    %609 = vmatprep.subr.mxu0 0.0
    %610 = vmatpush1.msra.mxu0 0.0
    %611 = vmatprep.subr.mxu0 0.0
    %612 = vmatpush1.msra.mxu0 0.0
    %613 = vmatprep.subr.mxu0 0.0
    %614 = vmatpush1.msra.mxu0 0.0
    %615 = vmatprep.mubr.f32.mxu0 0.0
    %616 = vmatmul.mubr.f32.gmra.mrb[0].mxu0 %v546
    %v617 = vpop.f32.mrb[0].mxu0
    %v618 = vadd.f32 0.0, %v617
    %v619 = vpop.f32.mrb[0].mxu0
    %v620 = vadd.f32 0.0, %v619
    %621 = vmatprep.mubr.f32.mxu0 0.0
    %622 = vmatmul.mubr.f32.gmra.mrb[0].mxu0 %v549
    %v623 = vpop.f32.mrb[0].mxu0
    %v624 = vadd.f32 0.0, %v623
    %v625 = vpop.f32.mrb[0].mxu0
    %v626 = vadd.f32 0.0, %v625
    %627 = vdwg.mxu0
    %v628 = vadd.f32 %v534, %v618
    %v629 = vadd.f32 %v535, %v620
    %v630 = vadd.f32 %v536, %v624
    %v631 = vadd.f32 %v537, %v626
    %v632 = vld [vmem:[#allocation4 + $0x2] sm:$0xff]
    %v633 = vld [vmem:[#allocation4 + $0xa] sm:$0x1f]
    %s634 = scalar_lea.vmem [#allocation6], 192
    %v635 = vld [vmem:[%s634] sm:$0xff]
    %v636 = vld [vmem:[%s634 + $0x8] sm:$0xff]
    %v637 = vld [vmem:[%s634 + $0x10] sm:$0xff]
    %v638 = vld [vmem:[%s634 + $0x18] sm:$0xff]
    %v640 = vsel %vm89, %v632, 0
    %v643 = vsel %vm89, %v633, 0
    %645 = vmatprep.subr.mxu0 %v636
    %646 = vmatpush1.msra.mxu0 %v635
    %647 = vmatprep.subr.mxu0 %v638
    %648 = vmatpush1.msra.mxu0 %v637
    %649 = vmatprep.subr.mxu0 0.0
    %650 = vmatpush1.msra.mxu0 0.0
    %651 = vmatprep.subr.mxu0 0.0
    %652 = vmatpush1.msra.mxu0 0.0
    %653 = vmatprep.subr.mxu0 0.0
    %654 = vmatpush1.msra.mxu0 0.0
    %655 = vmatprep.subr.mxu0 0.0
    %656 = vmatpush1.msra.mxu0 0.0
    %657 = vmatprep.subr.mxu0 0.0
    %658 = vmatpush1.msra.mxu0 0.0
    %659 = vmatprep.subr.mxu0 0.0
    %660 = vmatpush1.msra.mxu0 0.0
    %661 = vmatprep.subr.mxu0 0.0
    %662 = vmatpush1.msra.mxu0 0.0
    %663 = vmatprep.subr.mxu0 0.0
    %664 = vmatpush1.msra.mxu0 0.0
    %665 = vmatprep.subr.mxu0 0.0
    %666 = vmatpush1.msra.mxu0 0.0
    %667 = vmatprep.subr.mxu0 0.0
    %668 = vmatpush1.msra.mxu0 0.0
    %669 = vmatprep.subr.mxu0 0.0
    %670 = vmatpush1.msra.mxu0 0.0
    %671 = vmatprep.subr.mxu0 0.0
    %672 = vmatpush1.msra.mxu0 0.0
    %673 = vmatprep.subr.mxu0 0.0
    %674 = vmatpush1.msra.mxu0 0.0
    %675 = vmatprep.subr.mxu0 0.0
    %676 = vmatpush1.msra.mxu0 0.0
    %677 = vmatprep.subr.mxu0 0.0
    %678 = vmatpush1.msra.mxu0 0.0
    %679 = vmatprep.subr.mxu0 0.0
    %680 = vmatpush1.msra.mxu0 0.0
    %681 = vmatprep.subr.mxu0 0.0
    %682 = vmatpush1.msra.mxu0 0.0
    %683 = vmatprep.subr.mxu0 0.0
    %684 = vmatpush1.msra.mxu0 0.0
    %685 = vmatprep.subr.mxu0 0.0
    %686 = vmatpush1.msra.mxu0 0.0
    %687 = vmatprep.subr.mxu0 0.0
    %688 = vmatpush1.msra.mxu0 0.0
    %689 = vmatprep.subr.mxu0 0.0
    %690 = vmatpush1.msra.mxu0 0.0
    %691 = vmatprep.subr.mxu0 0.0
    %692 = vmatpush1.msra.mxu0 0.0
    %693 = vmatprep.subr.mxu0 0.0
    %694 = vmatpush1.msra.mxu0 0.0
    %695 = vmatprep.subr.mxu0 0.0
    %696 = vmatpush1.msra.mxu0 0.0
    %697 = vmatprep.subr.mxu0 0.0
    %698 = vmatpush1.msra.mxu0 0.0
    %699 = vmatprep.subr.mxu0 0.0
    %700 = vmatpush1.msra.mxu0 0.0
    %701 = vmatprep.subr.mxu0 0.0
    %702 = vmatpush1.msra.mxu0 0.0
    %703 = vmatprep.subr.mxu0 0.0
    %704 = vmatpush1.msra.mxu0 0.0
    %705 = vmatprep.subr.mxu0 0.0
    %706 = vmatpush1.msra.mxu0 0.0
    %707 = vmatprep.subr.mxu0 0.0
    %708 = vmatpush1.msra.mxu0 0.0
    %709 = vmatprep.mubr.f32.mxu0 0.0
    %710 = vmatmul.mubr.f32.gmra.mrb[0].mxu0 %v640
    %v711 = vpop.f32.mrb[0].mxu0
    %v712 = vadd.f32 0.0, %v711
    %v713 = vpop.f32.mrb[0].mxu0
    %v714 = vadd.f32 0.0, %v713
    %715 = vmatprep.mubr.f32.mxu0 0.0
    %716 = vmatmul.mubr.f32.gmra.mrb[0].mxu0 %v643
    %v717 = vpop.f32.mrb[0].mxu0
    %v718 = vadd.f32 0.0, %v717
    %v719 = vpop.f32.mrb[0].mxu0
    %v720 = vadd.f32 0.0, %v719
    %721 = vdwg.mxu0
    %v722 = vadd.f32 %v628, %v712
    %v723 = vadd.f32 %v629, %v714
    %v724 = vadd.f32 %v630, %v718
    %v725 = vadd.f32 %v631, %v720
    %v726 = vld [vmem:[#allocation4 + $0x12] sm:$0xff]
    %v727 = vld [vmem:[#allocation4 + $0x1a] sm:$0x1f]
    %s728 = scalar_lea.vmem [#allocation6], 224
    %v729 = vld [vmem:[%s728] sm:$0xff]
    %v730 = vld [vmem:[%s728 + $0x8] sm:$0xff]
    %v731 = vld [vmem:[%s728 + $0x10] sm:$0xff]
    %v732 = vld [vmem:[%s728 + $0x18] sm:$0xff]
    %v734 = vsel %vm89, %v726, 0
    %v737 = vsel %vm89, %v727, 0
    %739 = vmatprep.subr.mxu0 %v730
    %740 = vmatpush1.msra.mxu0 %v729
    %741 = vmatprep.subr.mxu0 %v732
    %742 = vmatpush1.msra.mxu0 %v731
    %743 = vmatprep.subr.mxu0 0.0
    %744 = vmatpush1.msra.mxu0 0.0
    %745 = vmatprep.subr.mxu0 0.0
    %746 = vmatpush1.msra.mxu0 0.0
    %747 = vmatprep.subr.mxu0 0.0
    %748 = vmatpush1.msra.mxu0 0.0
    %749 = vmatprep.subr.mxu0 0.0
    %750 = vmatpush1.msra.mxu0 0.0
    %751 = vmatprep.subr.mxu0 0.0
    %752 = vmatpush1.msra.mxu0 0.0
    %753 = vmatprep.subr.mxu0 0.0
    %754 = vmatpush1.msra.mxu0 0.0
    %755 = vmatprep.subr.mxu0 0.0
    %756 = vmatpush1.msra.mxu0 0.0
    %757 = vmatprep.subr.mxu0 0.0
    %758 = vmatpush1.msra.mxu0 0.0
    %759 = vmatprep.subr.mxu0 0.0
    %760 = vmatpush1.msra.mxu0 0.0
    %761 = vmatprep.subr.mxu0 0.0
    %762 = vmatpush1.msra.mxu0 0.0
    %763 = vmatprep.subr.mxu0 0.0
    %764 = vmatpush1.msra.mxu0 0.0
    %765 = vmatprep.subr.mxu0 0.0
    %766 = vmatpush1.msra.mxu0 0.0
    %767 = vmatprep.subr.mxu0 0.0
    %768 = vmatpush1.msra.mxu0 0.0
    %769 = vmatprep.subr.mxu0 0.0
    %770 = vmatpush1.msra.mxu0 0.0
    %771 = vmatprep.subr.mxu0 0.0
    %772 = vmatpush1.msra.mxu0 0.0
    %773 = vmatprep.subr.mxu0 0.0
    %774 = vmatpush1.msra.mxu0 0.0
    %775 = vmatprep.subr.mxu0 0.0
    %776 = vmatpush1.msra.mxu0 0.0
    %777 = vmatprep.subr.mxu0 0.0
    %778 = vmatpush1.msra.mxu0 0.0
    %779 = vmatprep.subr.mxu0 0.0
    %780 = vmatpush1.msra.mxu0 0.0
    %781 = vmatprep.subr.mxu0 0.0
    %782 = vmatpush1.msra.mxu0 0.0
    %783 = vmatprep.subr.mxu0 0.0
    %784 = vmatpush1.msra.mxu0 0.0
    %785 = vmatprep.subr.mxu0 0.0
    %786 = vmatpush1.msra.mxu0 0.0
    %787 = vmatprep.subr.mxu0 0.0
    %788 = vmatpush1.msra.mxu0 0.0
    %789 = vmatprep.subr.mxu0 0.0
    %790 = vmatpush1.msra.mxu0 0.0
    %791 = vmatprep.subr.mxu0 0.0
    %792 = vmatpush1.msra.mxu0 0.0
    %793 = vmatprep.subr.mxu0 0.0
    %794 = vmatpush1.msra.mxu0 0.0
    %795 = vmatprep.subr.mxu0 0.0
    %796 = vmatpush1.msra.mxu0 0.0
    %797 = vmatprep.subr.mxu0 0.0
    %798 = vmatpush1.msra.mxu0 0.0
    %799 = vmatprep.subr.mxu0 0.0
    %800 = vmatpush1.msra.mxu0 0.0
    %801 = vmatprep.subr.mxu0 0.0
    %802 = vmatpush1.msra.mxu0 0.0
    %803 = vmatprep.mubr.f32.mxu0 0.0
    %804 = vmatmul.mubr.f32.gmra.mrb[0].mxu0 %v734
    %v805 = vpop.f32.mrb[0].mxu0
    %v806 = vadd.f32 0.0, %v805
    %v807 = vpop.f32.mrb[0].mxu0
    %v808 = vadd.f32 0.0, %v807
    %809 = vmatprep.mubr.f32.mxu0 0.0
    %810 = vmatmul.mubr.f32.gmra.mrb[0].mxu0 %v737
    %v811 = vpop.f32.mrb[0].mxu0
    %v812 = vadd.f32 0.0, %v811
    %v813 = vpop.f32.mrb[0].mxu0
    %v814 = vadd.f32 0.0, %v813
    %815 = vdwg.mxu0
    %v816 = vadd.f32 %v722, %v806
    %v817 = vadd.f32 %v723, %v808
    %v818 = vadd.f32 %v724, %v812
    %v819 = vadd.f32 %v725, %v814
    %v820 = vld [vmem:[#allocation4 + $0x22] sm:$0xff]
    %v821 = vld [vmem:[#allocation4 + $0x2a] sm:$0x1f]
    %s822 = scalar_lea.vmem [#allocation6], 256
    %v823 = vld [vmem:[%s822] sm:$0xff]
    %v824 = vld [vmem:[%s822 + $0x8] sm:$0xff]
    %v825 = vld [vmem:[%s822 + $0x10] sm:$0xff]
    %v826 = vld [vmem:[%s822 + $0x18] sm:$0xff]
    %v828 = vsel %vm89, %v820, 0
    %v831 = vsel %vm89, %v821, 0
    %833 = vmatprep.subr.mxu0 %v824
    %834 = vmatpush1.msra.mxu0 %v823
    %835 = vmatprep.subr.mxu0 %v826
    %836 = vmatpush1.msra.mxu0 %v825
    %837 = vmatprep.subr.mxu0 0.0
    %838 = vmatpush1.msra.mxu0 0.0
    %839 = vmatprep.subr.mxu0 0.0
    %840 = vmatpush1.msra.mxu0 0.0
    %841 = vmatprep.subr.mxu0 0.0
    %842 = vmatpush1.msra.mxu0 0.0
    %843 = vmatprep.subr.mxu0 0.0
    %844 = vmatpush1.msra.mxu0 0.0
    %845 = vmatprep.subr.mxu0 0.0
    %846 = vmatpush1.msra.mxu0 0.0
    %847 = vmatprep.subr.mxu0 0.0
    %848 = vmatpush1.msra.mxu0 0.0
    %849 = vmatprep.subr.mxu0 0.0
    %850 = vmatpush1.msra.mxu0 0.0
    %851 = vmatprep.subr.mxu0 0.0
    %852 = vmatpush1.msra.mxu0 0.0
    %853 = vmatprep.subr.mxu0 0.0
    %854 = vmatpush1.msra.mxu0 0.0
    %855 = vmatprep.subr.mxu0 0.0
    %856 = vmatpush1.msra.mxu0 0.0
    %857 = vmatprep.subr.mxu0 0.0
    %858 = vmatpush1.msra.mxu0 0.0
    %859 = vmatprep.subr.mxu0 0.0
    %860 = vmatpush1.msra.mxu0 0.0
    %861 = vmatprep.subr.mxu0 0.0
    %862 = vmatpush1.msra.mxu0 0.0
    %863 = vmatprep.subr.mxu0 0.0
    %864 = vmatpush1.msra.mxu0 0.0
    %865 = vmatprep.subr.mxu0 0.0
    %866 = vmatpush1.msra.mxu0 0.0
    %867 = vmatprep.subr.mxu0 0.0
    %868 = vmatpush1.msra.mxu0 0.0
    %869 = vmatprep.subr.mxu0 0.0
    %870 = vmatpush1.msra.mxu0 0.0
    %871 = vmatprep.subr.mxu0 0.0
    %872 = vmatpush1.msra.mxu0 0.0
    %873 = vmatprep.subr.mxu0 0.0
    %874 = vmatpush1.msra.mxu0 0.0
    %875 = vmatprep.subr.mxu0 0.0
    %876 = vmatpush1.msra.mxu0 0.0
    %877 = vmatprep.subr.mxu0 0.0
    %878 = vmatpush1.msra.mxu0 0.0
    %879 = vmatprep.subr.mxu0 0.0
    %880 = vmatpush1.msra.mxu0 0.0
    %881 = vmatprep.subr.mxu0 0.0
    %882 = vmatpush1.msra.mxu0 0.0
    %883 = vmatprep.subr.mxu0 0.0
    %884 = vmatpush1.msra.mxu0 0.0
    %885 = vmatprep.subr.mxu0 0.0
    %886 = vmatpush1.msra.mxu0 0.0
    %887 = vmatprep.subr.mxu0 0.0
    %888 = vmatpush1.msra.mxu0 0.0
    %889 = vmatprep.subr.mxu0 0.0
    %890 = vmatpush1.msra.mxu0 0.0
    %891 = vmatprep.subr.mxu0 0.0
    %892 = vmatpush1.msra.mxu0 0.0
    %893 = vmatprep.subr.mxu0 0.0
    %894 = vmatpush1.msra.mxu0 0.0
    %895 = vmatprep.subr.mxu0 0.0
    %896 = vmatpush1.msra.mxu0 0.0
    %897 = vmatprep.mubr.f32.mxu0 0.0
    %898 = vmatmul.mubr.f32.gmra.mrb[0].mxu0 %v828
    %v899 = vpop.f32.mrb[0].mxu0
    %v900 = vadd.f32 0.0, %v899
    %v901 = vpop.f32.mrb[0].mxu0
    %v902 = vadd.f32 0.0, %v901
    %903 = vmatprep.mubr.f32.mxu0 0.0
    %904 = vmatmul.mubr.f32.gmra.mrb[0].mxu0 %v831
    %v905 = vpop.f32.mrb[0].mxu0
    %v906 = vadd.f32 0.0, %v905
    %v907 = vpop.f32.mrb[0].mxu0
    %v908 = vadd.f32 0.0, %v907
    %909 = vdwg.mxu0
    %v910 = vadd.f32 %v816, %v900
    %v911 = vadd.f32 %v817, %v902
    %v912 = vadd.f32 %v818, %v906
    %v913 = vadd.f32 %v819, %v908
    %v914 = vld [vmem:[#allocation4 + $0x3] sm:$0xff]
    %v915 = vld [vmem:[#allocation4 + $0xb] sm:$0x1f]
    %s916 = scalar_lea.vmem [#allocation6], 288
    %v917 = vld [vmem:[%s916] sm:$0xff]
    %v918 = vld [vmem:[%s916 + $0x8] sm:$0xff]
    %v919 = vld [vmem:[%s916 + $0x10] sm:$0xff]
    %v920 = vld [vmem:[%s916 + $0x18] sm:$0xff]
    %v922 = vsel %vm89, %v914, 0
    %v925 = vsel %vm89, %v915, 0
    %927 = vmatprep.subr.mxu0 %v918
    %928 = vmatpush1.msra.mxu0 %v917
    %929 = vmatprep.subr.mxu0 %v920
    %930 = vmatpush1.msra.mxu0 %v919
    %931 = vmatprep.subr.mxu0 0.0
    %932 = vmatpush1.msra.mxu0 0.0
    %933 = vmatprep.subr.mxu0 0.0
    %934 = vmatpush1.msra.mxu0 0.0
    %935 = vmatprep.subr.mxu0 0.0
    %936 = vmatpush1.msra.mxu0 0.0
    %937 = vmatprep.subr.mxu0 0.0
    %938 = vmatpush1.msra.mxu0 0.0
    %939 = vmatprep.subr.mxu0 0.0
    %940 = vmatpush1.msra.mxu0 0.0
    %941 = vmatprep.subr.mxu0 0.0
    %942 = vmatpush1.msra.mxu0 0.0
    %943 = vmatprep.subr.mxu0 0.0
    %944 = vmatpush1.msra.mxu0 0.0
    %945 = vmatprep.subr.mxu0 0.0
    %946 = vmatpush1.msra.mxu0 0.0
    %947 = vmatprep.subr.mxu0 0.0
    %948 = vmatpush1.msra.mxu0 0.0
    %949 = vmatprep.subr.mxu0 0.0
    %950 = vmatpush1.msra.mxu0 0.0
    %951 = vmatprep.subr.mxu0 0.0
    %952 = vmatpush1.msra.mxu0 0.0
    %953 = vmatprep.subr.mxu0 0.0
    %954 = vmatpush1.msra.mxu0 0.0
    %955 = vmatprep.subr.mxu0 0.0
    %956 = vmatpush1.msra.mxu0 0.0
    %957 = vmatprep.subr.mxu0 0.0
    %958 = vmatpush1.msra.mxu0 0.0
    %959 = vmatprep.subr.mxu0 0.0
    %960 = vmatpush1.msra.mxu0 0.0
    %961 = vmatprep.subr.mxu0 0.0
    %962 = vmatpush1.msra.mxu0 0.0
    %963 = vmatprep.subr.mxu0 0.0
    %964 = vmatpush1.msra.mxu0 0.0
    %965 = vmatprep.subr.mxu0 0.0
    %966 = vmatpush1.msra.mxu0 0.0
    %967 = vmatprep.subr.mxu0 0.0
    %968 = vmatpush1.msra.mxu0 0.0
    %969 = vmatprep.subr.mxu0 0.0
    %970 = vmatpush1.msra.mxu0 0.0
    %971 = vmatprep.subr.mxu0 0.0
    %972 = vmatpush1.msra.mxu0 0.0
    %973 = vmatprep.subr.mxu0 0.0
    %974 = vmatpush1.msra.mxu0 0.0
    %975 = vmatprep.subr.mxu0 0.0
    %976 = vmatpush1.msra.mxu0 0.0
    %977 = vmatprep.subr.mxu0 0.0
    %978 = vmatpush1.msra.mxu0 0.0
    %979 = vmatprep.subr.mxu0 0.0
    %980 = vmatpush1.msra.mxu0 0.0
    %981 = vmatprep.subr.mxu0 0.0
    %982 = vmatpush1.msra.mxu0 0.0
    %983 = vmatprep.subr.mxu0 0.0
    %984 = vmatpush1.msra.mxu0 0.0
    %985 = vmatprep.subr.mxu0 0.0
    %986 = vmatpush1.msra.mxu0 0.0
    %987 = vmatprep.subr.mxu0 0.0
    %988 = vmatpush1.msra.mxu0 0.0
    %989 = vmatprep.subr.mxu0 0.0
    %990 = vmatpush1.msra.mxu0 0.0
    %991 = vmatprep.mubr.f32.mxu0 0.0
    %992 = vmatmul.mubr.f32.gmra.mrb[0].mxu0 %v922
    %v993 = vpop.f32.mrb[0].mxu0
    %v994 = vadd.f32 0.0, %v993
    %v995 = vpop.f32.mrb[0].mxu0
    %v996 = vadd.f32 0.0, %v995
    %997 = vmatprep.mubr.f32.mxu0 0.0
    %998 = vmatmul.mubr.f32.gmra.mrb[0].mxu0 %v925
    %v999 = vpop.f32.mrb[0].mxu0
    %v1000 = vadd.f32 0.0, %v999
    %v1001 = vpop.f32.mrb[0].mxu0
    %v1002 = vadd.f32 0.0, %v1001
    %1003 = vdwg.mxu0
    %v1004 = vadd.f32 %v910, %v994
    %v1005 = vadd.f32 %v911, %v996
    %v1006 = vadd.f32 %v912, %v1000
    %v1007 = vadd.f32 %v913, %v1002
    %v1008 = vld [vmem:[#allocation4 + $0x13] sm:$0xff]
    %v1009 = vld [vmem:[#allocation4 + $0x1b] sm:$0x1f]
    %s1010 = scalar_lea.vmem [#allocation6], 320
    %v1011 = vld [vmem:[%s1010] sm:$0xff]
    %v1012 = vld [vmem:[%s1010 + $0x8] sm:$0xff]
    %v1013 = vld [vmem:[%s1010 + $0x10] sm:$0xff]
    %v1014 = vld [vmem:[%s1010 + $0x18] sm:$0xff]
    %v1016 = vsel %vm89, %v1008, 0
    %v1019 = vsel %vm89, %v1009, 0
    %1021 = vmatprep.subr.mxu0 %v1012
    %1022 = vmatpush1.msra.mxu0 %v1011
    %1023 = vmatprep.subr.mxu0 %v1014
    %1024 = vmatpush1.msra.mxu0 %v1013
    %1025 = vmatprep.subr.mxu0 0.0
    %1026 = vmatpush1.msra.mxu0 0.0
    %1027 = vmatprep.subr.mxu0 0.0
    %1028 = vmatpush1.msra.mxu0 0.0
    %1029 = vmatprep.subr.mxu0 0.0
    %1030 = vmatpush1.msra.mxu0 0.0
    %1031 = vmatprep.subr.mxu0 0.0
    %1032 = vmatpush1.msra.mxu0 0.0
    %1033 = vmatprep.subr.mxu0 0.0
    %1034 = vmatpush1.msra.mxu0 0.0
    %1035 = vmatprep.subr.mxu0 0.0
    %1036 = vmatpush1.msra.mxu0 0.0
    %1037 = vmatprep.subr.mxu0 0.0
    %1038 = vmatpush1.msra.mxu0 0.0
    %1039 = vmatprep.subr.mxu0 0.0
    %1040 = vmatpush1.msra.mxu0 0.0
    %1041 = vmatprep.subr.mxu0 0.0
    %1042 = vmatpush1.msra.mxu0 0.0
    %1043 = vmatprep.subr.mxu0 0.0
    %1044 = vmatpush1.msra.mxu0 0.0
    %1045 = vmatprep.subr.mxu0 0.0
    %1046 = vmatpush1.msra.mxu0 0.0
    %1047 = vmatprep.subr.mxu0 0.0
    %1048 = vmatpush1.msra.mxu0 0.0
    %1049 = vmatprep.subr.mxu0 0.0
    %1050 = vmatpush1.msra.mxu0 0.0
    %1051 = vmatprep.subr.mxu0 0.0
    %1052 = vmatpush1.msra.mxu0 0.0
    %1053 = vmatprep.subr.mxu0 0.0
    %1054 = vmatpush1.msra.mxu0 0.0
    %1055 = vmatprep.subr.mxu0 0.0
    %1056 = vmatpush1.msra.mxu0 0.0
    %1057 = vmatprep.subr.mxu0 0.0
    %1058 = vmatpush1.msra.mxu0 0.0
    %1059 = vmatprep.subr.mxu0 0.0
    %1060 = vmatpush1.msra.mxu0 0.0
    %1061 = vmatprep.subr.mxu0 0.0
    %1062 = vmatpush1.msra.mxu0 0.0
    %1063 = vmatprep.subr.mxu0 0.0
    %1064 = vmatpush1.msra.mxu0 0.0
    %1065 = vmatprep.subr.mxu0 0.0
    %1066 = vmatpush1.msra.mxu0 0.0
    %1067 = vmatprep.subr.mxu0 0.0
    %1068 = vmatpush1.msra.mxu0 0.0
    %1069 = vmatprep.subr.mxu0 0.0
    %1070 = vmatpush1.msra.mxu0 0.0
    %1071 = vmatprep.subr.mxu0 0.0
    %1072 = vmatpush1.msra.mxu0 0.0
    %1073 = vmatprep.subr.mxu0 0.0
    %1074 = vmatpush1.msra.mxu0 0.0
    %1075 = vmatprep.subr.mxu0 0.0
    %1076 = vmatpush1.msra.mxu0 0.0
    %1077 = vmatprep.subr.mxu0 0.0
    %1078 = vmatpush1.msra.mxu0 0.0
    %1079 = vmatprep.subr.mxu0 0.0
    %1080 = vmatpush1.msra.mxu0 0.0
    %1081 = vmatprep.subr.mxu0 0.0
    %1082 = vmatpush1.msra.mxu0 0.0
    %1083 = vmatprep.subr.mxu0 0.0
    %1084 = vmatpush1.msra.mxu0 0.0
    %1085 = vmatprep.mubr.f32.mxu0 0.0
    %1086 = vmatmul.mubr.f32.gmra.mrb[0].mxu0 %v1016
    %v1087 = vpop.f32.mrb[0].mxu0
    %v1088 = vadd.f32 0.0, %v1087
    %v1089 = vpop.f32.mrb[0].mxu0
    %v1090 = vadd.f32 0.0, %v1089
    %1091 = vmatprep.mubr.f32.mxu0 0.0
    %1092 = vmatmul.mubr.f32.gmra.mrb[0].mxu0 %v1019
    %v1093 = vpop.f32.mrb[0].mxu0
    %v1094 = vadd.f32 0.0, %v1093
    %v1095 = vpop.f32.mrb[0].mxu0
    %v1096 = vadd.f32 0.0, %v1095
    %1097 = vdwg.mxu0
    %v1098 = vadd.f32 %v1004, %v1088
    %v1099 = vadd.f32 %v1005, %v1090
    %v1100 = vadd.f32 %v1006, %v1094
    %v1101 = vadd.f32 %v1007, %v1096
    %v1102 = vld [vmem:[#allocation4 + $0x23] sm:$0xff]
    %v1103 = vld [vmem:[#allocation4 + $0x2b] sm:$0x1f]
    %s1104 = scalar_lea.vmem [#allocation6], 352
    %v1105 = vld [vmem:[%s1104] sm:$0xff]
    %v1106 = vld [vmem:[%s1104 + $0x8] sm:$0xff]
    %v1107 = vld [vmem:[%s1104 + $0x10] sm:$0xff]
    %v1108 = vld [vmem:[%s1104 + $0x18] sm:$0xff]
    %v1110 = vsel %vm89, %v1102, 0
    %v1113 = vsel %vm89, %v1103, 0
    %1115 = vmatprep.subr.mxu0 %v1106
    %1116 = vmatpush1.msra.mxu0 %v1105
    %1117 = vmatprep.subr.mxu0 %v1108
    %1118 = vmatpush1.msra.mxu0 %v1107
    %1119 = vmatprep.subr.mxu0 0.0
    %1120 = vmatpush1.msra.mxu0 0.0
    %1121 = vmatprep.subr.mxu0 0.0
    %1122 = vmatpush1.msra.mxu0 0.0
    %1123 = vmatprep.subr.mxu0 0.0
    %1124 = vmatpush1.msra.mxu0 0.0
    %1125 = vmatprep.subr.mxu0 0.0
    %1126 = vmatpush1.msra.mxu0 0.0
    %1127 = vmatprep.subr.mxu0 0.0
    %1128 = vmatpush1.msra.mxu0 0.0
    %1129 = vmatprep.subr.mxu0 0.0
    %1130 = vmatpush1.msra.mxu0 0.0
    %1131 = vmatprep.subr.mxu0 0.0
    %1132 = vmatpush1.msra.mxu0 0.0
    %1133 = vmatprep.subr.mxu0 0.0
    %1134 = vmatpush1.msra.mxu0 0.0
    %1135 = vmatprep.subr.mxu0 0.0
    %1136 = vmatpush1.msra.mxu0 0.0
    %1137 = vmatprep.subr.mxu0 0.0
    %1138 = vmatpush1.msra.mxu0 0.0
    %1139 = vmatprep.subr.mxu0 0.0
    %1140 = vmatpush1.msra.mxu0 0.0
    %1141 = vmatprep.subr.mxu0 0.0
    %1142 = vmatpush1.msra.mxu0 0.0
    %1143 = vmatprep.subr.mxu0 0.0
    %1144 = vmatpush1.msra.mxu0 0.0
    %1145 = vmatprep.subr.mxu0 0.0
    %1146 = vmatpush1.msra.mxu0 0.0
    %1147 = vmatprep.subr.mxu0 0.0
    %1148 = vmatpush1.msra.mxu0 0.0
    %1149 = vmatprep.subr.mxu0 0.0
    %1150 = vmatpush1.msra.mxu0 0.0
    %1151 = vmatprep.subr.mxu0 0.0
    %1152 = vmatpush1.msra.mxu0 0.0
    %1153 = vmatprep.subr.mxu0 0.0
    %1154 = vmatpush1.msra.mxu0 0.0
    %1155 = vmatprep.subr.mxu0 0.0
    %1156 = vmatpush1.msra.mxu0 0.0
    %1157 = vmatprep.subr.mxu0 0.0
    %1158 = vmatpush1.msra.mxu0 0.0
    %1159 = vmatprep.subr.mxu0 0.0
    %1160 = vmatpush1.msra.mxu0 0.0
    %1161 = vmatprep.subr.mxu0 0.0
    %1162 = vmatpush1.msra.mxu0 0.0
    %1163 = vmatprep.subr.mxu0 0.0
    %1164 = vmatpush1.msra.mxu0 0.0
    %1165 = vmatprep.subr.mxu0 0.0
    %1166 = vmatpush1.msra.mxu0 0.0
    %1167 = vmatprep.subr.mxu0 0.0
    %1168 = vmatpush1.msra.mxu0 0.0
    %1169 = vmatprep.subr.mxu0 0.0
    %1170 = vmatpush1.msra.mxu0 0.0
    %1171 = vmatprep.subr.mxu0 0.0
    %1172 = vmatpush1.msra.mxu0 0.0
    %1173 = vmatprep.subr.mxu0 0.0
    %1174 = vmatpush1.msra.mxu0 0.0
    %1175 = vmatprep.subr.mxu0 0.0
    %1176 = vmatpush1.msra.mxu0 0.0
    %1177 = vmatprep.subr.mxu0 0.0
    %1178 = vmatpush1.msra.mxu0 0.0
    %1179 = vmatprep.mubr.f32.mxu0 0.0
    %1180 = vmatmul.mubr.f32.gmra.mrb[0].mxu0 %v1110
    %v1181 = vpop.f32.mrb[0].mxu0
    %v1182 = vadd.f32 0.0, %v1181
    %v1183 = vpop.f32.mrb[0].mxu0
    %v1184 = vadd.f32 0.0, %v1183
    %1185 = vmatprep.mubr.f32.mxu0 0.0
    %1186 = vmatmul.mubr.f32.gmra.mrb[0].mxu0 %v1113
    %v1187 = vpop.f32.mrb[0].mxu0
    %v1188 = vadd.f32 0.0, %v1187
    %v1189 = vpop.f32.mrb[0].mxu0
    %v1190 = vadd.f32 0.0, %v1189
    %1191 = vdwg.mxu0
    %v1192 = vadd.f32 %v1098, %v1182
    %v1193 = vadd.f32 %v1099, %v1184
    %v1194 = vadd.f32 %v1100, %v1188
    %v1195 = vadd.f32 %v1101, %v1190
    %v1196 = vmax.f32 %v1192, %v1193
    %v1197 = vmax.f32 %v1194, %v1195
    %1198 = vst [vmem:[#allocation2] sm:$0xff] %v1196
    %1199 = vst [vmem:[#allocation2 + $0x8] sm:$0x1f] %v1197
    %v1200 = vld [vmem:[#allocation2] ss:$2 sm:$0x3f]
    %s1201 = scalar_lea.vmem [#allocation2], 1
    %v1202 = vld [vmem:[%s1201] ss:$2 sm:$0x3f]
    %v1203 = vmax.f32 %v1200, %v1202
    %v1204 = vlaneseq
    %v1205 = vshrl.u32 %v1204, 7
    %v1206 = vsub.s32 0, %v1205
    %v1207 = vrot.slane %v70, %v1206
    %v1208 = vadd.f32 %v1203, %v1207
    %v1209 = vmax.f32 %v1208, 0.0
    %v1210 = vld [vmem:[#allocation8] sm:$0xff]
    %v1211 = vld [vmem:[#allocation8 + $0x8] sm:$0xff]
    %v1212 = vld [vmem:[#allocation8 + $0x10] sm:$0xff]
    %v1213 = vld [vmem:[#allocation8 + $0x18] sm:$0xff]
    %v1214 = vld [vmem:[#allocation8 + $0x20] sm:$0xff]
    %v1215 = vld [vmem:[#allocation8 + $0x28] sm:$0xff]
    %v1216 = vld [vmem:[#allocation8 + $0x30] sm:$0xff]
    %v1217 = vld [vmem:[#allocation8 + $0x38] sm:$0xff]
    %v1218 = vld [vmem:[#allocation8 + $0x40] sm:$0xff]
    %v1219 = vld [vmem:[#allocation8 + $0x48] sm:$0xff]
    %v1220 = vld [vmem:[#allocation8 + $0x50] sm:$0xff]
    %v1221 = vld [vmem:[#allocation8 + $0x58] sm:$0xff]
    %v1222 = vld [vmem:[#allocation8 + $0x60] sm:$0xff]
    %v1223 = vld [vmem:[#allocation8 + $0x68] sm:$0xff]
    %v1224 = vld [vmem:[#allocation8 + $0x70] sm:$0xff]
    %v1225 = vld [vmem:[#allocation8 + $0x78] sm:$0xff]
    %s1226 = scalar_lea.vmem [#allocation8], 128
    %v1227 = vld [vmem:[%s1226] sm:$0xff]
    %v1228 = vld [vmem:[%s1226 + $0x8] sm:$0xff]
    %v1229 = vld [vmem:[%s1226 + $0x10] sm:$0xff]
    %v1230 = vld [vmem:[%s1226 + $0x18] sm:$0xff]
    %v1231 = vld [vmem:[%s1226 + $0x20] sm:$0xff]
    %v1232 = vld [vmem:[%s1226 + $0x28] sm:$0xff]
    %v1233 = vld [vmem:[%s1226 + $0x30] sm:$0xff]
    %v1234 = vld [vmem:[%s1226 + $0x38] sm:$0xff]
    %v1235 = vld [vmem:[%s1226 + $0x40] sm:$0xff]
    %v1236 = vld [vmem:[%s1226 + $0x48] sm:$0xff]
    %v1237 = vld [vmem:[%s1226 + $0x50] sm:$0xff]
    %v1238 = vld [vmem:[%s1226 + $0x58] sm:$0xff]
    %v1239 = vld [vmem:[%s1226 + $0x60] sm:$0xff]
    %v1240 = vld [vmem:[%s1226 + $0x68] sm:$0xff]
    %v1241 = vld [vmem:[%s1226 + $0x70] sm:$0xff]
    %v1242 = vld [vmem:[%s1226 + $0x78] sm:$0xff]
    %v1244 = vrot.slane %v1209, 1
    %1246 = vmatprep.subr.mxu0 0.0
    %1247 = vmatpush1.msra.mxu0 %v1227
    %1248 = vmatprep.subr.mxu0 0.0
    %1249 = vmatpush1.msra.mxu0 %v1228
    %1250 = vmatprep.subr.mxu0 0.0
    %1251 = vmatpush1.msra.mxu0 %v1229
    %1252 = vmatprep.subr.mxu0 0.0
    %1253 = vmatpush1.msra.mxu0 %v1230
    %1254 = vmatprep.subr.mxu0 0.0
    %1255 = vmatpush1.msra.mxu0 %v1231
    %1256 = vmatprep.subr.mxu0 0.0
    %1257 = vmatpush1.msra.mxu0 %v1232
    %1258 = vmatprep.subr.mxu0 0.0
    %1259 = vmatpush1.msra.mxu0 %v1233
    %1260 = vmatprep.subr.mxu0 0.0
    %1261 = vmatpush1.msra.mxu0 %v1234
    %1262 = vmatprep.subr.mxu0 0.0
    %1263 = vmatpush1.msra.mxu0 %v1235
    %1264 = vmatprep.subr.mxu0 0.0
    %1265 = vmatpush1.msra.mxu0 %v1236
    %1266 = vmatprep.subr.mxu0 0.0
    %1267 = vmatpush1.msra.mxu0 %v1237
    %1268 = vmatprep.subr.mxu0 0.0
    %1269 = vmatpush1.msra.mxu0 %v1238
    %1270 = vmatprep.subr.mxu0 0.0
    %1271 = vmatpush1.msra.mxu0 %v1239
    %1272 = vmatprep.subr.mxu0 0.0
    %1273 = vmatpush1.msra.mxu0 %v1240
    %1274 = vmatprep.subr.mxu0 0.0
    %1275 = vmatpush1.msra.mxu0 %v1241
    %1276 = vmatprep.subr.mxu0 0.0
    %1277 = vmatpush1.msra.mxu0 %v1242
    %1278 = vmatprep.subr.mxu0 0.0
    %1279 = vmatpush1.msra.mxu0 0.0
    %1280 = vmatprep.subr.mxu0 0.0
    %1281 = vmatpush1.msra.mxu0 0.0
    %1282 = vmatprep.subr.mxu0 0.0
    %1283 = vmatpush1.msra.mxu0 0.0
    %1284 = vmatprep.subr.mxu0 0.0
    %1285 = vmatpush1.msra.mxu0 0.0
    %1286 = vmatprep.subr.mxu0 0.0
    %1287 = vmatpush1.msra.mxu0 0.0
    %1288 = vmatprep.subr.mxu0 0.0
    %1289 = vmatpush1.msra.mxu0 0.0
    %1290 = vmatprep.subr.mxu0 0.0
    %1291 = vmatpush1.msra.mxu0 0.0
    %1292 = vmatprep.subr.mxu0 0.0
    %1293 = vmatpush1.msra.mxu0 0.0
    %1294 = vmatprep.subr.mxu0 0.0
    %1295 = vmatpush1.msra.mxu0 0.0
    %1296 = vmatprep.subr.mxu0 0.0
    %1297 = vmatpush1.msra.mxu0 0.0
    %1298 = vmatprep.subr.mxu0 0.0
    %1299 = vmatpush1.msra.mxu0 0.0
    %1300 = vmatprep.subr.mxu0 0.0
    %1301 = vmatpush1.msra.mxu0 0.0
    %1302 = vmatprep.subr.mxu0 0.0
    %1303 = vmatpush1.msra.mxu0 0.0
    %1304 = vmatprep.subr.mxu0 0.0
    %1305 = vmatpush1.msra.mxu0 0.0
    %1306 = vmatprep.subr.mxu0 0.0
    %1307 = vmatpush1.msra.mxu0 0.0
    %1308 = vmatprep.subr.mxu0 0.0
    %1309 = vmatpush1.msra.mxu0 0.0
    %1310 = vmatprep.mubr.f32.mxu0 0.0
    %1311 = vmatmul.mubr.f32.gmra.mrb[0].mxu0 %v1244
    %v1312 = vpop.f32.mrb[0].mxu0
    %v1313 = vadd.f32 0.0, %v1312
    %v1314 = vpop.f32.mrb[0].mxu0
    %1315 = vdwg.mxu0
    %1316 = vmatprep.subr.mxu0 0.0
    %1317 = vmatpush1.msra.mxu0 %v1210
    %1318 = vmatprep.subr.mxu0 0.0
    %1319 = vmatpush1.msra.mxu0 %v1211
    %1320 = vmatprep.subr.mxu0 0.0
    %1321 = vmatpush1.msra.mxu0 %v1212
    %1322 = vmatprep.subr.mxu0 0.0
    %1323 = vmatpush1.msra.mxu0 %v1213
    %1324 = vmatprep.subr.mxu0 0.0
    %1325 = vmatpush1.msra.mxu0 %v1214
    %1326 = vmatprep.subr.mxu0 0.0
    %1327 = vmatpush1.msra.mxu0 %v1215
    %1328 = vmatprep.subr.mxu0 0.0
    %1329 = vmatpush1.msra.mxu0 %v1216
    %1330 = vmatprep.subr.mxu0 0.0
    %1331 = vmatpush1.msra.mxu0 %v1217
    %1332 = vmatprep.subr.mxu0 0.0
    %1333 = vmatpush1.msra.mxu0 %v1218
    %1334 = vmatprep.subr.mxu0 0.0
    %1335 = vmatpush1.msra.mxu0 %v1219
    %1336 = vmatprep.subr.mxu0 0.0
    %1337 = vmatpush1.msra.mxu0 %v1220
    %1338 = vmatprep.subr.mxu0 0.0
    %1339 = vmatpush1.msra.mxu0 %v1221
    %1340 = vmatprep.subr.mxu0 0.0
    %1341 = vmatpush1.msra.mxu0 %v1222
    %1342 = vmatprep.subr.mxu0 0.0
    %1343 = vmatpush1.msra.mxu0 %v1223
    %1344 = vmatprep.subr.mxu0 0.0
    %1345 = vmatpush1.msra.mxu0 %v1224
    %1346 = vmatprep.subr.mxu0 0.0
    %1347 = vmatpush1.msra.mxu0 %v1225
    %1348 = vmatprep.subr.mxu0 0.0
    %1349 = vmatpush1.msra.mxu0 0.0
    %1350 = vmatprep.subr.mxu0 0.0
    %1351 = vmatpush1.msra.mxu0 0.0
    %1352 = vmatprep.subr.mxu0 0.0
    %1353 = vmatpush1.msra.mxu0 0.0
    %1354 = vmatprep.subr.mxu0 0.0
    %1355 = vmatpush1.msra.mxu0 0.0
    %1356 = vmatprep.subr.mxu0 0.0
    %1357 = vmatpush1.msra.mxu0 0.0
    %1358 = vmatprep.subr.mxu0 0.0
    %1359 = vmatpush1.msra.mxu0 0.0
    %1360 = vmatprep.subr.mxu0 0.0
    %1361 = vmatpush1.msra.mxu0 0.0
    %1362 = vmatprep.subr.mxu0 0.0
    %1363 = vmatpush1.msra.mxu0 0.0
    %1364 = vmatprep.subr.mxu0 0.0
    %1365 = vmatpush1.msra.mxu0 0.0
    %1366 = vmatprep.subr.mxu0 0.0
    %1367 = vmatpush1.msra.mxu0 0.0
    %1368 = vmatprep.subr.mxu0 0.0
    %1369 = vmatpush1.msra.mxu0 0.0
    %1370 = vmatprep.subr.mxu0 0.0
    %1371 = vmatpush1.msra.mxu0 0.0
    %1372 = vmatprep.subr.mxu0 0.0
    %1373 = vmatpush1.msra.mxu0 0.0
    %1374 = vmatprep.subr.mxu0 0.0
    %1375 = vmatpush1.msra.mxu0 0.0
    %1376 = vmatprep.subr.mxu0 0.0
    %1377 = vmatpush1.msra.mxu0 0.0
    %1378 = vmatprep.subr.mxu0 0.0
    %1379 = vmatpush1.msra.mxu0 0.0
    %1380 = vmatprep.mubr.f32.mxu0 0.0
    %1381 = vmatmul.mubr.f32.gmra.mrb[0].mxu0 %v1209
    %v1382 = vpop.f32.mrb[0].mxu0
    %v1383 = vadd.f32 %v1313, %v1382
    %v1384 = vpop.f32.mrb[0].mxu0
    %1385 = vdwg.mxu0
    %s1386 = scalar_lea.vmem [#allocation8], 256
    %v1387 = vld [vmem:[%s1386] sm:$0xff]
    %v1388 = vld [vmem:[%s1386 + $0x8] sm:$0xff]
    %v1389 = vld [vmem:[%s1386 + $0x10] sm:$0xff]
    %v1390 = vld [vmem:[%s1386 + $0x18] sm:$0xff]
    %v1391 = vld [vmem:[%s1386 + $0x20] sm:$0xff]
    %v1392 = vld [vmem:[%s1386 + $0x28] sm:$0xff]
    %v1393 = vld [vmem:[%s1386 + $0x30] sm:$0xff]
    %v1394 = vld [vmem:[%s1386 + $0x38] sm:$0xff]
    %v1395 = vld [vmem:[%s1386 + $0x40] sm:$0xff]
    %v1396 = vld [vmem:[%s1386 + $0x48] sm:$0xff]
    %v1397 = vld [vmem:[%s1386 + $0x50] sm:$0xff]
    %v1398 = vld [vmem:[%s1386 + $0x58] sm:$0xff]
    %v1399 = vld [vmem:[%s1386 + $0x60] sm:$0xff]
    %v1400 = vld [vmem:[%s1386 + $0x68] sm:$0xff]
    %v1401 = vld [vmem:[%s1386 + $0x70] sm:$0xff]
    %v1402 = vld [vmem:[%s1386 + $0x78] sm:$0xff]
    %v1403 = vrot.slane %v1209, 2
    %1405 = vmatprep.subr.mxu0 0.0
    %1406 = vmatpush1.msra.mxu0 %v1387
    %1407 = vmatprep.subr.mxu0 0.0
    %1408 = vmatpush1.msra.mxu0 %v1388
    %1409 = vmatprep.subr.mxu0 0.0
    %1410 = vmatpush1.msra.mxu0 %v1389
    %1411 = vmatprep.subr.mxu0 0.0
    %1412 = vmatpush1.msra.mxu0 %v1390
    %1413 = vmatprep.subr.mxu0 0.0
    %1414 = vmatpush1.msra.mxu0 %v1391
    %1415 = vmatprep.subr.mxu0 0.0
    %1416 = vmatpush1.msra.mxu0 %v1392
    %1417 = vmatprep.subr.mxu0 0.0
    %1418 = vmatpush1.msra.mxu0 %v1393
    %1419 = vmatprep.subr.mxu0 0.0
    %1420 = vmatpush1.msra.mxu0 %v1394
    %1421 = vmatprep.subr.mxu0 0.0
    %1422 = vmatpush1.msra.mxu0 %v1395
    %1423 = vmatprep.subr.mxu0 0.0
    %1424 = vmatpush1.msra.mxu0 %v1396
    %1425 = vmatprep.subr.mxu0 0.0
    %1426 = vmatpush1.msra.mxu0 %v1397
    %1427 = vmatprep.subr.mxu0 0.0
    %1428 = vmatpush1.msra.mxu0 %v1398
    %1429 = vmatprep.subr.mxu0 0.0
    %1430 = vmatpush1.msra.mxu0 %v1399
    %1431 = vmatprep.subr.mxu0 0.0
    %1432 = vmatpush1.msra.mxu0 %v1400
    %1433 = vmatprep.subr.mxu0 0.0
    %1434 = vmatpush1.msra.mxu0 %v1401
    %1435 = vmatprep.subr.mxu0 0.0
    %1436 = vmatpush1.msra.mxu0 %v1402
    %1437 = vmatprep.subr.mxu0 0.0
    %1438 = vmatpush1.msra.mxu0 0.0
    %1439 = vmatprep.subr.mxu0 0.0
    %1440 = vmatpush1.msra.mxu0 0.0
    %1441 = vmatprep.subr.mxu0 0.0
    %1442 = vmatpush1.msra.mxu0 0.0
    %1443 = vmatprep.subr.mxu0 0.0
    %1444 = vmatpush1.msra.mxu0 0.0
    %1445 = vmatprep.subr.mxu0 0.0
    %1446 = vmatpush1.msra.mxu0 0.0
    %1447 = vmatprep.subr.mxu0 0.0
    %1448 = vmatpush1.msra.mxu0 0.0
    %1449 = vmatprep.subr.mxu0 0.0
    %1450 = vmatpush1.msra.mxu0 0.0
    %1451 = vmatprep.subr.mxu0 0.0
    %1452 = vmatpush1.msra.mxu0 0.0
    %1453 = vmatprep.subr.mxu0 0.0
    %1454 = vmatpush1.msra.mxu0 0.0
    %1455 = vmatprep.subr.mxu0 0.0
    %1456 = vmatpush1.msra.mxu0 0.0
    %1457 = vmatprep.subr.mxu0 0.0
    %1458 = vmatpush1.msra.mxu0 0.0
    %1459 = vmatprep.subr.mxu0 0.0
    %1460 = vmatpush1.msra.mxu0 0.0
    %1461 = vmatprep.subr.mxu0 0.0
    %1462 = vmatpush1.msra.mxu0 0.0
    %1463 = vmatprep.subr.mxu0 0.0
    %1464 = vmatpush1.msra.mxu0 0.0
    %1465 = vmatprep.subr.mxu0 0.0
    %1466 = vmatpush1.msra.mxu0 0.0
    %1467 = vmatprep.subr.mxu0 0.0
    %1468 = vmatpush1.msra.mxu0 0.0
    %1469 = vmatprep.mubr.f32.mxu0 0.0
    %1470 = vmatmul.mubr.f32.gmra.mrb[0].mxu0 %v1403
    %v1471 = vpop.f32.mrb[0].mxu0
    %v1472 = vadd.f32 0.0, %v1471
    %v1473 = vpop.f32.mrb[0].mxu0
    %1474 = vdwg.mxu0
    %v1475 = vadd.f32 %v1383, %v1472
    %v1476 = vlaneseq
    %v1477 = vshrl.u32 %v1476, 7
    %v1478 = vsub.s32 0, %v1477
    %v1479 = vrot.slane %v71, %v1478
    %v1480 = vadd.f32 %v1475, %v1479
    %v1481 = vmax.f32 %v1480, 0.0
    %1482 = vst [vmem:[#allocation3] sm:$0xf] %v1481
    %v1483 = vld [vmem:[#allocation4 + $0x30] sm:$0xff]
    %v1484 = vld [vmem:[#allocation4 + $0x38] sm:$0x1f]
    %v1485 = vld [vmem:[#allocation6] sm:$0xff]
    %v1486 = vld [vmem:[#allocation6 + $0x8] sm:$0xff]
    %v1487 = vld [vmem:[#allocation6 + $0x10] sm:$0xff]
    %v1488 = vld [vmem:[#allocation6 + $0x18] sm:$0xff]
    %v1489 = vld [vmem:[#allocation4 + $0x40] sm:$0xff]
    %v1490 = vld [vmem:[#allocation4 + $0x48] sm:$0x1f]
    %v1491 = vld [vmem:[%s84] sm:$0xff]
    %v1492 = vld [vmem:[%s84 + $0x8] sm:$0xff]
    %v1493 = vld [vmem:[%s84 + $0x10] sm:$0xff]
    %v1494 = vld [vmem:[%s84 + $0x18] sm:$0xff]
    %v1496 = vsel %vm89, %v1489, 0
    %v1499 = vsel %vm89, %v1490, 0
    %1501 = vmatprep.subr.mxu0 %v1492
    %1502 = vmatpush1.msra.mxu0 %v1491
    %1503 = vmatprep.subr.mxu0 %v1494
    %1504 = vmatpush1.msra.mxu0 %v1493
    %1505 = vmatprep.subr.mxu0 0.0
    %1506 = vmatpush1.msra.mxu0 0.0
    %1507 = vmatprep.subr.mxu0 0.0
    %1508 = vmatpush1.msra.mxu0 0.0
    %1509 = vmatprep.subr.mxu0 0.0
    %1510 = vmatpush1.msra.mxu0 0.0
    %1511 = vmatprep.subr.mxu0 0.0
    %1512 = vmatpush1.msra.mxu0 0.0
    %1513 = vmatprep.subr.mxu0 0.0
    %1514 = vmatpush1.msra.mxu0 0.0
    %1515 = vmatprep.subr.mxu0 0.0
    %1516 = vmatpush1.msra.mxu0 0.0
    %1517 = vmatprep.subr.mxu0 0.0
    %1518 = vmatpush1.msra.mxu0 0.0
    %1519 = vmatprep.subr.mxu0 0.0
    %1520 = vmatpush1.msra.mxu0 0.0
    %1521 = vmatprep.subr.mxu0 0.0
    %1522 = vmatpush1.msra.mxu0 0.0
    %1523 = vmatprep.subr.mxu0 0.0
    %1524 = vmatpush1.msra.mxu0 0.0
    %1525 = vmatprep.subr.mxu0 0.0
    %1526 = vmatpush1.msra.mxu0 0.0
    %1527 = vmatprep.subr.mxu0 0.0
    %1528 = vmatpush1.msra.mxu0 0.0
    %1529 = vmatprep.subr.mxu0 0.0
    %1530 = vmatpush1.msra.mxu0 0.0
    %1531 = vmatprep.subr.mxu0 0.0
    %1532 = vmatpush1.msra.mxu0 0.0
    %1533 = vmatprep.subr.mxu0 0.0
    %1534 = vmatpush1.msra.mxu0 0.0
    %1535 = vmatprep.subr.mxu0 0.0
    %1536 = vmatpush1.msra.mxu0 0.0
    %1537 = vmatprep.subr.mxu0 0.0
    %1538 = vmatpush1.msra.mxu0 0.0
    %1539 = vmatprep.subr.mxu0 0.0
    %1540 = vmatpush1.msra.mxu0 0.0
    %1541 = vmatprep.subr.mxu0 0.0
    %1542 = vmatpush1.msra.mxu0 0.0
    %1543 = vmatprep.subr.mxu0 0.0
    %1544 = vmatpush1.msra.mxu0 0.0
    %1545 = vmatprep.subr.mxu0 0.0
    %1546 = vmatpush1.msra.mxu0 0.0
    %1547 = vmatprep.subr.mxu0 0.0
    %1548 = vmatpush1.msra.mxu0 0.0
    %1549 = vmatprep.subr.mxu0 0.0
    %1550 = vmatpush1.msra.mxu0 0.0
    %1551 = vmatprep.subr.mxu0 0.0
    %1552 = vmatpush1.msra.mxu0 0.0
    %1553 = vmatprep.subr.mxu0 0.0
    %1554 = vmatpush1.msra.mxu0 0.0
    %1555 = vmatprep.subr.mxu0 0.0
    %1556 = vmatpush1.msra.mxu0 0.0
    %1557 = vmatprep.subr.mxu0 0.0
    %1558 = vmatpush1.msra.mxu0 0.0
    %1559 = vmatprep.subr.mxu0 0.0
    %1560 = vmatpush1.msra.mxu0 0.0
    %1561 = vmatprep.subr.mxu0 0.0
    %1562 = vmatpush1.msra.mxu0 0.0
    %1563 = vmatprep.subr.mxu0 0.0
    %1564 = vmatpush1.msra.mxu0 0.0
    %1565 = vmatprep.mubr.f32.mxu0 0.0
    %1566 = vmatmul.mubr.f32.gmra.mrb[0].mxu0 %v1496
    %v1567 = vpop.f32.mrb[0].mxu0
    %v1568 = vadd.f32 0.0, %v1567
    %v1569 = vpop.f32.mrb[0].mxu0
    %v1570 = vadd.f32 0.0, %v1569
    %1571 = vmatprep.mubr.f32.mxu0 0.0
    %1572 = vmatmul.mubr.f32.gmra.mrb[0].mxu0 %v1499
    %v1573 = vpop.f32.mrb[0].mxu0
    %v1574 = vadd.f32 0.0, %v1573
    %v1575 = vpop.f32.mrb[0].mxu0
    %v1576 = vadd.f32 0.0, %v1575
    %1577 = vdwg.mxu0
    %v1579 = vsel %vm89, %v1483, 0
    %v1582 = vsel %vm89, %v1484, 0
    %1584 = vmatprep.subr.mxu0 %v1486
    %1585 = vmatpush1.msra.mxu0 %v1485
    %1586 = vmatprep.subr.mxu0 %v1488
    %1587 = vmatpush1.msra.mxu0 %v1487
    %1588 = vmatprep.subr.mxu0 0.0
    %1589 = vmatpush1.msra.mxu0 0.0
    %1590 = vmatprep.subr.mxu0 0.0
    %1591 = vmatpush1.msra.mxu0 0.0
    %1592 = vmatprep.subr.mxu0 0.0
    %1593 = vmatpush1.msra.mxu0 0.0
    %1594 = vmatprep.subr.mxu0 0.0
    %1595 = vmatpush1.msra.mxu0 0.0
    %1596 = vmatprep.subr.mxu0 0.0
    %1597 = vmatpush1.msra.mxu0 0.0
    %1598 = vmatprep.subr.mxu0 0.0
    %1599 = vmatpush1.msra.mxu0 0.0
    %1600 = vmatprep.subr.mxu0 0.0
    %1601 = vmatpush1.msra.mxu0 0.0
    %1602 = vmatprep.subr.mxu0 0.0
    %1603 = vmatpush1.msra.mxu0 0.0
    %1604 = vmatprep.subr.mxu0 0.0
    %1605 = vmatpush1.msra.mxu0 0.0
    %1606 = vmatprep.subr.mxu0 0.0
    %1607 = vmatpush1.msra.mxu0 0.0
    %1608 = vmatprep.subr.mxu0 0.0
    %1609 = vmatpush1.msra.mxu0 0.0
    %1610 = vmatprep.subr.mxu0 0.0
    %1611 = vmatpush1.msra.mxu0 0.0
    %1612 = vmatprep.subr.mxu0 0.0
    %1613 = vmatpush1.msra.mxu0 0.0
    %1614 = vmatprep.subr.mxu0 0.0
    %1615 = vmatpush1.msra.mxu0 0.0
    %1616 = vmatprep.subr.mxu0 0.0
    %1617 = vmatpush1.msra.mxu0 0.0
    %1618 = vmatprep.subr.mxu0 0.0
    %1619 = vmatpush1.msra.mxu0 0.0
    %1620 = vmatprep.subr.mxu0 0.0
    %1621 = vmatpush1.msra.mxu0 0.0
    %1622 = vmatprep.subr.mxu0 0.0
    %1623 = vmatpush1.msra.mxu0 0.0
    %1624 = vmatprep.subr.mxu0 0.0
    %1625 = vmatpush1.msra.mxu0 0.0
    %1626 = vmatprep.subr.mxu0 0.0
    %1627 = vmatpush1.msra.mxu0 0.0
    %1628 = vmatprep.subr.mxu0 0.0
    %1629 = vmatpush1.msra.mxu0 0.0
    %1630 = vmatprep.subr.mxu0 0.0
    %1631 = vmatpush1.msra.mxu0 0.0
    %1632 = vmatprep.subr.mxu0 0.0
    %1633 = vmatpush1.msra.mxu0 0.0
    %1634 = vmatprep.subr.mxu0 0.0
    %1635 = vmatpush1.msra.mxu0 0.0
    %1636 = vmatprep.subr.mxu0 0.0
    %1637 = vmatpush1.msra.mxu0 0.0
    %1638 = vmatprep.subr.mxu0 0.0
    %1639 = vmatpush1.msra.mxu0 0.0
    %1640 = vmatprep.subr.mxu0 0.0
    %1641 = vmatpush1.msra.mxu0 0.0
    %1642 = vmatprep.subr.mxu0 0.0
    %1643 = vmatpush1.msra.mxu0 0.0
    %1644 = vmatprep.subr.mxu0 0.0
    %1645 = vmatpush1.msra.mxu0 0.0
    %1646 = vmatprep.subr.mxu0 0.0
    %1647 = vmatpush1.msra.mxu0 0.0
    %1648 = vmatprep.mubr.f32.mxu0 0.0
    %1649 = vmatmul.mubr.f32.gmra.mrb[0].mxu0 %v1579
    %v1650 = vpop.f32.mrb[0].mxu0
    %v1651 = vadd.f32 %v1568, %v1650
    %v1652 = vpop.f32.mrb[0].mxu0
    %v1653 = vadd.f32 %v1570, %v1652
    %1654 = vmatprep.mubr.f32.mxu0 0.0
    %1655 = vmatmul.mubr.f32.gmra.mrb[0].mxu0 %v1582
    %v1656 = vpop.f32.mrb[0].mxu0
    %v1657 = vadd.f32 %v1574, %v1656
    %v1658 = vpop.f32.mrb[0].mxu0
    %v1659 = vadd.f32 %v1576, %v1658
    %1660 = vdwg.mxu0
    %v1661 = vld [vmem:[#allocation4 + $0x50] sm:$0xff]
    %v1662 = vld [vmem:[#allocation4 + $0x58] sm:$0x1f]
    %v1663 = vld [vmem:[%s258] sm:$0xff]
    %v1664 = vld [vmem:[%s258 + $0x8] sm:$0xff]
    %v1665 = vld [vmem:[%s258 + $0x10] sm:$0xff]
    %v1666 = vld [vmem:[%s258 + $0x18] sm:$0xff]
    %v1668 = vsel %vm89, %v1661, 0
    %v1671 = vsel %vm89, %v1662, 0
    %1673 = vmatprep.subr.mxu0 %v1664
    %1674 = vmatpush1.msra.mxu0 %v1663
    %1675 = vmatprep.subr.mxu0 %v1666
    %1676 = vmatpush1.msra.mxu0 %v1665
    %1677 = vmatprep.subr.mxu0 0.0
    %1678 = vmatpush1.msra.mxu0 0.0
    %1679 = vmatprep.subr.mxu0 0.0
    %1680 = vmatpush1.msra.mxu0 0.0
    %1681 = vmatprep.subr.mxu0 0.0
    %1682 = vmatpush1.msra.mxu0 0.0
    %1683 = vmatprep.subr.mxu0 0.0
    %1684 = vmatpush1.msra.mxu0 0.0
    %1685 = vmatprep.subr.mxu0 0.0
    %1686 = vmatpush1.msra.mxu0 0.0
    %1687 = vmatprep.subr.mxu0 0.0
    %1688 = vmatpush1.msra.mxu0 0.0
    %1689 = vmatprep.subr.mxu0 0.0
    %1690 = vmatpush1.msra.mxu0 0.0
    %1691 = vmatprep.subr.mxu0 0.0
    %1692 = vmatpush1.msra.mxu0 0.0
    %1693 = vmatprep.subr.mxu0 0.0
    %1694 = vmatpush1.msra.mxu0 0.0
    %1695 = vmatprep.subr.mxu0 0.0
    %1696 = vmatpush1.msra.mxu0 0.0
    %1697 = vmatprep.subr.mxu0 0.0
    %1698 = vmatpush1.msra.mxu0 0.0
    %1699 = vmatprep.subr.mxu0 0.0
    %1700 = vmatpush1.msra.mxu0 0.0
    %1701 = vmatprep.subr.mxu0 0.0
    %1702 = vmatpush1.msra.mxu0 0.0
    %1703 = vmatprep.subr.mxu0 0.0
    %1704 = vmatpush1.msra.mxu0 0.0
    %1705 = vmatprep.subr.mxu0 0.0
    %1706 = vmatpush1.msra.mxu0 0.0
    %1707 = vmatprep.subr.mxu0 0.0
    %1708 = vmatpush1.msra.mxu0 0.0
    %1709 = vmatprep.subr.mxu0 0.0
    %1710 = vmatpush1.msra.mxu0 0.0
    %1711 = vmatprep.subr.mxu0 0.0
    %1712 = vmatpush1.msra.mxu0 0.0
    %1713 = vmatprep.subr.mxu0 0.0
    %1714 = vmatpush1.msra.mxu0 0.0
    %1715 = vmatprep.subr.mxu0 0.0
    %1716 = vmatpush1.msra.mxu0 0.0
    %1717 = vmatprep.subr.mxu0 0.0
    %1718 = vmatpush1.msra.mxu0 0.0
    %1719 = vmatprep.subr.mxu0 0.0
    %1720 = vmatpush1.msra.mxu0 0.0
    %1721 = vmatprep.subr.mxu0 0.0
    %1722 = vmatpush1.msra.mxu0 0.0
    %1723 = vmatprep.subr.mxu0 0.0
    %1724 = vmatpush1.msra.mxu0 0.0
    %1725 = vmatprep.subr.mxu0 0.0
    %1726 = vmatpush1.msra.mxu0 0.0
    %1727 = vmatprep.subr.mxu0 0.0
    %1728 = vmatpush1.msra.mxu0 0.0
    %1729 = vmatprep.subr.mxu0 0.0
    %1730 = vmatpush1.msra.mxu0 0.0
    %1731 = vmatprep.subr.mxu0 0.0
    %1732 = vmatpush1.msra.mxu0 0.0
    %1733 = vmatprep.subr.mxu0 0.0
    %1734 = vmatpush1.msra.mxu0 0.0
    %1735 = vmatprep.subr.mxu0 0.0
    %1736 = vmatpush1.msra.mxu0 0.0
    %1737 = vmatprep.mubr.f32.mxu0 0.0
    %1738 = vmatmul.mubr.f32.gmra.mrb[0].mxu0 %v1668
    %v1739 = vpop.f32.mrb[0].mxu0
    %v1740 = vadd.f32 0.0, %v1739
    %v1741 = vpop.f32.mrb[0].mxu0
    %v1742 = vadd.f32 0.0, %v1741
    %1743 = vmatprep.mubr.f32.mxu0 0.0
    %1744 = vmatmul.mubr.f32.gmra.mrb[0].mxu0 %v1671
    %v1745 = vpop.f32.mrb[0].mxu0
    %v1746 = vadd.f32 0.0, %v1745
    %v1747 = vpop.f32.mrb[0].mxu0
    %v1748 = vadd.f32 0.0, %v1747
    %1749 = vdwg.mxu0
    %v1750 = vadd.f32 %v1651, %v1740
    %v1751 = vadd.f32 %v1653, %v1742
    %v1752 = vadd.f32 %v1657, %v1746
    %v1753 = vadd.f32 %v1659, %v1748
    %v1754 = vld [vmem:[#allocation4 + $0x31] sm:$0xff]
    %v1755 = vld [vmem:[#allocation4 + $0x39] sm:$0x1f]
    %v1756 = vld [vmem:[%s352] sm:$0xff]
    %v1757 = vld [vmem:[%s352 + $0x8] sm:$0xff]
    %v1758 = vld [vmem:[%s352 + $0x10] sm:$0xff]
    %v1759 = vld [vmem:[%s352 + $0x18] sm:$0xff]
    %v1761 = vsel %vm89, %v1754, 0
    %v1764 = vsel %vm89, %v1755, 0
    %1766 = vmatprep.subr.mxu0 %v1757
    %1767 = vmatpush1.msra.mxu0 %v1756
    %1768 = vmatprep.subr.mxu0 %v1759
    %1769 = vmatpush1.msra.mxu0 %v1758
    %1770 = vmatprep.subr.mxu0 0.0
    %1771 = vmatpush1.msra.mxu0 0.0
    %1772 = vmatprep.subr.mxu0 0.0
    %1773 = vmatpush1.msra.mxu0 0.0
    %1774 = vmatprep.subr.mxu0 0.0
    %1775 = vmatpush1.msra.mxu0 0.0
    %1776 = vmatprep.subr.mxu0 0.0
    %1777 = vmatpush1.msra.mxu0 0.0
    %1778 = vmatprep.subr.mxu0 0.0
    %1779 = vmatpush1.msra.mxu0 0.0
    %1780 = vmatprep.subr.mxu0 0.0
    %1781 = vmatpush1.msra.mxu0 0.0
    %1782 = vmatprep.subr.mxu0 0.0
    %1783 = vmatpush1.msra.mxu0 0.0
    %1784 = vmatprep.subr.mxu0 0.0
    %1785 = vmatpush1.msra.mxu0 0.0
    %1786 = vmatprep.subr.mxu0 0.0
    %1787 = vmatpush1.msra.mxu0 0.0
    %1788 = vmatprep.subr.mxu0 0.0
    %1789 = vmatpush1.msra.mxu0 0.0
    %1790 = vmatprep.subr.mxu0 0.0
    %1791 = vmatpush1.msra.mxu0 0.0
    %1792 = vmatprep.subr.mxu0 0.0
    %1793 = vmatpush1.msra.mxu0 0.0
    %1794 = vmatprep.subr.mxu0 0.0
    %1795 = vmatpush1.msra.mxu0 0.0
    %1796 = vmatprep.subr.mxu0 0.0
    %1797 = vmatpush1.msra.mxu0 0.0
    %1798 = vmatprep.subr.mxu0 0.0
    %1799 = vmatpush1.msra.mxu0 0.0
    %1800 = vmatprep.subr.mxu0 0.0
    %1801 = vmatpush1.msra.mxu0 0.0
    %1802 = vmatprep.subr.mxu0 0.0
    %1803 = vmatpush1.msra.mxu0 0.0
    %1804 = vmatprep.subr.mxu0 0.0
    %1805 = vmatpush1.msra.mxu0 0.0
    %1806 = vmatprep.subr.mxu0 0.0
    %1807 = vmatpush1.msra.mxu0 0.0
    %1808 = vmatprep.subr.mxu0 0.0
    %1809 = vmatpush1.msra.mxu0 0.0
    %1810 = vmatprep.subr.mxu0 0.0
    %1811 = vmatpush1.msra.mxu0 0.0
    %1812 = vmatprep.subr.mxu0 0.0
    %1813 = vmatpush1.msra.mxu0 0.0
    %1814 = vmatprep.subr.mxu0 0.0
    %1815 = vmatpush1.msra.mxu0 0.0
    %1816 = vmatprep.subr.mxu0 0.0
    %1817 = vmatpush1.msra.mxu0 0.0
    %1818 = vmatprep.subr.mxu0 0.0
    %1819 = vmatpush1.msra.mxu0 0.0
    %1820 = vmatprep.subr.mxu0 0.0
    %1821 = vmatpush1.msra.mxu0 0.0
    %1822 = vmatprep.subr.mxu0 0.0
    %1823 = vmatpush1.msra.mxu0 0.0
    %1824 = vmatprep.subr.mxu0 0.0
    %1825 = vmatpush1.msra.mxu0 0.0
    %1826 = vmatprep.subr.mxu0 0.0
    %1827 = vmatpush1.msra.mxu0 0.0
    %1828 = vmatprep.subr.mxu0 0.0
    %1829 = vmatpush1.msra.mxu0 0.0
    %1830 = vmatprep.mubr.f32.mxu0 0.0
    %1831 = vmatmul.mubr.f32.gmra.mrb[0].mxu0 %v1761
    %v1832 = vpop.f32.mrb[0].mxu0
    %v1833 = vadd.f32 0.0, %v1832
    %v1834 = vpop.f32.mrb[0].mxu0
    %v1835 = vadd.f32 0.0, %v1834
    %1836 = vmatprep.mubr.f32.mxu0 0.0
    %1837 = vmatmul.mubr.f32.gmra.mrb[0].mxu0 %v1764
    %v1838 = vpop.f32.mrb[0].mxu0
    %v1839 = vadd.f32 0.0, %v1838
    %v1840 = vpop.f32.mrb[0].mxu0
    %v1841 = vadd.f32 0.0, %v1840
    %1842 = vdwg.mxu0
    %v1843 = vadd.f32 %v1750, %v1833
    %v1844 = vadd.f32 %v1751, %v1835
    %v1845 = vadd.f32 %v1752, %v1839
    %v1846 = vadd.f32 %v1753, %v1841
    %v1847 = vld [vmem:[#allocation4 + $0x41] sm:$0xff]
    %v1848 = vld [vmem:[#allocation4 + $0x49] sm:$0x1f]
    %v1849 = vld [vmem:[%s446] sm:$0xff]
    %v1850 = vld [vmem:[%s446 + $0x8] sm:$0xff]
    %v1851 = vld [vmem:[%s446 + $0x10] sm:$0xff]
    %v1852 = vld [vmem:[%s446 + $0x18] sm:$0xff]
    %v1854 = vsel %vm89, %v1847, 0
    %v1857 = vsel %vm89, %v1848, 0
    %1859 = vmatprep.subr.mxu0 %v1850
    %1860 = vmatpush1.msra.mxu0 %v1849
    %1861 = vmatprep.subr.mxu0 %v1852
    %1862 = vmatpush1.msra.mxu0 %v1851
    %1863 = vmatprep.subr.mxu0 0.0
    %1864 = vmatpush1.msra.mxu0 0.0
    %1865 = vmatprep.subr.mxu0 0.0
    %1866 = vmatpush1.msra.mxu0 0.0
    %1867 = vmatprep.subr.mxu0 0.0
    %1868 = vmatpush1.msra.mxu0 0.0
    %1869 = vmatprep.subr.mxu0 0.0
    %1870 = vmatpush1.msra.mxu0 0.0
    %1871 = vmatprep.subr.mxu0 0.0
    %1872 = vmatpush1.msra.mxu0 0.0
    %1873 = vmatprep.subr.mxu0 0.0
    %1874 = vmatpush1.msra.mxu0 0.0
    %1875 = vmatprep.subr.mxu0 0.0
    %1876 = vmatpush1.msra.mxu0 0.0
    %1877 = vmatprep.subr.mxu0 0.0
    %1878 = vmatpush1.msra.mxu0 0.0
    %1879 = vmatprep.subr.mxu0 0.0
    %1880 = vmatpush1.msra.mxu0 0.0
    %1881 = vmatprep.subr.mxu0 0.0
    %1882 = vmatpush1.msra.mxu0 0.0
    %1883 = vmatprep.subr.mxu0 0.0
    %1884 = vmatpush1.msra.mxu0 0.0
    %1885 = vmatprep.subr.mxu0 0.0
    %1886 = vmatpush1.msra.mxu0 0.0
    %1887 = vmatprep.subr.mxu0 0.0
    %1888 = vmatpush1.msra.mxu0 0.0
    %1889 = vmatprep.subr.mxu0 0.0
    %1890 = vmatpush1.msra.mxu0 0.0
    %1891 = vmatprep.subr.mxu0 0.0
    %1892 = vmatpush1.msra.mxu0 0.0
    %1893 = vmatprep.subr.mxu0 0.0
    %1894 = vmatpush1.msra.mxu0 0.0
    %1895 = vmatprep.subr.mxu0 0.0
    %1896 = vmatpush1.msra.mxu0 0.0
    %1897 = vmatprep.subr.mxu0 0.0
    %1898 = vmatpush1.msra.mxu0 0.0
    %1899 = vmatprep.subr.mxu0 0.0
    %1900 = vmatpush1.msra.mxu0 0.0
    %1901 = vmatprep.subr.mxu0 0.0
    %1902 = vmatpush1.msra.mxu0 0.0
    %1903 = vmatprep.subr.mxu0 0.0
    %1904 = vmatpush1.msra.mxu0 0.0
    %1905 = vmatprep.subr.mxu0 0.0
    %1906 = vmatpush1.msra.mxu0 0.0
    %1907 = vmatprep.subr.mxu0 0.0
    %1908 = vmatpush1.msra.mxu0 0.0
    %1909 = vmatprep.subr.mxu0 0.0
    %1910 = vmatpush1.msra.mxu0 0.0
    %1911 = vmatprep.subr.mxu0 0.0
    %1912 = vmatpush1.msra.mxu0 0.0
    %1913 = vmatprep.subr.mxu0 0.0
    %1914 = vmatpush1.msra.mxu0 0.0
    %1915 = vmatprep.subr.mxu0 0.0
    %1916 = vmatpush1.msra.mxu0 0.0
    %1917 = vmatprep.subr.mxu0 0.0
    %1918 = vmatpush1.msra.mxu0 0.0
    %1919 = vmatprep.subr.mxu0 0.0
    %1920 = vmatpush1.msra.mxu0 0.0
    %1921 = vmatprep.subr.mxu0 0.0
    %1922 = vmatpush1.msra.mxu0 0.0
    %1923 = vmatprep.mubr.f32.mxu0 0.0
    %1924 = vmatmul.mubr.f32.gmra.mrb[0].mxu0 %v1854
    %v1925 = vpop.f32.mrb[0].mxu0
    %v1926 = vadd.f32 0.0, %v1925
    %v1927 = vpop.f32.mrb[0].mxu0
    %v1928 = vadd.f32 0.0, %v1927
    %1929 = vmatprep.mubr.f32.mxu0 0.0
    %1930 = vmatmul.mubr.f32.gmra.mrb[0].mxu0 %v1857
    %v1931 = vpop.f32.mrb[0].mxu0
    %v1932 = vadd.f32 0.0, %v1931
    %v1933 = vpop.f32.mrb[0].mxu0
    %v1934 = vadd.f32 0.0, %v1933
    %1935 = vdwg.mxu0
    %v1936 = vadd.f32 %v1843, %v1926
    %v1937 = vadd.f32 %v1844, %v1928
    %v1938 = vadd.f32 %v1845, %v1932
    %v1939 = vadd.f32 %v1846, %v1934
    %v1940 = vld [vmem:[#allocation4 + $0x51] sm:$0xff]
    %v1941 = vld [vmem:[#allocation4 + $0x59] sm:$0x1f]
    %v1942 = vld [vmem:[%s540] sm:$0xff]
    %v1943 = vld [vmem:[%s540 + $0x8] sm:$0xff]
    %v1944 = vld [vmem:[%s540 + $0x10] sm:$0xff]
    %v1945 = vld [vmem:[%s540 + $0x18] sm:$0xff]
    %v1947 = vsel %vm89, %v1940, 0
    %v1950 = vsel %vm89, %v1941, 0
    %1952 = vmatprep.subr.mxu0 %v1943
    %1953 = vmatpush1.msra.mxu0 %v1942
    %1954 = vmatprep.subr.mxu0 %v1945
    %1955 = vmatpush1.msra.mxu0 %v1944
    %1956 = vmatprep.subr.mxu0 0.0
    %1957 = vmatpush1.msra.mxu0 0.0
    %1958 = vmatprep.subr.mxu0 0.0
    %1959 = vmatpush1.msra.mxu0 0.0
    %1960 = vmatprep.subr.mxu0 0.0
    %1961 = vmatpush1.msra.mxu0 0.0
    %1962 = vmatprep.subr.mxu0 0.0
    %1963 = vmatpush1.msra.mxu0 0.0
    %1964 = vmatprep.subr.mxu0 0.0
    %1965 = vmatpush1.msra.mxu0 0.0
    %1966 = vmatprep.subr.mxu0 0.0
    %1967 = vmatpush1.msra.mxu0 0.0
    %1968 = vmatprep.subr.mxu0 0.0
    %1969 = vmatpush1.msra.mxu0 0.0
    %1970 = vmatprep.subr.mxu0 0.0
    %1971 = vmatpush1.msra.mxu0 0.0
    %1972 = vmatprep.subr.mxu0 0.0
    %1973 = vmatpush1.msra.mxu0 0.0
    %1974 = vmatprep.subr.mxu0 0.0
    %1975 = vmatpush1.msra.mxu0 0.0
    %1976 = vmatprep.subr.mxu0 0.0
    %1977 = vmatpush1.msra.mxu0 0.0
    %1978 = vmatprep.subr.mxu0 0.0
    %1979 = vmatpush1.msra.mxu0 0.0
    %1980 = vmatprep.subr.mxu0 0.0
    %1981 = vmatpush1.msra.mxu0 0.0
    %1982 = vmatprep.subr.mxu0 0.0
    %1983 = vmatpush1.msra.mxu0 0.0
    %1984 = vmatprep.subr.mxu0 0.0
    %1985 = vmatpush1.msra.mxu0 0.0
    %1986 = vmatprep.subr.mxu0 0.0
    %1987 = vmatpush1.msra.mxu0 0.0
    %1988 = vmatprep.subr.mxu0 0.0
    %1989 = vmatpush1.msra.mxu0 0.0
    %1990 = vmatprep.subr.mxu0 0.0
    %1991 = vmatpush1.msra.mxu0 0.0
    %1992 = vmatprep.subr.mxu0 0.0
    %1993 = vmatpush1.msra.mxu0 0.0
    %1994 = vmatprep.subr.mxu0 0.0
    %1995 = vmatpush1.msra.mxu0 0.0
    %1996 = vmatprep.subr.mxu0 0.0
    %1997 = vmatpush1.msra.mxu0 0.0
    %1998 = vmatprep.subr.mxu0 0.0
    %1999 = vmatpush1.msra.mxu0 0.0
    %2000 = vmatprep.subr.mxu0 0.0
    %2001 = vmatpush1.msra.mxu0 0.0
    %2002 = vmatprep.subr.mxu0 0.0
    %2003 = vmatpush1.msra.mxu0 0.0
    %2004 = vmatprep.subr.mxu0 0.0
    %2005 = vmatpush1.msra.mxu0 0.0
    %2006 = vmatprep.subr.mxu0 0.0
    %2007 = vmatpush1.msra.mxu0 0.0
    %2008 = vmatprep.subr.mxu0 0.0
    %2009 = vmatpush1.msra.mxu0 0.0
    %2010 = vmatprep.subr.mxu0 0.0
    %2011 = vmatpush1.msra.mxu0 0.0
    %2012 = vmatprep.subr.mxu0 0.0
    %2013 = vmatpush1.msra.mxu0 0.0
    %2014 = vmatprep.subr.mxu0 0.0
    %2015 = vmatpush1.msra.mxu0 0.0
    %2016 = vmatprep.mubr.f32.mxu0 0.0
    %2017 = vmatmul.mubr.f32.gmra.mrb[0].mxu0 %v1947
    %v2018 = vpop.f32.mrb[0].mxu0
    %v2019 = vadd.f32 0.0, %v2018
    %v2020 = vpop.f32.mrb[0].mxu0
    %v2021 = vadd.f32 0.0, %v2020
    %2022 = vmatprep.mubr.f32.mxu0 0.0
    %2023 = vmatmul.mubr.f32.gmra.mrb[0].mxu0 %v1950
    %v2024 = vpop.f32.mrb[0].mxu0
    %v2025 = vadd.f32 0.0, %v2024
    %v2026 = vpop.f32.mrb[0].mxu0
    %v2027 = vadd.f32 0.0, %v2026
    %2028 = vdwg.mxu0
    %v2029 = vadd.f32 %v1936, %v2019
    %v2030 = vadd.f32 %v1937, %v2021
    %v2031 = vadd.f32 %v1938, %v2025
    %v2032 = vadd.f32 %v1939, %v2027
    %v2033 = vld [vmem:[#allocation4 + $0x32] sm:$0xff]
    %v2034 = vld [vmem:[#allocation4 + $0x3a] sm:$0x1f]
    %v2035 = vld [vmem:[%s634] sm:$0xff]
    %v2036 = vld [vmem:[%s634 + $0x8] sm:$0xff]
    %v2037 = vld [vmem:[%s634 + $0x10] sm:$0xff]
    %v2038 = vld [vmem:[%s634 + $0x18] sm:$0xff]
    %v2040 = vsel %vm89, %v2033, 0
    %v2043 = vsel %vm89, %v2034, 0
    %2045 = vmatprep.subr.mxu0 %v2036
    %2046 = vmatpush1.msra.mxu0 %v2035
    %2047 = vmatprep.subr.mxu0 %v2038
    %2048 = vmatpush1.msra.mxu0 %v2037
    %2049 = vmatprep.subr.mxu0 0.0
    %2050 = vmatpush1.msra.mxu0 0.0
    %2051 = vmatprep.subr.mxu0 0.0
    %2052 = vmatpush1.msra.mxu0 0.0
    %2053 = vmatprep.subr.mxu0 0.0
    %2054 = vmatpush1.msra.mxu0 0.0
    %2055 = vmatprep.subr.mxu0 0.0
    %2056 = vmatpush1.msra.mxu0 0.0
    %2057 = vmatprep.subr.mxu0 0.0
    %2058 = vmatpush1.msra.mxu0 0.0
    %2059 = vmatprep.subr.mxu0 0.0
    %2060 = vmatpush1.msra.mxu0 0.0
    %2061 = vmatprep.subr.mxu0 0.0
    %2062 = vmatpush1.msra.mxu0 0.0
    %2063 = vmatprep.subr.mxu0 0.0
    %2064 = vmatpush1.msra.mxu0 0.0
    %2065 = vmatprep.subr.mxu0 0.0
    %2066 = vmatpush1.msra.mxu0 0.0
    %2067 = vmatprep.subr.mxu0 0.0
    %2068 = vmatpush1.msra.mxu0 0.0
    %2069 = vmatprep.subr.mxu0 0.0
    %2070 = vmatpush1.msra.mxu0 0.0
    %2071 = vmatprep.subr.mxu0 0.0
    %2072 = vmatpush1.msra.mxu0 0.0
    %2073 = vmatprep.subr.mxu0 0.0
    %2074 = vmatpush1.msra.mxu0 0.0
    %2075 = vmatprep.subr.mxu0 0.0
    %2076 = vmatpush1.msra.mxu0 0.0
    %2077 = vmatprep.subr.mxu0 0.0
    %2078 = vmatpush1.msra.mxu0 0.0
    %2079 = vmatprep.subr.mxu0 0.0
    %2080 = vmatpush1.msra.mxu0 0.0
    %2081 = vmatprep.subr.mxu0 0.0
    %2082 = vmatpush1.msra.mxu0 0.0
    %2083 = vmatprep.subr.mxu0 0.0
    %2084 = vmatpush1.msra.mxu0 0.0
    %2085 = vmatprep.subr.mxu0 0.0
    %2086 = vmatpush1.msra.mxu0 0.0
    %2087 = vmatprep.subr.mxu0 0.0
    %2088 = vmatpush1.msra.mxu0 0.0
    %2089 = vmatprep.subr.mxu0 0.0
    %2090 = vmatpush1.msra.mxu0 0.0
    %2091 = vmatprep.subr.mxu0 0.0
    %2092 = vmatpush1.msra.mxu0 0.0
    %2093 = vmatprep.subr.mxu0 0.0
    %2094 = vmatpush1.msra.mxu0 0.0
    %2095 = vmatprep.subr.mxu0 0.0
    %2096 = vmatpush1.msra.mxu0 0.0
    %2097 = vmatprep.subr.mxu0 0.0
    %2098 = vmatpush1.msra.mxu0 0.0
    %2099 = vmatprep.subr.mxu0 0.0
    %2100 = vmatpush1.msra.mxu0 0.0
    %2101 = vmatprep.subr.mxu0 0.0
    %2102 = vmatpush1.msra.mxu0 0.0
    %2103 = vmatprep.subr.mxu0 0.0
    %2104 = vmatpush1.msra.mxu0 0.0
    %2105 = vmatprep.subr.mxu0 0.0
    %2106 = vmatpush1.msra.mxu0 0.0
    %2107 = vmatprep.subr.mxu0 0.0
    %2108 = vmatpush1.msra.mxu0 0.0
    %2109 = vmatprep.mubr.f32.mxu0 0.0
    %2110 = vmatmul.mubr.f32.gmra.mrb[0].mxu0 %v2040
    %v2111 = vpop.f32.mrb[0].mxu0
    %v2112 = vadd.f32 0.0, %v2111
    %v2113 = vpop.f32.mrb[0].mxu0
    %v2114 = vadd.f32 0.0, %v2113
    %2115 = vmatprep.mubr.f32.mxu0 0.0
    %2116 = vmatmul.mubr.f32.gmra.mrb[0].mxu0 %v2043
    %v2117 = vpop.f32.mrb[0].mxu0
    %v2118 = vadd.f32 0.0, %v2117
    %v2119 = vpop.f32.mrb[0].mxu0
    %v2120 = vadd.f32 0.0, %v2119
    %2121 = vdwg.mxu0
    %v2122 = vadd.f32 %v2029, %v2112
    %v2123 = vadd.f32 %v2030, %v2114
    %v2124 = vadd.f32 %v2031, %v2118
    %v2125 = vadd.f32 %v2032, %v2120
    %v2126 = vld [vmem:[#allocation4 + $0x42] sm:$0xff]
    %v2127 = vld [vmem:[#allocation4 + $0x4a] sm:$0x1f]
    %v2128 = vld [vmem:[%s728] sm:$0xff]
    %v2129 = vld [vmem:[%s728 + $0x8] sm:$0xff]
    %v2130 = vld [vmem:[%s728 + $0x10] sm:$0xff]
    %v2131 = vld [vmem:[%s728 + $0x18] sm:$0xff]
    %v2133 = vsel %vm89, %v2126, 0
    %v2136 = vsel %vm89, %v2127, 0
    %2138 = vmatprep.subr.mxu0 %v2129
    %2139 = vmatpush1.msra.mxu0 %v2128
    %2140 = vmatprep.subr.mxu0 %v2131
    %2141 = vmatpush1.msra.mxu0 %v2130
    %2142 = vmatprep.subr.mxu0 0.0
    %2143 = vmatpush1.msra.mxu0 0.0
    %2144 = vmatprep.subr.mxu0 0.0
    %2145 = vmatpush1.msra.mxu0 0.0
    %2146 = vmatprep.subr.mxu0 0.0
    %2147 = vmatpush1.msra.mxu0 0.0
    %2148 = vmatprep.subr.mxu0 0.0
    %2149 = vmatpush1.msra.mxu0 0.0
    %2150 = vmatprep.subr.mxu0 0.0
    %2151 = vmatpush1.msra.mxu0 0.0
    %2152 = vmatprep.subr.mxu0 0.0
    %2153 = vmatpush1.msra.mxu0 0.0
    %2154 = vmatprep.subr.mxu0 0.0
    %2155 = vmatpush1.msra.mxu0 0.0
    %2156 = vmatprep.subr.mxu0 0.0
    %2157 = vmatpush1.msra.mxu0 0.0
    %2158 = vmatprep.subr.mxu0 0.0
    %2159 = vmatpush1.msra.mxu0 0.0
    %2160 = vmatprep.subr.mxu0 0.0
    %2161 = vmatpush1.msra.mxu0 0.0
    %2162 = vmatprep.subr.mxu0 0.0
    %2163 = vmatpush1.msra.mxu0 0.0
    %2164 = vmatprep.subr.mxu0 0.0
    %2165 = vmatpush1.msra.mxu0 0.0
    %2166 = vmatprep.subr.mxu0 0.0
    %2167 = vmatpush1.msra.mxu0 0.0
    %2168 = vmatprep.subr.mxu0 0.0
    %2169 = vmatpush1.msra.mxu0 0.0
    %2170 = vmatprep.subr.mxu0 0.0
    %2171 = vmatpush1.msra.mxu0 0.0
    %2172 = vmatprep.subr.mxu0 0.0
    %2173 = vmatpush1.msra.mxu0 0.0
    %2174 = vmatprep.subr.mxu0 0.0
    %2175 = vmatpush1.msra.mxu0 0.0
    %2176 = vmatprep.subr.mxu0 0.0
    %2177 = vmatpush1.msra.mxu0 0.0
    %2178 = vmatprep.subr.mxu0 0.0
    %2179 = vmatpush1.msra.mxu0 0.0
    %2180 = vmatprep.subr.mxu0 0.0
    %2181 = vmatpush1.msra.mxu0 0.0
    %2182 = vmatprep.subr.mxu0 0.0
    %2183 = vmatpush1.msra.mxu0 0.0
    %2184 = vmatprep.subr.mxu0 0.0
    %2185 = vmatpush1.msra.mxu0 0.0
    %2186 = vmatprep.subr.mxu0 0.0
    %2187 = vmatpush1.msra.mxu0 0.0
    %2188 = vmatprep.subr.mxu0 0.0
    %2189 = vmatpush1.msra.mxu0 0.0
    %2190 = vmatprep.subr.mxu0 0.0
    %2191 = vmatpush1.msra.mxu0 0.0
    %2192 = vmatprep.subr.mxu0 0.0
    %2193 = vmatpush1.msra.mxu0 0.0
    %2194 = vmatprep.subr.mxu0 0.0
    %2195 = vmatpush1.msra.mxu0 0.0
    %2196 = vmatprep.subr.mxu0 0.0
    %2197 = vmatpush1.msra.mxu0 0.0
    %2198 = vmatprep.subr.mxu0 0.0
    %2199 = vmatpush1.msra.mxu0 0.0
    %2200 = vmatprep.subr.mxu0 0.0
    %2201 = vmatpush1.msra.mxu0 0.0
    %2202 = vmatprep.mubr.f32.mxu0 0.0
    %2203 = vmatmul.mubr.f32.gmra.mrb[0].mxu0 %v2133
    %v2204 = vpop.f32.mrb[0].mxu0
    %v2205 = vadd.f32 0.0, %v2204
    %v2206 = vpop.f32.mrb[0].mxu0
    %v2207 = vadd.f32 0.0, %v2206
    %2208 = vmatprep.mubr.f32.mxu0 0.0
    %2209 = vmatmul.mubr.f32.gmra.mrb[0].mxu0 %v2136
    %v2210 = vpop.f32.mrb[0].mxu0
    %v2211 = vadd.f32 0.0, %v2210
    %v2212 = vpop.f32.mrb[0].mxu0
    %v2213 = vadd.f32 0.0, %v2212
    %2214 = vdwg.mxu0
    %v2215 = vadd.f32 %v2122, %v2205
    %v2216 = vadd.f32 %v2123, %v2207
    %v2217 = vadd.f32 %v2124, %v2211
    %v2218 = vadd.f32 %v2125, %v2213
    %v2219 = vld [vmem:[#allocation4 + $0x52] sm:$0xff]
    %v2220 = vld [vmem:[#allocation4 + $0x5a] sm:$0x1f]
    %v2221 = vld [vmem:[%s822] sm:$0xff]
    %v2222 = vld [vmem:[%s822 + $0x8] sm:$0xff]
    %v2223 = vld [vmem:[%s822 + $0x10] sm:$0xff]
    %v2224 = vld [vmem:[%s822 + $0x18] sm:$0xff]
    %v2226 = vsel %vm89, %v2219, 0
    %v2229 = vsel %vm89, %v2220, 0
    %2231 = vmatprep.subr.mxu0 %v2222
    %2232 = vmatpush1.msra.mxu0 %v2221
    %2233 = vmatprep.subr.mxu0 %v2224
    %2234 = vmatpush1.msra.mxu0 %v2223
    %2235 = vmatprep.subr.mxu0 0.0
    %2236 = vmatpush1.msra.mxu0 0.0
    %2237 = vmatprep.subr.mxu0 0.0
    %2238 = vmatpush1.msra.mxu0 0.0
    %2239 = vmatprep.subr.mxu0 0.0
    %2240 = vmatpush1.msra.mxu0 0.0
    %2241 = vmatprep.subr.mxu0 0.0
    %2242 = vmatpush1.msra.mxu0 0.0
    %2243 = vmatprep.subr.mxu0 0.0
    %2244 = vmatpush1.msra.mxu0 0.0
    %2245 = vmatprep.subr.mxu0 0.0
    %2246 = vmatpush1.msra.mxu0 0.0
    %2247 = vmatprep.subr.mxu0 0.0
    %2248 = vmatpush1.msra.mxu0 0.0
    %2249 = vmatprep.subr.mxu0 0.0
    %2250 = vmatpush1.msra.mxu0 0.0
    %2251 = vmatprep.subr.mxu0 0.0
    %2252 = vmatpush1.msra.mxu0 0.0
    %2253 = vmatprep.subr.mxu0 0.0
    %2254 = vmatpush1.msra.mxu0 0.0
    %2255 = vmatprep.subr.mxu0 0.0
    %2256 = vmatpush1.msra.mxu0 0.0
    %2257 = vmatprep.subr.mxu0 0.0
    %2258 = vmatpush1.msra.mxu0 0.0
    %2259 = vmatprep.subr.mxu0 0.0
    %2260 = vmatpush1.msra.mxu0 0.0
    %2261 = vmatprep.subr.mxu0 0.0
    %2262 = vmatpush1.msra.mxu0 0.0
    %2263 = vmatprep.subr.mxu0 0.0
    %2264 = vmatpush1.msra.mxu0 0.0
    %2265 = vmatprep.subr.mxu0 0.0
    %2266 = vmatpush1.msra.mxu0 0.0
    %2267 = vmatprep.subr.mxu0 0.0
    %2268 = vmatpush1.msra.mxu0 0.0
    %2269 = vmatprep.subr.mxu0 0.0
    %2270 = vmatpush1.msra.mxu0 0.0
    %2271 = vmatprep.subr.mxu0 0.0
    %2272 = vmatpush1.msra.mxu0 0.0
    %2273 = vmatprep.subr.mxu0 0.0
    %2274 = vmatpush1.msra.mxu0 0.0
    %2275 = vmatprep.subr.mxu0 0.0
    %2276 = vmatpush1.msra.mxu0 0.0
    %2277 = vmatprep.subr.mxu0 0.0
    %2278 = vmatpush1.msra.mxu0 0.0
    %2279 = vmatprep.subr.mxu0 0.0
    %2280 = vmatpush1.msra.mxu0 0.0
    %2281 = vmatprep.subr.mxu0 0.0
    %2282 = vmatpush1.msra.mxu0 0.0
    %2283 = vmatprep.subr.mxu0 0.0
    %2284 = vmatpush1.msra.mxu0 0.0
    %2285 = vmatprep.subr.mxu0 0.0
    %2286 = vmatpush1.msra.mxu0 0.0
    %2287 = vmatprep.subr.mxu0 0.0
    %2288 = vmatpush1.msra.mxu0 0.0
    %2289 = vmatprep.subr.mxu0 0.0
    %2290 = vmatpush1.msra.mxu0 0.0
    %2291 = vmatprep.subr.mxu0 0.0
    %2292 = vmatpush1.msra.mxu0 0.0
    %2293 = vmatprep.subr.mxu0 0.0
    %2294 = vmatpush1.msra.mxu0 0.0
    %2295 = vmatprep.mubr.f32.mxu0 0.0
    %2296 = vmatmul.mubr.f32.gmra.mrb[0].mxu0 %v2226
    %v2297 = vpop.f32.mrb[0].mxu0
    %v2298 = vadd.f32 0.0, %v2297
    %v2299 = vpop.f32.mrb[0].mxu0
    %v2300 = vadd.f32 0.0, %v2299
    %2301 = vmatprep.mubr.f32.mxu0 0.0
    %2302 = vmatmul.mubr.f32.gmra.mrb[0].mxu0 %v2229
    %v2303 = vpop.f32.mrb[0].mxu0
    %v2304 = vadd.f32 0.0, %v2303
    %v2305 = vpop.f32.mrb[0].mxu0
    %v2306 = vadd.f32 0.0, %v2305
    %2307 = vdwg.mxu0
    %v2308 = vadd.f32 %v2215, %v2298
    %v2309 = vadd.f32 %v2216, %v2300
    %v2310 = vadd.f32 %v2217, %v2304
    %v2311 = vadd.f32 %v2218, %v2306
    %v2312 = vld [vmem:[#allocation4 + $0x33] sm:$0xff]
    %v2313 = vld [vmem:[#allocation4 + $0x3b] sm:$0x1f]
    %v2314 = vld [vmem:[%s916] sm:$0xff]
    %v2315 = vld [vmem:[%s916 + $0x8] sm:$0xff]
    %v2316 = vld [vmem:[%s916 + $0x10] sm:$0xff]
    %v2317 = vld [vmem:[%s916 + $0x18] sm:$0xff]
    %v2319 = vsel %vm89, %v2312, 0
    %v2322 = vsel %vm89, %v2313, 0
    %2324 = vmatprep.subr.mxu0 %v2315
    %2325 = vmatpush1.msra.mxu0 %v2314
    %2326 = vmatprep.subr.mxu0 %v2317
    %2327 = vmatpush1.msra.mxu0 %v2316
    %2328 = vmatprep.subr.mxu0 0.0
    %2329 = vmatpush1.msra.mxu0 0.0
    %2330 = vmatprep.subr.mxu0 0.0
    %2331 = vmatpush1.msra.mxu0 0.0
    %2332 = vmatprep.subr.mxu0 0.0
    %2333 = vmatpush1.msra.mxu0 0.0
    %2334 = vmatprep.subr.mxu0 0.0
    %2335 = vmatpush1.msra.mxu0 0.0
    %2336 = vmatprep.subr.mxu0 0.0
    %2337 = vmatpush1.msra.mxu0 0.0
    %2338 = vmatprep.subr.mxu0 0.0
    %2339 = vmatpush1.msra.mxu0 0.0
    %2340 = vmatprep.subr.mxu0 0.0
    %2341 = vmatpush1.msra.mxu0 0.0
    %2342 = vmatprep.subr.mxu0 0.0
    %2343 = vmatpush1.msra.mxu0 0.0
    %2344 = vmatprep.subr.mxu0 0.0
    %2345 = vmatpush1.msra.mxu0 0.0
    %2346 = vmatprep.subr.mxu0 0.0
    %2347 = vmatpush1.msra.mxu0 0.0
    %2348 = vmatprep.subr.mxu0 0.0
    %2349 = vmatpush1.msra.mxu0 0.0
    %2350 = vmatprep.subr.mxu0 0.0
    %2351 = vmatpush1.msra.mxu0 0.0
    %2352 = vmatprep.subr.mxu0 0.0
    %2353 = vmatpush1.msra.mxu0 0.0
    %2354 = vmatprep.subr.mxu0 0.0
    %2355 = vmatpush1.msra.mxu0 0.0
    %2356 = vmatprep.subr.mxu0 0.0
    %2357 = vmatpush1.msra.mxu0 0.0
    %2358 = vmatprep.subr.mxu0 0.0
    %2359 = vmatpush1.msra.mxu0 0.0
    %2360 = vmatprep.subr.mxu0 0.0
    %2361 = vmatpush1.msra.mxu0 0.0
    %2362 = vmatprep.subr.mxu0 0.0
    %2363 = vmatpush1.msra.mxu0 0.0
    %2364 = vmatprep.subr.mxu0 0.0
    %2365 = vmatpush1.msra.mxu0 0.0
    %2366 = vmatprep.subr.mxu0 0.0
    %2367 = vmatpush1.msra.mxu0 0.0
    %2368 = vmatprep.subr.mxu0 0.0
    %2369 = vmatpush1.msra.mxu0 0.0
    %2370 = vmatprep.subr.mxu0 0.0
    %2371 = vmatpush1.msra.mxu0 0.0
    %2372 = vmatprep.subr.mxu0 0.0
    %2373 = vmatpush1.msra.mxu0 0.0
    %2374 = vmatprep.subr.mxu0 0.0
    %2375 = vmatpush1.msra.mxu0 0.0
    %2376 = vmatprep.subr.mxu0 0.0
    %2377 = vmatpush1.msra.mxu0 0.0
    %2378 = vmatprep.subr.mxu0 0.0
    %2379 = vmatpush1.msra.mxu0 0.0
    %2380 = vmatprep.subr.mxu0 0.0
    %2381 = vmatpush1.msra.mxu0 0.0
    %2382 = vmatprep.subr.mxu0 0.0
    %2383 = vmatpush1.msra.mxu0 0.0
    %2384 = vmatprep.subr.mxu0 0.0
    %2385 = vmatpush1.msra.mxu0 0.0
    %2386 = vmatprep.subr.mxu0 0.0
    %2387 = vmatpush1.msra.mxu0 0.0
    %2388 = vmatprep.mubr.f32.mxu0 0.0
    %2389 = vmatmul.mubr.f32.gmra.mrb[0].mxu0 %v2319
    %v2390 = vpop.f32.mrb[0].mxu0
    %v2391 = vadd.f32 0.0, %v2390
    %v2392 = vpop.f32.mrb[0].mxu0
    %v2393 = vadd.f32 0.0, %v2392
    %2394 = vmatprep.mubr.f32.mxu0 0.0
    %2395 = vmatmul.mubr.f32.gmra.mrb[0].mxu0 %v2322
    %v2396 = vpop.f32.mrb[0].mxu0
    %v2397 = vadd.f32 0.0, %v2396
    %v2398 = vpop.f32.mrb[0].mxu0
    %v2399 = vadd.f32 0.0, %v2398
    %2400 = vdwg.mxu0
    %v2401 = vadd.f32 %v2308, %v2391
    %v2402 = vadd.f32 %v2309, %v2393
    %v2403 = vadd.f32 %v2310, %v2397
    %v2404 = vadd.f32 %v2311, %v2399
    %v2405 = vld [vmem:[#allocation4 + $0x43] sm:$0xff]
    %v2406 = vld [vmem:[#allocation4 + $0x4b] sm:$0x1f]
    %v2407 = vld [vmem:[%s1010] sm:$0xff]
    %v2408 = vld [vmem:[%s1010 + $0x8] sm:$0xff]
    %v2409 = vld [vmem:[%s1010 + $0x10] sm:$0xff]
    %v2410 = vld [vmem:[%s1010 + $0x18] sm:$0xff]
    %v2412 = vsel %vm89, %v2405, 0
    %v2415 = vsel %vm89, %v2406, 0
    %2417 = vmatprep.subr.mxu0 %v2408
    %2418 = vmatpush1.msra.mxu0 %v2407
    %2419 = vmatprep.subr.mxu0 %v2410
    %2420 = vmatpush1.msra.mxu0 %v2409
    %2421 = vmatprep.subr.mxu0 0.0
    %2422 = vmatpush1.msra.mxu0 0.0
    %2423 = vmatprep.subr.mxu0 0.0
    %2424 = vmatpush1.msra.mxu0 0.0
    %2425 = vmatprep.subr.mxu0 0.0
    %2426 = vmatpush1.msra.mxu0 0.0
    %2427 = vmatprep.subr.mxu0 0.0
    %2428 = vmatpush1.msra.mxu0 0.0
    %2429 = vmatprep.subr.mxu0 0.0
    %2430 = vmatpush1.msra.mxu0 0.0
    %2431 = vmatprep.subr.mxu0 0.0
    %2432 = vmatpush1.msra.mxu0 0.0
    %2433 = vmatprep.subr.mxu0 0.0
    %2434 = vmatpush1.msra.mxu0 0.0
    %2435 = vmatprep.subr.mxu0 0.0
    %2436 = vmatpush1.msra.mxu0 0.0
    %2437 = vmatprep.subr.mxu0 0.0
    %2438 = vmatpush1.msra.mxu0 0.0
    %2439 = vmatprep.subr.mxu0 0.0
    %2440 = vmatpush1.msra.mxu0 0.0
    %2441 = vmatprep.subr.mxu0 0.0
    %2442 = vmatpush1.msra.mxu0 0.0
    %2443 = vmatprep.subr.mxu0 0.0
    %2444 = vmatpush1.msra.mxu0 0.0
    %2445 = vmatprep.subr.mxu0 0.0
    %2446 = vmatpush1.msra.mxu0 0.0
    %2447 = vmatprep.subr.mxu0 0.0
    %2448 = vmatpush1.msra.mxu0 0.0
    %2449 = vmatprep.subr.mxu0 0.0
    %2450 = vmatpush1.msra.mxu0 0.0
    %2451 = vmatprep.subr.mxu0 0.0
    %2452 = vmatpush1.msra.mxu0 0.0
    %2453 = vmatprep.subr.mxu0 0.0
    %2454 = vmatpush1.msra.mxu0 0.0
    %2455 = vmatprep.subr.mxu0 0.0
    %2456 = vmatpush1.msra.mxu0 0.0
    %2457 = vmatprep.subr.mxu0 0.0
    %2458 = vmatpush1.msra.mxu0 0.0
    %2459 = vmatprep.subr.mxu0 0.0
    %2460 = vmatpush1.msra.mxu0 0.0
    %2461 = vmatprep.subr.mxu0 0.0
    %2462 = vmatpush1.msra.mxu0 0.0
    %2463 = vmatprep.subr.mxu0 0.0
    %2464 = vmatpush1.msra.mxu0 0.0
    %2465 = vmatprep.subr.mxu0 0.0
    %2466 = vmatpush1.msra.mxu0 0.0
    %2467 = vmatprep.subr.mxu0 0.0
    %2468 = vmatpush1.msra.mxu0 0.0
    %2469 = vmatprep.subr.mxu0 0.0
    %2470 = vmatpush1.msra.mxu0 0.0
    %2471 = vmatprep.subr.mxu0 0.0
    %2472 = vmatpush1.msra.mxu0 0.0
    %2473 = vmatprep.subr.mxu0 0.0
    %2474 = vmatpush1.msra.mxu0 0.0
    %2475 = vmatprep.subr.mxu0 0.0
    %2476 = vmatpush1.msra.mxu0 0.0
    %2477 = vmatprep.subr.mxu0 0.0
    %2478 = vmatpush1.msra.mxu0 0.0
    %2479 = vmatprep.subr.mxu0 0.0
    %2480 = vmatpush1.msra.mxu0 0.0
    %2481 = vmatprep.mubr.f32.mxu0 0.0
    %2482 = vmatmul.mubr.f32.gmra.mrb[0].mxu0 %v2412
    %v2483 = vpop.f32.mrb[0].mxu0
    %v2484 = vadd.f32 0.0, %v2483
    %v2485 = vpop.f32.mrb[0].mxu0
    %v2486 = vadd.f32 0.0, %v2485
    %2487 = vmatprep.mubr.f32.mxu0 0.0
    %2488 = vmatmul.mubr.f32.gmra.mrb[0].mxu0 %v2415
    %v2489 = vpop.f32.mrb[0].mxu0
    %v2490 = vadd.f32 0.0, %v2489
    %v2491 = vpop.f32.mrb[0].mxu0
    %v2492 = vadd.f32 0.0, %v2491
    %2493 = vdwg.mxu0
    %v2494 = vadd.f32 %v2401, %v2484
    %v2495 = vadd.f32 %v2402, %v2486
    %v2496 = vadd.f32 %v2403, %v2490
    %v2497 = vadd.f32 %v2404, %v2492
    %v2498 = vld [vmem:[#allocation4 + $0x53] sm:$0xff]
    %v2499 = vld [vmem:[#allocation4 + $0x5b] sm:$0x1f]
    %v2500 = vld [vmem:[%s1104] sm:$0xff]
    %v2501 = vld [vmem:[%s1104 + $0x8] sm:$0xff]
    %v2502 = vld [vmem:[%s1104 + $0x10] sm:$0xff]
    %v2503 = vld [vmem:[%s1104 + $0x18] sm:$0xff]
    %v2505 = vsel %vm89, %v2498, 0
    %v2508 = vsel %vm89, %v2499, 0
    %2510 = vmatprep.subr.mxu0 %v2501
    %2511 = vmatpush1.msra.mxu0 %v2500
    %2512 = vmatprep.subr.mxu0 %v2503
    %2513 = vmatpush1.msra.mxu0 %v2502
    %2514 = vmatprep.subr.mxu0 0.0
    %2515 = vmatpush1.msra.mxu0 0.0
    %2516 = vmatprep.subr.mxu0 0.0
    %2517 = vmatpush1.msra.mxu0 0.0
    %2518 = vmatprep.subr.mxu0 0.0
    %2519 = vmatpush1.msra.mxu0 0.0
    %2520 = vmatprep.subr.mxu0 0.0
    %2521 = vmatpush1.msra.mxu0 0.0
    %2522 = vmatprep.subr.mxu0 0.0
    %2523 = vmatpush1.msra.mxu0 0.0
    %2524 = vmatprep.subr.mxu0 0.0
    %2525 = vmatpush1.msra.mxu0 0.0
    %2526 = vmatprep.subr.mxu0 0.0
    %2527 = vmatpush1.msra.mxu0 0.0
    %2528 = vmatprep.subr.mxu0 0.0
    %2529 = vmatpush1.msra.mxu0 0.0
    %2530 = vmatprep.subr.mxu0 0.0
    %2531 = vmatpush1.msra.mxu0 0.0
    %2532 = vmatprep.subr.mxu0 0.0
    %2533 = vmatpush1.msra.mxu0 0.0
    %2534 = vmatprep.subr.mxu0 0.0
    %2535 = vmatpush1.msra.mxu0 0.0
    %2536 = vmatprep.subr.mxu0 0.0
    %2537 = vmatpush1.msra.mxu0 0.0
    %2538 = vmatprep.subr.mxu0 0.0
    %2539 = vmatpush1.msra.mxu0 0.0
    %2540 = vmatprep.subr.mxu0 0.0
    %2541 = vmatpush1.msra.mxu0 0.0
    %2542 = vmatprep.subr.mxu0 0.0
    %2543 = vmatpush1.msra.mxu0 0.0
    %2544 = vmatprep.subr.mxu0 0.0
    %2545 = vmatpush1.msra.mxu0 0.0
    %2546 = vmatprep.subr.mxu0 0.0
    %2547 = vmatpush1.msra.mxu0 0.0
    %2548 = vmatprep.subr.mxu0 0.0
    %2549 = vmatpush1.msra.mxu0 0.0
    %2550 = vmatprep.subr.mxu0 0.0
    %2551 = vmatpush1.msra.mxu0 0.0
    %2552 = vmatprep.subr.mxu0 0.0
    %2553 = vmatpush1.msra.mxu0 0.0
    %2554 = vmatprep.subr.mxu0 0.0
    %2555 = vmatpush1.msra.mxu0 0.0
    %2556 = vmatprep.subr.mxu0 0.0
    %2557 = vmatpush1.msra.mxu0 0.0
    %2558 = vmatprep.subr.mxu0 0.0
    %2559 = vmatpush1.msra.mxu0 0.0
    %2560 = vmatprep.subr.mxu0 0.0
    %2561 = vmatpush1.msra.mxu0 0.0
    %2562 = vmatprep.subr.mxu0 0.0
    %2563 = vmatpush1.msra.mxu0 0.0
    %2564 = vmatprep.subr.mxu0 0.0
    %2565 = vmatpush1.msra.mxu0 0.0
    %2566 = vmatprep.subr.mxu0 0.0
    %2567 = vmatpush1.msra.mxu0 0.0
    %2568 = vmatprep.subr.mxu0 0.0
    %2569 = vmatpush1.msra.mxu0 0.0
    %2570 = vmatprep.subr.mxu0 0.0
    %2571 = vmatpush1.msra.mxu0 0.0
    %2572 = vmatprep.subr.mxu0 0.0
    %2573 = vmatpush1.msra.mxu0 0.0
    %2574 = vmatprep.mubr.f32.mxu0 0.0
    %2575 = vmatmul.mubr.f32.gmra.mrb[0].mxu0 %v2505
    %v2576 = vpop.f32.mrb[0].mxu0
    %v2577 = vadd.f32 0.0, %v2576
    %v2578 = vpop.f32.mrb[0].mxu0
    %v2579 = vadd.f32 0.0, %v2578
    %2580 = vmatprep.mubr.f32.mxu0 0.0
    %2581 = vmatmul.mubr.f32.gmra.mrb[0].mxu0 %v2508
    %v2582 = vpop.f32.mrb[0].mxu0
    %v2583 = vadd.f32 0.0, %v2582
    %v2584 = vpop.f32.mrb[0].mxu0
    %v2585 = vadd.f32 0.0, %v2584
    %2586 = vdwg.mxu0
    %v2587 = vadd.f32 %v2494, %v2577
    %v2588 = vadd.f32 %v2495, %v2579
    %v2589 = vadd.f32 %v2496, %v2583
    %v2590 = vadd.f32 %v2497, %v2585
    %v2591 = vmax.f32 %v2587, %v2588
    %v2592 = vmax.f32 %v2589, %v2590
    %2593 = vst [vmem:[#allocation2] sm:$0xff] %v2591
    %2594 = vst [vmem:[#allocation2 + $0x8] sm:$0x1f] %v2592
    %v2595 = vld [vmem:[#allocation2] ss:$2 sm:$0x3f]
    %v2596 = vld [vmem:[%s1201] ss:$2 sm:$0x3f]
    %v2597 = vmax.f32 %v2595, %v2596
    %v2598 = vadd.f32 %v2597, %v1207
    %v2599 = vmax.f32 %v2598, 0.0
    %v2600 = vld [vmem:[#allocation8] sm:$0xff]
    %v2601 = vld [vmem:[#allocation8 + $0x8] sm:$0xff]
    %v2602 = vld [vmem:[#allocation8 + $0x10] sm:$0xff]
    %v2603 = vld [vmem:[#allocation8 + $0x18] sm:$0xff]
    %v2604 = vld [vmem:[#allocation8 + $0x20] sm:$0xff]
    %v2605 = vld [vmem:[#allocation8 + $0x28] sm:$0xff]
    %v2606 = vld [vmem:[#allocation8 + $0x30] sm:$0xff]
    %v2607 = vld [vmem:[#allocation8 + $0x38] sm:$0xff]
    %v2608 = vld [vmem:[#allocation8 + $0x40] sm:$0xff]
    %v2609 = vld [vmem:[#allocation8 + $0x48] sm:$0xff]
    %v2610 = vld [vmem:[#allocation8 + $0x50] sm:$0xff]
    %v2611 = vld [vmem:[#allocation8 + $0x58] sm:$0xff]
    %v2612 = vld [vmem:[#allocation8 + $0x60] sm:$0xff]
    %v2613 = vld [vmem:[#allocation8 + $0x68] sm:$0xff]
    %v2614 = vld [vmem:[#allocation8 + $0x70] sm:$0xff]
    %v2615 = vld [vmem:[#allocation8 + $0x78] sm:$0xff]
    %v2616 = vld [vmem:[%s1226] sm:$0xff]
    %v2617 = vld [vmem:[%s1226 + $0x8] sm:$0xff]
    %v2618 = vld [vmem:[%s1226 + $0x10] sm:$0xff]
    %v2619 = vld [vmem:[%s1226 + $0x18] sm:$0xff]
    %v2620 = vld [vmem:[%s1226 + $0x20] sm:$0xff]
    %v2621 = vld [vmem:[%s1226 + $0x28] sm:$0xff]
    %v2622 = vld [vmem:[%s1226 + $0x30] sm:$0xff]
    %v2623 = vld [vmem:[%s1226 + $0x38] sm:$0xff]
    %v2624 = vld [vmem:[%s1226 + $0x40] sm:$0xff]
    %v2625 = vld [vmem:[%s1226 + $0x48] sm:$0xff]
    %v2626 = vld [vmem:[%s1226 + $0x50] sm:$0xff]
    %v2627 = vld [vmem:[%s1226 + $0x58] sm:$0xff]
    %v2628 = vld [vmem:[%s1226 + $0x60] sm:$0xff]
    %v2629 = vld [vmem:[%s1226 + $0x68] sm:$0xff]
    %v2630 = vld [vmem:[%s1226 + $0x70] sm:$0xff]
    %v2631 = vld [vmem:[%s1226 + $0x78] sm:$0xff]
    %v2633 = vrot.slane %v2599, 1
    %2635 = vmatprep.subr.mxu0 0.0
    %2636 = vmatpush1.msra.mxu0 %v2616
    %2637 = vmatprep.subr.mxu0 0.0
    %2638 = vmatpush1.msra.mxu0 %v2617
    %2639 = vmatprep.subr.mxu0 0.0
    %2640 = vmatpush1.msra.mxu0 %v2618
    %2641 = vmatprep.subr.mxu0 0.0
    %2642 = vmatpush1.msra.mxu0 %v2619
    %2643 = vmatprep.subr.mxu0 0.0
    %2644 = vmatpush1.msra.mxu0 %v2620
    %2645 = vmatprep.subr.mxu0 0.0
    %2646 = vmatpush1.msra.mxu0 %v2621
    %2647 = vmatprep.subr.mxu0 0.0
    %2648 = vmatpush1.msra.mxu0 %v2622
    %2649 = vmatprep.subr.mxu0 0.0
    %2650 = vmatpush1.msra.mxu0 %v2623
    %2651 = vmatprep.subr.mxu0 0.0
    %2652 = vmatpush1.msra.mxu0 %v2624
    %2653 = vmatprep.subr.mxu0 0.0
    %2654 = vmatpush1.msra.mxu0 %v2625
    %2655 = vmatprep.subr.mxu0 0.0
    %2656 = vmatpush1.msra.mxu0 %v2626
    %2657 = vmatprep.subr.mxu0 0.0
    %2658 = vmatpush1.msra.mxu0 %v2627
    %2659 = vmatprep.subr.mxu0 0.0
    %2660 = vmatpush1.msra.mxu0 %v2628
    %2661 = vmatprep.subr.mxu0 0.0
    %2662 = vmatpush1.msra.mxu0 %v2629
    %2663 = vmatprep.subr.mxu0 0.0
    %2664 = vmatpush1.msra.mxu0 %v2630
    %2665 = vmatprep.subr.mxu0 0.0
    %2666 = vmatpush1.msra.mxu0 %v2631
    %2667 = vmatprep.subr.mxu0 0.0
    %2668 = vmatpush1.msra.mxu0 0.0
    %2669 = vmatprep.subr.mxu0 0.0
    %2670 = vmatpush1.msra.mxu0 0.0
    %2671 = vmatprep.subr.mxu0 0.0
    %2672 = vmatpush1.msra.mxu0 0.0
    %2673 = vmatprep.subr.mxu0 0.0
    %2674 = vmatpush1.msra.mxu0 0.0
    %2675 = vmatprep.subr.mxu0 0.0
    %2676 = vmatpush1.msra.mxu0 0.0
    %2677 = vmatprep.subr.mxu0 0.0
    %2678 = vmatpush1.msra.mxu0 0.0
    %2679 = vmatprep.subr.mxu0 0.0
    %2680 = vmatpush1.msra.mxu0 0.0
    %2681 = vmatprep.subr.mxu0 0.0
    %2682 = vmatpush1.msra.mxu0 0.0
    %2683 = vmatprep.subr.mxu0 0.0
    %2684 = vmatpush1.msra.mxu0 0.0
    %2685 = vmatprep.subr.mxu0 0.0
    %2686 = vmatpush1.msra.mxu0 0.0
    %2687 = vmatprep.subr.mxu0 0.0
    %2688 = vmatpush1.msra.mxu0 0.0
    %2689 = vmatprep.subr.mxu0 0.0
    %2690 = vmatpush1.msra.mxu0 0.0
    %2691 = vmatprep.subr.mxu0 0.0
    %2692 = vmatpush1.msra.mxu0 0.0
    %2693 = vmatprep.subr.mxu0 0.0
    %2694 = vmatpush1.msra.mxu0 0.0
    %2695 = vmatprep.subr.mxu0 0.0
    %2696 = vmatpush1.msra.mxu0 0.0
    %2697 = vmatprep.subr.mxu0 0.0
    %2698 = vmatpush1.msra.mxu0 0.0
    %2699 = vmatprep.mubr.f32.mxu0 0.0
    %2700 = vmatmul.mubr.f32.gmra.mrb[0].mxu0 %v2633
    %v2701 = vpop.f32.mrb[0].mxu0
    %v2702 = vadd.f32 0.0, %v2701
    %v2703 = vpop.f32.mrb[0].mxu0
    %2704 = vdwg.mxu0
    %2705 = vmatprep.subr.mxu0 0.0
    %2706 = vmatpush1.msra.mxu0 %v2600
    %2707 = vmatprep.subr.mxu0 0.0
    %2708 = vmatpush1.msra.mxu0 %v2601
    %2709 = vmatprep.subr.mxu0 0.0
    %2710 = vmatpush1.msra.mxu0 %v2602
    %2711 = vmatprep.subr.mxu0 0.0
    %2712 = vmatpush1.msra.mxu0 %v2603
    %2713 = vmatprep.subr.mxu0 0.0
    %2714 = vmatpush1.msra.mxu0 %v2604
    %2715 = vmatprep.subr.mxu0 0.0
    %2716 = vmatpush1.msra.mxu0 %v2605
    %2717 = vmatprep.subr.mxu0 0.0
    %2718 = vmatpush1.msra.mxu0 %v2606
    %2719 = vmatprep.subr.mxu0 0.0
    %2720 = vmatpush1.msra.mxu0 %v2607
    %2721 = vmatprep.subr.mxu0 0.0
    %2722 = vmatpush1.msra.mxu0 %v2608
    %2723 = vmatprep.subr.mxu0 0.0
    %2724 = vmatpush1.msra.mxu0 %v2609
    %2725 = vmatprep.subr.mxu0 0.0
    %2726 = vmatpush1.msra.mxu0 %v2610
    %2727 = vmatprep.subr.mxu0 0.0
    %2728 = vmatpush1.msra.mxu0 %v2611
    %2729 = vmatprep.subr.mxu0 0.0
    %2730 = vmatpush1.msra.mxu0 %v2612
    %2731 = vmatprep.subr.mxu0 0.0
    %2732 = vmatpush1.msra.mxu0 %v2613
    %2733 = vmatprep.subr.mxu0 0.0
    %2734 = vmatpush1.msra.mxu0 %v2614
    %2735 = vmatprep.subr.mxu0 0.0
    %2736 = vmatpush1.msra.mxu0 %v2615
    %2737 = vmatprep.subr.mxu0 0.0
    %2738 = vmatpush1.msra.mxu0 0.0
    %2739 = vmatprep.subr.mxu0 0.0
    %2740 = vmatpush1.msra.mxu0 0.0
    %2741 = vmatprep.subr.mxu0 0.0
    %2742 = vmatpush1.msra.mxu0 0.0
    %2743 = vmatprep.subr.mxu0 0.0
    %2744 = vmatpush1.msra.mxu0 0.0
    %2745 = vmatprep.subr.mxu0 0.0
    %2746 = vmatpush1.msra.mxu0 0.0
    %2747 = vmatprep.subr.mxu0 0.0
    %2748 = vmatpush1.msra.mxu0 0.0
    %2749 = vmatprep.subr.mxu0 0.0
    %2750 = vmatpush1.msra.mxu0 0.0
    %2751 = vmatprep.subr.mxu0 0.0
    %2752 = vmatpush1.msra.mxu0 0.0
    %2753 = vmatprep.subr.mxu0 0.0
    %2754 = vmatpush1.msra.mxu0 0.0
    %2755 = vmatprep.subr.mxu0 0.0
    %2756 = vmatpush1.msra.mxu0 0.0
    %2757 = vmatprep.subr.mxu0 0.0
    %2758 = vmatpush1.msra.mxu0 0.0
    %2759 = vmatprep.subr.mxu0 0.0
    %2760 = vmatpush1.msra.mxu0 0.0
    %2761 = vmatprep.subr.mxu0 0.0
    %2762 = vmatpush1.msra.mxu0 0.0
    %2763 = vmatprep.subr.mxu0 0.0
    %2764 = vmatpush1.msra.mxu0 0.0
    %2765 = vmatprep.subr.mxu0 0.0
    %2766 = vmatpush1.msra.mxu0 0.0
    %2767 = vmatprep.subr.mxu0 0.0
    %2768 = vmatpush1.msra.mxu0 0.0
    %2769 = vmatprep.mubr.f32.mxu0 0.0
    %2770 = vmatmul.mubr.f32.gmra.mrb[0].mxu0 %v2599
    %v2771 = vpop.f32.mrb[0].mxu0
    %v2772 = vadd.f32 %v2702, %v2771
    %v2773 = vpop.f32.mrb[0].mxu0
    %2774 = vdwg.mxu0
    %v2775 = vld [vmem:[%s1386] sm:$0xff]
    %v2776 = vld [vmem:[%s1386 + $0x8] sm:$0xff]
    %v2777 = vld [vmem:[%s1386 + $0x10] sm:$0xff]
    %v2778 = vld [vmem:[%s1386 + $0x18] sm:$0xff]
    %v2779 = vld [vmem:[%s1386 + $0x20] sm:$0xff]
    %v2780 = vld [vmem:[%s1386 + $0x28] sm:$0xff]
    %v2781 = vld [vmem:[%s1386 + $0x30] sm:$0xff]
    %v2782 = vld [vmem:[%s1386 + $0x38] sm:$0xff]
    %v2783 = vld [vmem:[%s1386 + $0x40] sm:$0xff]
    %v2784 = vld [vmem:[%s1386 + $0x48] sm:$0xff]
    %v2785 = vld [vmem:[%s1386 + $0x50] sm:$0xff]
    %v2786 = vld [vmem:[%s1386 + $0x58] sm:$0xff]
    %v2787 = vld [vmem:[%s1386 + $0x60] sm:$0xff]
    %v2788 = vld [vmem:[%s1386 + $0x68] sm:$0xff]
    %v2789 = vld [vmem:[%s1386 + $0x70] sm:$0xff]
    %v2790 = vld [vmem:[%s1386 + $0x78] sm:$0xff]
    %v2791 = vrot.slane %v2599, 2
    %2793 = vmatprep.subr.mxu0 0.0
    %2794 = vmatpush1.msra.mxu0 %v2775
    %2795 = vmatprep.subr.mxu0 0.0
    %2796 = vmatpush1.msra.mxu0 %v2776
    %2797 = vmatprep.subr.mxu0 0.0
    %2798 = vmatpush1.msra.mxu0 %v2777
    %2799 = vmatprep.subr.mxu0 0.0
    %2800 = vmatpush1.msra.mxu0 %v2778
    %2801 = vmatprep.subr.mxu0 0.0
    %2802 = vmatpush1.msra.mxu0 %v2779
    %2803 = vmatprep.subr.mxu0 0.0
    %2804 = vmatpush1.msra.mxu0 %v2780
    %2805 = vmatprep.subr.mxu0 0.0
    %2806 = vmatpush1.msra.mxu0 %v2781
    %2807 = vmatprep.subr.mxu0 0.0
    %2808 = vmatpush1.msra.mxu0 %v2782
    %2809 = vmatprep.subr.mxu0 0.0
    %2810 = vmatpush1.msra.mxu0 %v2783
    %2811 = vmatprep.subr.mxu0 0.0
    %2812 = vmatpush1.msra.mxu0 %v2784
    %2813 = vmatprep.subr.mxu0 0.0
    %2814 = vmatpush1.msra.mxu0 %v2785
    %2815 = vmatprep.subr.mxu0 0.0
    %2816 = vmatpush1.msra.mxu0 %v2786
    %2817 = vmatprep.subr.mxu0 0.0
    %2818 = vmatpush1.msra.mxu0 %v2787
    %2819 = vmatprep.subr.mxu0 0.0
    %2820 = vmatpush1.msra.mxu0 %v2788
    %2821 = vmatprep.subr.mxu0 0.0
    %2822 = vmatpush1.msra.mxu0 %v2789
    %2823 = vmatprep.subr.mxu0 0.0
    %2824 = vmatpush1.msra.mxu0 %v2790
    %2825 = vmatprep.subr.mxu0 0.0
    %2826 = vmatpush1.msra.mxu0 0.0
    %2827 = vmatprep.subr.mxu0 0.0
    %2828 = vmatpush1.msra.mxu0 0.0
    %2829 = vmatprep.subr.mxu0 0.0
    %2830 = vmatpush1.msra.mxu0 0.0
    %2831 = vmatprep.subr.mxu0 0.0
    %2832 = vmatpush1.msra.mxu0 0.0
    %2833 = vmatprep.subr.mxu0 0.0
    %2834 = vmatpush1.msra.mxu0 0.0
    %2835 = vmatprep.subr.mxu0 0.0
    %2836 = vmatpush1.msra.mxu0 0.0
    %2837 = vmatprep.subr.mxu0 0.0
    %2838 = vmatpush1.msra.mxu0 0.0
    %2839 = vmatprep.subr.mxu0 0.0
    %2840 = vmatpush1.msra.mxu0 0.0
    %2841 = vmatprep.subr.mxu0 0.0
    %2842 = vmatpush1.msra.mxu0 0.0
    %2843 = vmatprep.subr.mxu0 0.0
    %2844 = vmatpush1.msra.mxu0 0.0
    %2845 = vmatprep.subr.mxu0 0.0
    %2846 = vmatpush1.msra.mxu0 0.0
    %2847 = vmatprep.subr.mxu0 0.0
    %2848 = vmatpush1.msra.mxu0 0.0
    %2849 = vmatprep.subr.mxu0 0.0
    %2850 = vmatpush1.msra.mxu0 0.0
    %2851 = vmatprep.subr.mxu0 0.0
    %2852 = vmatpush1.msra.mxu0 0.0
    %2853 = vmatprep.subr.mxu0 0.0
    %2854 = vmatpush1.msra.mxu0 0.0
    %2855 = vmatprep.subr.mxu0 0.0
    %2856 = vmatpush1.msra.mxu0 0.0
    %2857 = vmatprep.mubr.f32.mxu0 0.0
    %2858 = vmatmul.mubr.f32.gmra.mrb[0].mxu0 %v2791
    %v2859 = vpop.f32.mrb[0].mxu0
    %v2860 = vadd.f32 0.0, %v2859
    %v2861 = vpop.f32.mrb[0].mxu0
    %2862 = vdwg.mxu0
    %v2863 = vadd.f32 %v2772, %v2860
    %v2864 = vadd.f32 %v2863, %v1479
    %v2865 = vmax.f32 %v2864, 0.0
    %2866 = vst [vmem:[#allocation3 + $0x4] sm:$0xf] %v2865
    %v2867 = vld [vmem:[#allocation3] ss:$4 sm:$0x3]
    %s2868 = scalar_lea.vmem [#allocation8], 384
    %v2869 = vld [vmem:[%s2868] sm:$0xff]
    %v2870 = vld [vmem:[%s2868 + $0x8] sm:$0xff]
    %v2871 = vld [vmem:[%s2868 + $0x10] sm:$0xff]
    %v2872 = vld [vmem:[%s2868 + $0x18] sm:$0xff]
    %v2873 = vld [vmem:[%s2868 + $0x20] sm:$0xff]
    %v2874 = vld [vmem:[%s2868 + $0x28] sm:$0xff]
    %v2875 = vld [vmem:[%s2868 + $0x30] sm:$0xff]
    %v2876 = vld [vmem:[%s2868 + $0x38] sm:$0xff]
    %v2877 = vld [vmem:[%s2868 + $0x40] sm:$0xff]
    %v2878 = vld [vmem:[%s2868 + $0x48] sm:$0xff]
    %v2879 = vld [vmem:[%s2868 + $0x50] sm:$0xff]
    %v2880 = vld [vmem:[%s2868 + $0x58] sm:$0xff]
    %v2881 = vld [vmem:[%s2868 + $0x60] sm:$0xff]
    %v2882 = vld [vmem:[%s2868 + $0x68] sm:$0xff]
    %v2883 = vld [vmem:[%s2868 + $0x70] sm:$0xff]
    %v2884 = vld [vmem:[%s2868 + $0x78] sm:$0xff]
    %s2885 = scalar_lea.vmem [#allocation3], 1
    %v2886 = vld [vmem:[%s2885] ss:$4 sm:$0x3]
    %s2887 = scalar_lea.vmem [#allocation8], 512
    %v2888 = vld [vmem:[%s2887] sm:$0xff]
    %v2889 = vld [vmem:[%s2887 + $0x8] sm:$0xff]
    %v2890 = vld [vmem:[%s2887 + $0x10] sm:$0xff]
    %v2891 = vld [vmem:[%s2887 + $0x18] sm:$0xff]
    %v2892 = vld [vmem:[%s2887 + $0x20] sm:$0xff]
    %v2893 = vld [vmem:[%s2887 + $0x28] sm:$0xff]
    %v2894 = vld [vmem:[%s2887 + $0x30] sm:$0xff]
    %v2895 = vld [vmem:[%s2887 + $0x38] sm:$0xff]
    %v2896 = vld [vmem:[%s2887 + $0x40] sm:$0xff]
    %v2897 = vld [vmem:[%s2887 + $0x48] sm:$0xff]
    %v2898 = vld [vmem:[%s2887 + $0x50] sm:$0xff]
    %v2899 = vld [vmem:[%s2887 + $0x58] sm:$0xff]
    %v2900 = vld [vmem:[%s2887 + $0x60] sm:$0xff]
    %v2901 = vld [vmem:[%s2887 + $0x68] sm:$0xff]
    %v2902 = vld [vmem:[%s2887 + $0x70] sm:$0xff]
    %v2903 = vld [vmem:[%s2887 + $0x78] sm:$0xff]
    %2904 = vmatprep.subr.mxu0 0.0
    %2905 = vmatpush1.msra.mxu0 %v2888
    %2906 = vmatprep.subr.mxu0 0.0
    %2907 = vmatpush1.msra.mxu0 %v2889
    %2908 = vmatprep.subr.mxu0 0.0
    %2909 = vmatpush1.msra.mxu0 %v2890
    %2910 = vmatprep.subr.mxu0 0.0
    %2911 = vmatpush1.msra.mxu0 %v2891
    %2912 = vmatprep.subr.mxu0 0.0
    %2913 = vmatpush1.msra.mxu0 %v2892
    %2914 = vmatprep.subr.mxu0 0.0
    %2915 = vmatpush1.msra.mxu0 %v2893
    %2916 = vmatprep.subr.mxu0 0.0
    %2917 = vmatpush1.msra.mxu0 %v2894
    %2918 = vmatprep.subr.mxu0 0.0
    %2919 = vmatpush1.msra.mxu0 %v2895
    %2920 = vmatprep.subr.mxu0 0.0
    %2921 = vmatpush1.msra.mxu0 %v2896
    %2922 = vmatprep.subr.mxu0 0.0
    %2923 = vmatpush1.msra.mxu0 %v2897
    %2924 = vmatprep.subr.mxu0 0.0
    %2925 = vmatpush1.msra.mxu0 %v2898
    %2926 = vmatprep.subr.mxu0 0.0
    %2927 = vmatpush1.msra.mxu0 %v2899
    %2928 = vmatprep.subr.mxu0 0.0
    %2929 = vmatpush1.msra.mxu0 %v2900
    %2930 = vmatprep.subr.mxu0 0.0
    %2931 = vmatpush1.msra.mxu0 %v2901
    %2932 = vmatprep.subr.mxu0 0.0
    %2933 = vmatpush1.msra.mxu0 %v2902
    %2934 = vmatprep.subr.mxu0 0.0
    %2935 = vmatpush1.msra.mxu0 %v2903
    %2936 = vmatprep.subr.mxu0 0.0
    %2937 = vmatpush1.msra.mxu0 0.0
    %2938 = vmatprep.subr.mxu0 0.0
    %2939 = vmatpush1.msra.mxu0 0.0
    %2940 = vmatprep.subr.mxu0 0.0
    %2941 = vmatpush1.msra.mxu0 0.0
    %2942 = vmatprep.subr.mxu0 0.0
    %2943 = vmatpush1.msra.mxu0 0.0
    %2944 = vmatprep.subr.mxu0 0.0
    %2945 = vmatpush1.msra.mxu0 0.0
    %2946 = vmatprep.subr.mxu0 0.0
    %2947 = vmatpush1.msra.mxu0 0.0
    %2948 = vmatprep.subr.mxu0 0.0
    %2949 = vmatpush1.msra.mxu0 0.0
    %2950 = vmatprep.subr.mxu0 0.0
    %2951 = vmatpush1.msra.mxu0 0.0
    %2952 = vmatprep.subr.mxu0 0.0
    %2953 = vmatpush1.msra.mxu0 0.0
    %2954 = vmatprep.subr.mxu0 0.0
    %2955 = vmatpush1.msra.mxu0 0.0
    %2956 = vmatprep.subr.mxu0 0.0
    %2957 = vmatpush1.msra.mxu0 0.0
    %2958 = vmatprep.subr.mxu0 0.0
    %2959 = vmatpush1.msra.mxu0 0.0
    %2960 = vmatprep.subr.mxu0 0.0
    %2961 = vmatpush1.msra.mxu0 0.0
    %2962 = vmatprep.subr.mxu0 0.0
    %2963 = vmatpush1.msra.mxu0 0.0
    %2964 = vmatprep.subr.mxu0 0.0
    %2965 = vmatpush1.msra.mxu0 0.0
    %2966 = vmatprep.subr.mxu0 0.0
    %2967 = vmatpush1.msra.mxu0 0.0
    %2968 = vmatprep.mubr.f32.mxu0 0.0
    %2969 = vmatmul.mubr.f32.gmra.mrb[0].mxu0 %v2886
    %v2970 = vpop.f32.mrb[0].mxu0
    %v2971 = vadd.f32 0.0, %v2970
    %v2972 = vpop.f32.mrb[0].mxu0
    %2973 = vdwg.mxu0
    %2974 = vmatprep.subr.mxu0 0.0
    %2975 = vmatpush1.msra.mxu0 %v2869
    %2976 = vmatprep.subr.mxu0 0.0
    %2977 = vmatpush1.msra.mxu0 %v2870
    %2978 = vmatprep.subr.mxu0 0.0
    %2979 = vmatpush1.msra.mxu0 %v2871
    %2980 = vmatprep.subr.mxu0 0.0
    %2981 = vmatpush1.msra.mxu0 %v2872
    %2982 = vmatprep.subr.mxu0 0.0
    %2983 = vmatpush1.msra.mxu0 %v2873
    %2984 = vmatprep.subr.mxu0 0.0
    %2985 = vmatpush1.msra.mxu0 %v2874
    %2986 = vmatprep.subr.mxu0 0.0
    %2987 = vmatpush1.msra.mxu0 %v2875
    %2988 = vmatprep.subr.mxu0 0.0
    %2989 = vmatpush1.msra.mxu0 %v2876
    %2990 = vmatprep.subr.mxu0 0.0
    %2991 = vmatpush1.msra.mxu0 %v2877
    %2992 = vmatprep.subr.mxu0 0.0
    %2993 = vmatpush1.msra.mxu0 %v2878
    %2994 = vmatprep.subr.mxu0 0.0
    %2995 = vmatpush1.msra.mxu0 %v2879
    %2996 = vmatprep.subr.mxu0 0.0
    %2997 = vmatpush1.msra.mxu0 %v2880
    %2998 = vmatprep.subr.mxu0 0.0
    %2999 = vmatpush1.msra.mxu0 %v2881
    %3000 = vmatprep.subr.mxu0 0.0
    %3001 = vmatpush1.msra.mxu0 %v2882
    %3002 = vmatprep.subr.mxu0 0.0
    %3003 = vmatpush1.msra.mxu0 %v2883
    %3004 = vmatprep.subr.mxu0 0.0
    %3005 = vmatpush1.msra.mxu0 %v2884
    %3006 = vmatprep.subr.mxu0 0.0
    %3007 = vmatpush1.msra.mxu0 0.0
    %3008 = vmatprep.subr.mxu0 0.0
    %3009 = vmatpush1.msra.mxu0 0.0
    %3010 = vmatprep.subr.mxu0 0.0
    %3011 = vmatpush1.msra.mxu0 0.0
    %3012 = vmatprep.subr.mxu0 0.0
    %3013 = vmatpush1.msra.mxu0 0.0
    %3014 = vmatprep.subr.mxu0 0.0
    %3015 = vmatpush1.msra.mxu0 0.0
    %3016 = vmatprep.subr.mxu0 0.0
    %3017 = vmatpush1.msra.mxu0 0.0
    %3018 = vmatprep.subr.mxu0 0.0
    %3019 = vmatpush1.msra.mxu0 0.0
    %3020 = vmatprep.subr.mxu0 0.0
    %3021 = vmatpush1.msra.mxu0 0.0
    %3022 = vmatprep.subr.mxu0 0.0
    %3023 = vmatpush1.msra.mxu0 0.0
    %3024 = vmatprep.subr.mxu0 0.0
    %3025 = vmatpush1.msra.mxu0 0.0
    %3026 = vmatprep.subr.mxu0 0.0
    %3027 = vmatpush1.msra.mxu0 0.0
    %3028 = vmatprep.subr.mxu0 0.0
    %3029 = vmatpush1.msra.mxu0 0.0
    %3030 = vmatprep.subr.mxu0 0.0
    %3031 = vmatpush1.msra.mxu0 0.0
    %3032 = vmatprep.subr.mxu0 0.0
    %3033 = vmatpush1.msra.mxu0 0.0
    %3034 = vmatprep.subr.mxu0 0.0
    %3035 = vmatpush1.msra.mxu0 0.0
    %3036 = vmatprep.subr.mxu0 0.0
    %3037 = vmatpush1.msra.mxu0 0.0
    %3038 = vmatprep.mubr.f32.mxu0 0.0
    %3039 = vmatmul.mubr.f32.gmra.mrb[0].mxu0 %v2867
    %v3040 = vpop.f32.mrb[0].mxu0
    %v3041 = vadd.f32 %v2971, %v3040
    %v3042 = vpop.f32.mrb[0].mxu0
    %3043 = vdwg.mxu0
    %s3044 = scalar_lea.vmem [#allocation3], 2
    %v3045 = vld [vmem:[%s3044] ss:$4 sm:$0x3]
    %s3046 = scalar_lea.vmem [#allocation8], 640
    %v3047 = vld [vmem:[%s3046] sm:$0xff]
    %v3048 = vld [vmem:[%s3046 + $0x8] sm:$0xff]
    %v3049 = vld [vmem:[%s3046 + $0x10] sm:$0xff]
    %v3050 = vld [vmem:[%s3046 + $0x18] sm:$0xff]
    %v3051 = vld [vmem:[%s3046 + $0x20] sm:$0xff]
    %v3052 = vld [vmem:[%s3046 + $0x28] sm:$0xff]
    %v3053 = vld [vmem:[%s3046 + $0x30] sm:$0xff]
    %v3054 = vld [vmem:[%s3046 + $0x38] sm:$0xff]
    %v3055 = vld [vmem:[%s3046 + $0x40] sm:$0xff]
    %v3056 = vld [vmem:[%s3046 + $0x48] sm:$0xff]
    %v3057 = vld [vmem:[%s3046 + $0x50] sm:$0xff]
    %v3058 = vld [vmem:[%s3046 + $0x58] sm:$0xff]
    %v3059 = vld [vmem:[%s3046 + $0x60] sm:$0xff]
    %v3060 = vld [vmem:[%s3046 + $0x68] sm:$0xff]
    %v3061 = vld [vmem:[%s3046 + $0x70] sm:$0xff]
    %v3062 = vld [vmem:[%s3046 + $0x78] sm:$0xff]
    %3063 = vmatprep.subr.mxu0 0.0
    %3064 = vmatpush1.msra.mxu0 %v3047
    %3065 = vmatprep.subr.mxu0 0.0
    %3066 = vmatpush1.msra.mxu0 %v3048
    %3067 = vmatprep.subr.mxu0 0.0
    %3068 = vmatpush1.msra.mxu0 %v3049
    %3069 = vmatprep.subr.mxu0 0.0
    %3070 = vmatpush1.msra.mxu0 %v3050
    %3071 = vmatprep.subr.mxu0 0.0
    %3072 = vmatpush1.msra.mxu0 %v3051
    %3073 = vmatprep.subr.mxu0 0.0
    %3074 = vmatpush1.msra.mxu0 %v3052
    %3075 = vmatprep.subr.mxu0 0.0
    %3076 = vmatpush1.msra.mxu0 %v3053
    %3077 = vmatprep.subr.mxu0 0.0
    %3078 = vmatpush1.msra.mxu0 %v3054
    %3079 = vmatprep.subr.mxu0 0.0
    %3080 = vmatpush1.msra.mxu0 %v3055
    %3081 = vmatprep.subr.mxu0 0.0
    %3082 = vmatpush1.msra.mxu0 %v3056
    %3083 = vmatprep.subr.mxu0 0.0
    %3084 = vmatpush1.msra.mxu0 %v3057
    %3085 = vmatprep.subr.mxu0 0.0
    %3086 = vmatpush1.msra.mxu0 %v3058
    %3087 = vmatprep.subr.mxu0 0.0
    %3088 = vmatpush1.msra.mxu0 %v3059
    %3089 = vmatprep.subr.mxu0 0.0
    %3090 = vmatpush1.msra.mxu0 %v3060
    %3091 = vmatprep.subr.mxu0 0.0
    %3092 = vmatpush1.msra.mxu0 %v3061
    %3093 = vmatprep.subr.mxu0 0.0
    %3094 = vmatpush1.msra.mxu0 %v3062
    %3095 = vmatprep.subr.mxu0 0.0
    %3096 = vmatpush1.msra.mxu0 0.0
    %3097 = vmatprep.subr.mxu0 0.0
    %3098 = vmatpush1.msra.mxu0 0.0
    %3099 = vmatprep.subr.mxu0 0.0
    %3100 = vmatpush1.msra.mxu0 0.0
    %3101 = vmatprep.subr.mxu0 0.0
    %3102 = vmatpush1.msra.mxu0 0.0
    %3103 = vmatprep.subr.mxu0 0.0
    %3104 = vmatpush1.msra.mxu0 0.0
    %3105 = vmatprep.subr.mxu0 0.0
    %3106 = vmatpush1.msra.mxu0 0.0
    %3107 = vmatprep.subr.mxu0 0.0
    %3108 = vmatpush1.msra.mxu0 0.0
    %3109 = vmatprep.subr.mxu0 0.0
    %3110 = vmatpush1.msra.mxu0 0.0
    %3111 = vmatprep.subr.mxu0 0.0
    %3112 = vmatpush1.msra.mxu0 0.0
    %3113 = vmatprep.subr.mxu0 0.0
    %3114 = vmatpush1.msra.mxu0 0.0
    %3115 = vmatprep.subr.mxu0 0.0
    %3116 = vmatpush1.msra.mxu0 0.0
    %3117 = vmatprep.subr.mxu0 0.0
    %3118 = vmatpush1.msra.mxu0 0.0
    %3119 = vmatprep.subr.mxu0 0.0
    %3120 = vmatpush1.msra.mxu0 0.0
    %3121 = vmatprep.subr.mxu0 0.0
    %3122 = vmatpush1.msra.mxu0 0.0
    %3123 = vmatprep.subr.mxu0 0.0
    %3124 = vmatpush1.msra.mxu0 0.0
    %3125 = vmatprep.subr.mxu0 0.0
    %3126 = vmatpush1.msra.mxu0 0.0
    %3127 = vmatprep.mubr.f32.mxu0 0.0
    %3128 = vmatmul.mubr.f32.gmra.mrb[0].mxu0 %v3045
    %v3129 = vpop.f32.mrb[0].mxu0
    %v3130 = vadd.f32 0.0, %v3129
    %v3131 = vpop.f32.mrb[0].mxu0
    %3132 = vdwg.mxu0
    %v3133 = vadd.f32 %v3041, %v3130
    %s3134 = scalar_lea.vmem [#allocation3], 3
    %v3135 = vld [vmem:[%s3134] ss:$4 sm:$0x3]
    %s3136 = scalar_lea.vmem [#allocation8], 768
    %v3137 = vld [vmem:[%s3136] sm:$0xff]
    %v3138 = vld [vmem:[%s3136 + $0x8] sm:$0xff]
    %v3139 = vld [vmem:[%s3136 + $0x10] sm:$0xff]
    %v3140 = vld [vmem:[%s3136 + $0x18] sm:$0xff]
    %v3141 = vld [vmem:[%s3136 + $0x20] sm:$0xff]
    %v3142 = vld [vmem:[%s3136 + $0x28] sm:$0xff]
    %v3143 = vld [vmem:[%s3136 + $0x30] sm:$0xff]
    %v3144 = vld [vmem:[%s3136 + $0x38] sm:$0xff]
    %v3145 = vld [vmem:[%s3136 + $0x40] sm:$0xff]
    %v3146 = vld [vmem:[%s3136 + $0x48] sm:$0xff]
    %v3147 = vld [vmem:[%s3136 + $0x50] sm:$0xff]
    %v3148 = vld [vmem:[%s3136 + $0x58] sm:$0xff]
    %v3149 = vld [vmem:[%s3136 + $0x60] sm:$0xff]
    %v3150 = vld [vmem:[%s3136 + $0x68] sm:$0xff]
    %v3151 = vld [vmem:[%s3136 + $0x70] sm:$0xff]
    %v3152 = vld [vmem:[%s3136 + $0x78] sm:$0xff]
    %3153 = vmatprep.subr.mxu0 0.0
    %3154 = vmatpush1.msra.mxu0 %v3137
    %3155 = vmatprep.subr.mxu0 0.0
    %3156 = vmatpush1.msra.mxu0 %v3138
    %3157 = vmatprep.subr.mxu0 0.0
    %3158 = vmatpush1.msra.mxu0 %v3139
    %3159 = vmatprep.subr.mxu0 0.0
    %3160 = vmatpush1.msra.mxu0 %v3140
    %3161 = vmatprep.subr.mxu0 0.0
    %3162 = vmatpush1.msra.mxu0 %v3141
    %3163 = vmatprep.subr.mxu0 0.0
    %3164 = vmatpush1.msra.mxu0 %v3142
    %3165 = vmatprep.subr.mxu0 0.0
    %3166 = vmatpush1.msra.mxu0 %v3143
    %3167 = vmatprep.subr.mxu0 0.0
    %3168 = vmatpush1.msra.mxu0 %v3144
    %3169 = vmatprep.subr.mxu0 0.0
    %3170 = vmatpush1.msra.mxu0 %v3145
    %3171 = vmatprep.subr.mxu0 0.0
    %3172 = vmatpush1.msra.mxu0 %v3146
    %3173 = vmatprep.subr.mxu0 0.0
    %3174 = vmatpush1.msra.mxu0 %v3147
    %3175 = vmatprep.subr.mxu0 0.0
    %3176 = vmatpush1.msra.mxu0 %v3148
    %3177 = vmatprep.subr.mxu0 0.0
    %3178 = vmatpush1.msra.mxu0 %v3149
    %3179 = vmatprep.subr.mxu0 0.0
    %3180 = vmatpush1.msra.mxu0 %v3150
    %3181 = vmatprep.subr.mxu0 0.0
    %3182 = vmatpush1.msra.mxu0 %v3151
    %3183 = vmatprep.subr.mxu0 0.0
    %3184 = vmatpush1.msra.mxu0 %v3152
    %3185 = vmatprep.subr.mxu0 0.0
    %3186 = vmatpush1.msra.mxu0 0.0
    %3187 = vmatprep.subr.mxu0 0.0
    %3188 = vmatpush1.msra.mxu0 0.0
    %3189 = vmatprep.subr.mxu0 0.0
    %3190 = vmatpush1.msra.mxu0 0.0
    %3191 = vmatprep.subr.mxu0 0.0
    %3192 = vmatpush1.msra.mxu0 0.0
    %3193 = vmatprep.subr.mxu0 0.0
    %3194 = vmatpush1.msra.mxu0 0.0
    %3195 = vmatprep.subr.mxu0 0.0
    %3196 = vmatpush1.msra.mxu0 0.0
    %3197 = vmatprep.subr.mxu0 0.0
    %3198 = vmatpush1.msra.mxu0 0.0
    %3199 = vmatprep.subr.mxu0 0.0
    %3200 = vmatpush1.msra.mxu0 0.0
    %3201 = vmatprep.subr.mxu0 0.0
    %3202 = vmatpush1.msra.mxu0 0.0
    %3203 = vmatprep.subr.mxu0 0.0
    %3204 = vmatpush1.msra.mxu0 0.0
    %3205 = vmatprep.subr.mxu0 0.0
    %3206 = vmatpush1.msra.mxu0 0.0
    %3207 = vmatprep.subr.mxu0 0.0
    %3208 = vmatpush1.msra.mxu0 0.0
    %3209 = vmatprep.subr.mxu0 0.0
    %3210 = vmatpush1.msra.mxu0 0.0
    %3211 = vmatprep.subr.mxu0 0.0
    %3212 = vmatpush1.msra.mxu0 0.0
    %3213 = vmatprep.subr.mxu0 0.0
    %3214 = vmatpush1.msra.mxu0 0.0
    %3215 = vmatprep.subr.mxu0 0.0
    %3216 = vmatpush1.msra.mxu0 0.0
    %3217 = vmatprep.mubr.f32.mxu0 0.0
    %3218 = vmatmul.mubr.f32.gmra.mrb[0].mxu0 %v3135
    %v3219 = vpop.f32.mrb[0].mxu0
    %v3220 = vadd.f32 0.0, %v3219
    %v3221 = vpop.f32.mrb[0].mxu0
    %3222 = vdwg.mxu0
    %v3223 = vadd.f32 %v3133, %v3220
    %v3224 = vlaneseq
    %v3225 = vshrl.u32 %v3224, 7
    %v3226 = vsub.s32 0, %v3225
    %v3227 = vrot.slane %v72, %v3226
    %v3228 = vadd.f32 %v3223, %v3227
    %v3229 = vmax.f32 %v3228, 0.0
    %s3230 = scalar_lea.vmem [#allocation8], 896
    %v3231 = vld [vmem:[%s3230] sm:$0xff]
    %v3232 = vld [vmem:[%s3230 + $0x8] sm:$0xff]
    %v3233 = vld [vmem:[%s3230 + $0x10] sm:$0xff]
    %v3234 = vld [vmem:[%s3230 + $0x18] sm:$0xff]
    %v3235 = vld [vmem:[%s3230 + $0x20] sm:$0xff]
    %v3236 = vld [vmem:[%s3230 + $0x28] sm:$0xff]
    %v3237 = vld [vmem:[%s3230 + $0x30] sm:$0xff]
    %v3238 = vld [vmem:[%s3230 + $0x38] sm:$0xff]
    %v3239 = vld [vmem:[%s3230 + $0x40] sm:$0xff]
    %v3240 = vld [vmem:[%s3230 + $0x48] sm:$0xff]
    %v3241 = vld [vmem:[%s3230 + $0x50] sm:$0xff]
    %v3242 = vld [vmem:[%s3230 + $0x58] sm:$0xff]
    %v3243 = vld [vmem:[%s3230 + $0x60] sm:$0xff]
    %v3244 = vld [vmem:[%s3230 + $0x68] sm:$0xff]
    %v3245 = vld [vmem:[%s3230 + $0x70] sm:$0xff]
    %v3246 = vld [vmem:[%s3230 + $0x78] sm:$0xff]
    %v3247 = vlaneseq
    %v3248 = vshrl.u32 %v3247, 7
    %v3249 = vsub.s32 0, %v3248
    %v3250 = vrot.slane %v73, %v3249
    %3251 = vmatprep.subr.mxu0 0.0
    %3252 = vmatpush1.msra.mxu0 %v3231
    %3253 = vmatprep.subr.mxu0 0.0
    %3254 = vmatpush1.msra.mxu0 %v3232
    %3255 = vmatprep.subr.mxu0 0.0
    %3256 = vmatpush1.msra.mxu0 %v3233
    %3257 = vmatprep.subr.mxu0 0.0
    %3258 = vmatpush1.msra.mxu0 %v3234
    %3259 = vmatprep.subr.mxu0 0.0
    %3260 = vmatpush1.msra.mxu0 %v3235
    %3261 = vmatprep.subr.mxu0 0.0
    %3262 = vmatpush1.msra.mxu0 %v3236
    %3263 = vmatprep.subr.mxu0 0.0
    %3264 = vmatpush1.msra.mxu0 %v3237
    %3265 = vmatprep.subr.mxu0 0.0
    %3266 = vmatpush1.msra.mxu0 %v3238
    %3267 = vmatprep.subr.mxu0 0.0
    %3268 = vmatpush1.msra.mxu0 %v3239
    %3269 = vmatprep.subr.mxu0 0.0
    %3270 = vmatpush1.msra.mxu0 %v3240
    %3271 = vmatprep.subr.mxu0 0.0
    %3272 = vmatpush1.msra.mxu0 %v3241
    %3273 = vmatprep.subr.mxu0 0.0
    %3274 = vmatpush1.msra.mxu0 %v3242
    %3275 = vmatprep.subr.mxu0 0.0
    %3276 = vmatpush1.msra.mxu0 %v3243
    %3277 = vmatprep.subr.mxu0 0.0
    %3278 = vmatpush1.msra.mxu0 %v3244
    %3279 = vmatprep.subr.mxu0 0.0
    %3280 = vmatpush1.msra.mxu0 %v3245
    %3281 = vmatprep.subr.mxu0 0.0
    %3282 = vmatpush1.msra.mxu0 %v3246
    %3283 = vmatprep.subr.mxu0 0.0
    %3284 = vmatpush1.msra.mxu0 0.0
    %3285 = vmatprep.subr.mxu0 0.0
    %3286 = vmatpush1.msra.mxu0 0.0
    %3287 = vmatprep.subr.mxu0 0.0
    %3288 = vmatpush1.msra.mxu0 0.0
    %3289 = vmatprep.subr.mxu0 0.0
    %3290 = vmatpush1.msra.mxu0 0.0
    %3291 = vmatprep.subr.mxu0 0.0
    %3292 = vmatpush1.msra.mxu0 0.0
    %3293 = vmatprep.subr.mxu0 0.0
    %3294 = vmatpush1.msra.mxu0 0.0
    %3295 = vmatprep.subr.mxu0 0.0
    %3296 = vmatpush1.msra.mxu0 0.0
    %3297 = vmatprep.subr.mxu0 0.0
    %3298 = vmatpush1.msra.mxu0 0.0
    %3299 = vmatprep.subr.mxu0 0.0
    %3300 = vmatpush1.msra.mxu0 0.0
    %3301 = vmatprep.subr.mxu0 0.0
    %3302 = vmatpush1.msra.mxu0 0.0
    %3303 = vmatprep.subr.mxu0 0.0
    %3304 = vmatpush1.msra.mxu0 0.0
    %3305 = vmatprep.subr.mxu0 0.0
    %3306 = vmatpush1.msra.mxu0 0.0
    %3307 = vmatprep.subr.mxu0 0.0
    %3308 = vmatpush1.msra.mxu0 0.0
    %3309 = vmatprep.subr.mxu0 0.0
    %3310 = vmatpush1.msra.mxu0 0.0
    %3311 = vmatprep.subr.mxu0 0.0
    %3312 = vmatpush1.msra.mxu0 0.0
    %3313 = vmatprep.subr.mxu0 0.0
    %3314 = vmatpush1.msra.mxu0 0.0
    %3315 = vmatprep.mubr.f32.mxu0 0.0
    %3316 = vmatmul.mubr.f32.gmra.mrb[0].mxu0 %v3229
    %v3317 = vpop.f32.mrb[0].mxu0
    %v3318 = vadd.f32 %v3250, %v3317
    %v3319 = vpop.f32.mrb[0].mxu0
    %3320 = vdwg.mxu0
    %v3321 = vmax.f32 %v3318, 0.0
    %v3322 = vlaneseq
    %v3323 = vshrl.u32 %v3322, 7
    %v3324 = vsub.s32 0, %v3323
    %v3325 = vrot.slane %v74, %v3324
    %v3326 = vmul.f32 %v3321, %v3325
    %vm3327 = vcmask 1041408
    %v3328 = vsel %vm3327, %v3326, 0.0
    %3329 = vadd.xlane.f32.xlu0 %v3328
    %v3330 = vpop.xlane.xlu0 %3329
    %v3331 = vlaneseq
    %v3332 = vshrl.u32 %v3331, 7
    %v3333 = vsub.s32 0, %v3332
    %v3334 = vrot.slane %v75, %v3333
    %v3335 = vadd.f32 %v3330, %v3334
    %vm3336 = vcmask 1024
    %3337 = vst.msk [vmem:[%s4] sm:$0x3] %vm3336, %v3335
    // Predicated region
    $region34: #{cnn_forward.1} parent=1 // pred_check
      _
    $region35: #{cnn_forward.1} parent=1 // pred_check_branch
      %3339 = sbr.rel (0) target = $region37
    $region36: #{cnn_forward.1} parent=1 // pred_region
      _
    $region37: #{cnn_forward.1} parent=1 // pred_fallthru
      _
    // Predicated region
    $region38: #{cnn_forward.1} parent=1 // pred_check
      _
    $region39: #{cnn_forward.1} parent=1 // pred_check_branch
      %3341 = sbr.rel (0) target = $region41
    $region40: #{cnn_forward.1} parent=1 // pred_region
      _
    $region41: #{cnn_forward.1} parent=1 // pred_fallthru
      _
    %3342 = vsyncpa [#allocation5], 1
    %3343 = vsyncpa [#allocation7], 1
    %3344 = vsyncpa [#allocation10], 1

</llo_original>
